<compile_context>
chip_gen: v7x
topology: tpu7x:2x2x1
jax: 0.10.0
libtpu: 0.0.40
codegen_flags: <defaults>
</compile_context>

<pallas_src>
import jax
import jax.numpy as jnp
from jax.experimental import pallas as pl
from jax.experimental.pallas import tpu as pltpu

HIDDEN = 500            # as in the module
HP = 512                # padded hidden (multiple of 128)
SPLIT = 2178            # hardcoded split point in forward()
N = 2304                # synthetic N = A.shape[1] + B.shape[1]  (> SPLIT, % 128 == 0)
TM = 128                # batch (time) tile
TN = 384                # output-feature tile (N % TN == 0, TN % 128 == 0)


def _mlp_kernel(t_ref, w1_ref, b1_ref, w2_ref, b2_ref, w3_ref, b3_ref,
                w4_ref, b4_ref, c0_ref, c1_ref, o_ref, h_ref):
    j = pl.program_id(1)

    # Layers 1-3 depend only on the batch tile -> compute once per i (at j==0)
    # and keep the (TM, HP) activation resident in VMEM scratch (bf16, which is
    # exactly what the layer-4 MXU dot consumes).
    @pl.when(j == 0)
    def _():
        t = t_ref[...]                                            # (TM, 1) f32
        h = jnp.tanh(t * w1_ref[...] + b1_ref[...])               # (TM, HP)
        h = jnp.tanh(jnp.dot(h.astype(jnp.bfloat16), w2_ref[...],
                             preferred_element_type=jnp.float32) + b2_ref[...])
        h = jnp.tanh(jnp.dot(h.astype(jnp.bfloat16), w3_ref[...],
                             preferred_element_type=jnp.float32) + b3_ref[...])
        h_ref[...] = h.astype(jnp.bfloat16)

    # Layer 4 on one (HP, TN) weight tile.
    tmp = jnp.dot(h_ref[...], w4_ref[...],
                  preferred_element_type=jnp.float32) + b4_ref[...]   # (TM, TN)

    # Split/concat epilogue via global-lane mask:
    #   out[:, :SPLIT] = start_u + 20*t*(tmp + arr_tmp - start_u)
    #   out[:, SPLIT:] = tmp
    # with c0 = start_u, c1 = arr_tmp - start_u (zero-padded past SPLIT).
    t = t_ref[...]                                                 # (TM, 1)
    lane = jax.lax.broadcasted_iota(jnp.int32, tmp.shape, 1) + j * TN
    u_branch = c0_ref[...] + (20.0 * t) * (tmp + c1_ref[...])
    o_ref[...] = jnp.where(lane < SPLIT, u_branch, tmp)


def prepare_params(params, start_u, arr_tmp):
    """Pad HIDDEN 500->512, cast big weights to bf16, precompute epilogue consts."""
    w1, b1, w2, b2, w3, b3, w4, b4 = params
    ph = HP - HIDDEN

    w1p = jnp.pad(w1, ((0, 0), (0, ph))).astype(jnp.float32)          # (1, HP)
    b1p = jnp.pad(b1, ((0, 0), (0, ph))).astype(jnp.float32)          # (1, HP)
    w2p = jnp.pad(w2, ((0, ph), (0, ph))).astype(jnp.bfloat16)        # (HP, HP)
    b2p = jnp.pad(b2, ((0, 0), (0, ph))).astype(jnp.float32)          # (1, HP)
    w3p = jnp.pad(w3, ((0, ph), (0, ph))).astype(jnp.bfloat16)        # (HP, HP)
    b3p = jnp.pad(b3, ((0, 0), (0, ph))).astype(jnp.float32)          # (1, HP)
    w4p = jnp.pad(w4, ((0, ph), (0, 0))).astype(jnp.bfloat16)         # (HP, N)
    b4p = b4.astype(jnp.float32)                                      # (1, N)

    c0 = jnp.zeros((1, N), jnp.float32).at[0, :SPLIT].set(start_u)
    c1 = jnp.zeros((1, N), jnp.float32).at[0, :SPLIT].set(arr_tmp - start_u)
    return (w1p, b1p, w2p, b2p, w3p, b3p, w4p, b4p, c0, c1)


def model_forward(ts, prepped):
    """ts: (M,) f32 batch of times; returns (M, N) f32 -- Model.forward per row."""
    w1p, b1p, w2p, b2p, w3p, b3p, w4p, b4p, c0, c1 = prepped
    m = ts.shape[0]
    m_pad = ((m + TM - 1) // TM) * TM
    t2 = jnp.zeros((m_pad, 1), jnp.float32).at[:m, 0].set(ts.astype(jnp.float32))

    grid = (m_pad // TM, N // TN)
    const = lambda i, j: (0, 0)        # weights resident, DMA'd once
    ncol = lambda i, j: (0, j)         # stream along N

    # Advisory cost hint for the XLA scheduler around the custom call.
    flops = 2 * m_pad * (2 * HP * HP + HP * N)
    transcendentals = 3 * m_pad * HP
    bytes_accessed = (2 * HP * HP * 2 + HP * N * 2        # bf16 weights
                      + (m_pad // TM) * HP * N * 2        # w4 re-streamed per i tile
                      + m_pad * N * 4 + m_pad * 4)        # output + t
    ce = pl.CostEstimate(flops=flops, transcendentals=transcendentals,
                         bytes_accessed=bytes_accessed)

    out = pl.pallas_call(
        _mlp_kernel,
        out_shape=jax.ShapeDtypeStruct((m_pad, N), jnp.float32),
        grid_spec=pltpu.PrefetchScalarGridSpec(
            num_scalar_prefetch=0,
            grid=grid,
            in_specs=[
                pl.BlockSpec((TM, 1), lambda i, j: (i, 0)),   # t
                pl.BlockSpec((1, HP), const),                 # w1
                pl.BlockSpec((1, HP), const),                 # b1
                pl.BlockSpec((HP, HP), const),                # w2 (bf16)
                pl.BlockSpec((1, HP), const),                 # b2
                pl.BlockSpec((HP, HP), const),                # w3 (bf16)
                pl.BlockSpec((1, HP), const),                 # b3
                pl.BlockSpec((HP, TN), ncol),                 # w4 tile (bf16)
                pl.BlockSpec((1, TN), ncol),                  # b4 tile
                pl.BlockSpec((1, TN), ncol),                  # c0 = start_u
                pl.BlockSpec((1, TN), ncol),                  # c1 = arr_tmp - start_u
            ],
            out_specs=pl.BlockSpec((TM, TN), lambda i, j: (i, j)),
            scratch_shapes=[pltpu.VMEM((TM, HP), jnp.bfloat16)],
        ),
        compiler_params=pltpu.CompilerParams(
            dimension_semantics=("parallel", "arbitrary"),
            vmem_limit_bytes=32 * 1024 * 1024,
        ),
        cost_estimate=ce,
    )(t2, w1p, b1p, w2p, b2p, w3p, b3p, w4p, b4p, c0, c1)
    return out[:m]


def _init_linear(key, fan_in, fan_out):
    """Deterministic PyTorch-style init: U(-1/sqrt(fan_in), 1/sqrt(fan_in))."""
    kw, kb = jax.random.split(key)
    bound = 1.0 / (fan_in ** 0.5)
    w = jax.random.uniform(kw, (fan_in, fan_out), jnp.float32, -bound, bound)
    b = jax.random.uniform(kb, (1, fan_out), jnp.float32, -bound, bound)
    return w, b


def _reference(ts, prepped):
    """Pure-JAX reference using the same padded / bf16 parameters."""
    w1p, b1p, w2p, b2p, w3p, b3p, w4p, b4p, c0, c1 = prepped
    t2 = ts.reshape(-1, 1).astype(jnp.float32)
    h = jnp.tanh(t2 * w1p + b1p)
    h = jnp.tanh(jnp.dot(h.astype(jnp.bfloat16), w2p,
                         preferred_element_type=jnp.float32) + b2p)
    h = jnp.tanh(jnp.dot(h.astype(jnp.bfloat16), w3p,
                         preferred_element_type=jnp.float32) + b3p)
    tmp = jnp.dot(h.astype(jnp.bfloat16), w4p,
                  preferred_element_type=jnp.float32) + b4p
    lane = jnp.arange(N)[None, :]
    u_branch = c0 + 20.0 * t2 * (tmp + c1)
    return jnp.where(lane < SPLIT, u_branch, tmp)


if __name__ == "__main__":
    key = jax.random.PRNGKey(0)
    k1, k2, k3, k4, k5, k6, k7 = jax.random.split(key, 7)

    # TODO(synk): A/B sparse matrices and 'stokes.npy' are external data; they only
    # define N / arr_tmp / start_u, which are replaced by deterministic constants.
    params = (*_init_linear(k1, 1, HIDDEN),
              *_init_linear(k2, HIDDEN, HIDDEN),
              *_init_linear(k3, HIDDEN, HIDDEN),
              *_init_linear(k4, HIDDEN, N))
    start_u = jax.random.normal(k5, (SPLIT,), jnp.float32)
    arr_tmp = jax.random.normal(k6, (SPLIT,), jnp.float32)
    ts = jax.random.uniform(k7, (256,), jnp.float32)          # batch of time points

    prepped = prepare_params(params, start_u, arr_tmp)

    out = jax.block_until_ready(model_forward(ts, prepped))
    ref = jax.block_until_ready(_reference(ts, prepped))

    assert out.shape == (256, N)
    assert jnp.allclose(out, ref, rtol=1e-2, atol=1e-2), "mismatch vs reference"
    print("KERNEL_OK")
</pallas_src>

<mosaic_0001>
module attributes {stable_mosaic.version = 11 : i64} {
  func.func @_mlp_kernel(%arg0: i32, %arg1: i32, %arg2: memref<128x1xf32, #tpu.memory_space<vmem>>, %arg3: memref<1x512xf32, #tpu.memory_space<vmem>>, %arg4: memref<1x512xf32, #tpu.memory_space<vmem>>, %arg5: memref<512x512xbf16, #tpu.memory_space<vmem>>, %arg6: memref<1x512xf32, #tpu.memory_space<vmem>>, %arg7: memref<512x512xbf16, #tpu.memory_space<vmem>>, %arg8: memref<1x512xf32, #tpu.memory_space<vmem>>, %arg9: memref<512x384xbf16, #tpu.memory_space<vmem>>, %arg10: memref<1x384xf32, #tpu.memory_space<vmem>>, %arg11: memref<1x384xf32, #tpu.memory_space<vmem>>, %arg12: memref<1x384xf32, #tpu.memory_space<vmem>>, %arg13: memref<128x384xf32, #tpu.memory_space<vmem>>, %arg14: memref<128x512xbf16, #tpu.memory_space<vmem>>) attributes {dimension_semantics = [#tpu.dimension_semantics<parallel>, #tpu.dimension_semantics<arbitrary>], iteration_bounds = array<i64: 2, 6>, scalar_prefetch = 0 : i64, scratch_operands = 1 : i64, tpu.core_type = #tpu.core_type<tc>, window_params = [{transform_indices = @transform_0, window_bounds = array<i64: 128, 1>}, {pipeline_mode = #tpu.pipeline_mode<synchronous>, transform_indices = @transform_1, window_bounds = array<i64: 1, 512>}, {pipeline_mode = #tpu.pipeline_mode<synchronous>, transform_indices = @transform_2, window_bounds = array<i64: 1, 512>}, {pipeline_mode = #tpu.pipeline_mode<synchronous>, transform_indices = @transform_3, window_bounds = array<i64: 512, 512>}, {pipeline_mode = #tpu.pipeline_mode<synchronous>, transform_indices = @transform_4, window_bounds = array<i64: 1, 512>}, {pipeline_mode = #tpu.pipeline_mode<synchronous>, transform_indices = @transform_5, window_bounds = array<i64: 512, 512>}, {pipeline_mode = #tpu.pipeline_mode<synchronous>, transform_indices = @transform_6, window_bounds = array<i64: 1, 512>}, {transform_indices = @transform_7, window_bounds = array<i64: 512, 384>}, {transform_indices = @transform_8, window_bounds = array<i64: 1, 384>}, {transform_indices = @transform_9, window_bounds = array<i64: 1, 384>}, {transform_indices = @transform_10, window_bounds = array<i64: 1, 384>}, {transform_indices = @transform_11, window_bounds = array<i64: 128, 384>}]} {
    %c0_i32 = arith.constant 0 : i32
    %0 = arith.cmpi eq, %arg1, %c0_i32 : i32
    %1 = arith.extui %0 : i1 to i32
    %c0_i32_0 = arith.constant 0 : i32
    %2 = arith.cmpi ne, %1, %c0_i32_0 : i32
    scf.if %2 {
      %c0_15 = arith.constant 0 : index
      %c0_16 = arith.constant 0 : index
      %28 = vector.load %arg2[%c0_15, %c0_16] : memref<128x1xf32, #tpu.memory_space<vmem>>, vector<128x1xf32>
      %c0_17 = arith.constant 0 : index
      %c0_18 = arith.constant 0 : index
      %29 = vector.load %arg3[%c0_17, %c0_18] : memref<1x512xf32, #tpu.memory_space<vmem>>, vector<1x512xf32>
      %30 = vector.broadcast %28 : vector<128x1xf32> to vector<128x512xf32>
      %31 = vector.broadcast %29 : vector<1x512xf32> to vector<128x512xf32>
      %32 = arith.mulf %30, %31 : vector<128x512xf32>
      %c0_19 = arith.constant 0 : index
      %c0_20 = arith.constant 0 : index
      %33 = vector.load %arg4[%c0_19, %c0_20] : memref<1x512xf32, #tpu.memory_space<vmem>>, vector<1x512xf32>
      %34 = vector.broadcast %33 : vector<1x512xf32> to vector<128x512xf32>
      %35 = arith.addf %32, %34 : vector<128x512xf32>
      %36 = math.tanh %35 : vector<128x512xf32>
      %37 = arith.truncf %36 : vector<128x512xf32> to vector<128x512xbf16>
      %c0_21 = arith.constant 0 : index
      %c0_22 = arith.constant 0 : index
      %38 = vector.load %arg5[%c0_21, %c0_22] : memref<512x512xbf16, #tpu.memory_space<vmem>>, vector<512x512xbf16>
      %cst_23 = arith.constant dense<0.000000e+00> : vector<128x512xf32>
      %39 = tpu.matmul %37, %38, %cst_23 {dimension_numbers = #tpu.dot_dimension_numbers<[1], [0], [0], [1], [0, 0, 1, 1], [], []>} : vector<128x512xbf16>, vector<512x512xbf16>, vector<128x512xf32> -> vector<128x512xf32>
      %c0_24 = arith.constant 0 : index
      %c0_25 = arith.constant 0 : index
      %40 = vector.load %arg6[%c0_24, %c0_25] : memref<1x512xf32, #tpu.memory_space<vmem>>, vector<1x512xf32>
      %41 = vector.broadcast %40 : vector<1x512xf32> to vector<128x512xf32>
      %42 = arith.addf %39, %41 : vector<128x512xf32>
      %43 = math.tanh %42 : vector<128x512xf32>
      %44 = arith.truncf %43 : vector<128x512xf32> to vector<128x512xbf16>
      %c0_26 = arith.constant 0 : index
      %c0_27 = arith.constant 0 : index
      %45 = vector.load %arg7[%c0_26, %c0_27] : memref<512x512xbf16, #tpu.memory_space<vmem>>, vector<512x512xbf16>
      %cst_28 = arith.constant dense<0.000000e+00> : vector<128x512xf32>
      %46 = tpu.matmul %44, %45, %cst_28 {dimension_numbers = #tpu.dot_dimension_numbers<[1], [0], [0], [1], [0, 0, 1, 1], [], []>} : vector<128x512xbf16>, vector<512x512xbf16>, vector<128x512xf32> -> vector<128x512xf32>
      %c0_29 = arith.constant 0 : index
      %c0_30 = arith.constant 0 : index
      %47 = vector.load %arg8[%c0_29, %c0_30] : memref<1x512xf32, #tpu.memory_space<vmem>>, vector<1x512xf32>
      %48 = vector.broadcast %47 : vector<1x512xf32> to vector<128x512xf32>
      %49 = arith.addf %46, %48 : vector<128x512xf32>
      %50 = math.tanh %49 : vector<128x512xf32>
      %51 = arith.truncf %50 : vector<128x512xf32> to vector<128x512xbf16>
      %c0_31 = arith.constant 0 : index
      %c0_32 = arith.constant 0 : index
      %52 = vector.load %arg14[%c0_31, %c0_32] : memref<128x512xbf16, #tpu.memory_space<vmem>>, vector<128x512xbf16>
      tpu.vector_store %arg14[%c0_31, %c0_32], %51 {strides = array<i32>} : memref<128x512xbf16, #tpu.memory_space<vmem>>, vector<128x512xbf16>,
    } else {
    }
    %c0 = arith.constant 0 : index
    %c0_1 = arith.constant 0 : index
    %3 = vector.load %arg14[%c0, %c0_1] : memref<128x512xbf16, #tpu.memory_space<vmem>>, vector<128x512xbf16>
    %c0_2 = arith.constant 0 : index
    %c0_3 = arith.constant 0 : index
    %4 = vector.load %arg9[%c0_2, %c0_3] : memref<512x384xbf16, #tpu.memory_space<vmem>>, vector<512x384xbf16>
    %cst = arith.constant dense<0.000000e+00> : vector<128x384xf32>
    %5 = tpu.matmul %3, %4, %cst {dimension_numbers = #tpu.dot_dimension_numbers<[1], [0], [0], [1], [0, 0, 1, 1], [], []>} : vector<128x512xbf16>, vector<512x384xbf16>, vector<128x384xf32> -> vector<128x384xf32>
    %c0_4 = arith.constant 0 : index
    %c0_5 = arith.constant 0 : index
    %6 = vector.load %arg10[%c0_4, %c0_5] : memref<1x384xf32, #tpu.memory_space<vmem>>, vector<1x384xf32>
    %7 = vector.broadcast %6 : vector<1x384xf32> to vector<128x384xf32>
    %8 = arith.addf %5, %7 : vector<128x384xf32>
    %c0_6 = arith.constant 0 : index
    %c0_7 = arith.constant 0 : index
    %9 = vector.load %arg2[%c0_6, %c0_7] : memref<128x1xf32, #tpu.memory_space<vmem>>, vector<128x1xf32>
    %10 = tpu.iota {dimensions = array<i32: 1>} : vector<128x384xi32>
    %c384_i32 = arith.constant 384 : i32
    %11 = arith.muli %arg1, %c384_i32 : i32
    %12 = vector.broadcast %11 : i32 to vector<128x384xi32>
    %13 = arith.addi %10, %12 : vector<128x384xi32>
    %c0_8 = arith.constant 0 : index
    %c0_9 = arith.constant 0 : index
    %14 = vector.load %arg11[%c0_8, %c0_9] : memref<1x384xf32, #tpu.memory_space<vmem>>, vector<1x384xf32>
    %cst_10 = arith.constant 2.000000e+01 : f32
    %15 = vector.broadcast %cst_10 : f32 to vector<128x1xf32>
    %16 = arith.mulf %15, %9 : vector<128x1xf32>
    %c0_11 = arith.constant 0 : index
    %c0_12 = arith.constant 0 : index
    %17 = vector.load %arg12[%c0_11, %c0_12] : memref<1x384xf32, #tpu.memory_space<vmem>>, vector<1x384xf32>
    %18 = vector.broadcast %17 : vector<1x384xf32> to vector<128x384xf32>
    %19 = arith.addf %8, %18 : vector<128x384xf32>
    %20 = vector.broadcast %16 : vector<128x1xf32> to vector<128x384xf32>
    %21 = arith.mulf %20, %19 : vector<128x384xf32>
    %22 = vector.broadcast %14 : vector<1x384xf32> to vector<128x384xf32>
    %23 = arith.addf %22, %21 : vector<128x384xf32>
    %c2178_i32 = arith.constant 2178 : i32
    %24 = vector.broadcast %c2178_i32 : i32 to vector<128x384xi32>
    %25 = arith.cmpi slt, %13, %24 : vector<128x384xi32>
    %26 = arith.select %25, %23, %8 : vector<128x384xi1>, vector<128x384xf32>
    %c0_13 = arith.constant 0 : index
    %c0_14 = arith.constant 0 : index
    %27 = vector.load %arg13[%c0_13, %c0_14] : memref<128x384xf32, #tpu.memory_space<vmem>>, vector<128x384xf32>
    tpu.vector_store %arg13[%c0_13, %c0_14], %26 {strides = array<i32>} : memref<128x384xf32, #tpu.memory_space<vmem>>, vector<128x384xf32>,
    return
  }
  func.func @transform_0(%arg0: i32, %arg1: i32) -> (i32, i32) {
    %c0_i32 = arith.constant 0 : i32
    %c0_i32_0 = arith.constant 0 : i32
    return %arg0, %c0_i32 : i32, i32
  }
  func.func @transform_1(%arg0: i32, %arg1: i32) -> (i32, i32) {
    %c0_i32 = arith.constant 0 : i32
    %c0_i32_0 = arith.constant 0 : i32
    %c0_i32_1 = arith.constant 0 : i32
    return %c0_i32, %c0_i32_0 : i32, i32
  }
  func.func @transform_2(%arg0: i32, %arg1: i32) -> (i32, i32) {
    %c0_i32 = arith.constant 0 : i32
    %c0_i32_0 = arith.constant 0 : i32
    %c0_i32_1 = arith.constant 0 : i32
    return %c0_i32, %c0_i32_0 : i32, i32
  }
  func.func @transform_3(%arg0: i32, %arg1: i32) -> (i32, i32) {
    %c0_i32 = arith.constant 0 : i32
    %c0_i32_0 = arith.constant 0 : i32
    %c0_i32_1 = arith.constant 0 : i32
    return %c0_i32, %c0_i32_0 : i32, i32
  }
  func.func @transform_4(%arg0: i32, %arg1: i32) -> (i32, i32) {
    %c0_i32 = arith.constant 0 : i32
    %c0_i32_0 = arith.constant 0 : i32
    %c0_i32_1 = arith.constant 0 : i32
    return %c0_i32, %c0_i32_0 : i32, i32
  }
  func.func @transform_5(%arg0: i32, %arg1: i32) -> (i32, i32) {
    %c0_i32 = arith.constant 0 : i32
    %c0_i32_0 = arith.constant 0 : i32
    %c0_i32_1 = arith.constant 0 : i32
    return %c0_i32, %c0_i32_0 : i32, i32
  }
  func.func @transform_6(%arg0: i32, %arg1: i32) -> (i32, i32) {
    %c0_i32 = arith.constant 0 : i32
    %c0_i32_0 = arith.constant 0 : i32
    %c0_i32_1 = arith.constant 0 : i32
    return %c0_i32, %c0_i32_0 : i32, i32
  }
  func.func @transform_7(%arg0: i32, %arg1: i32) -> (i32, i32) {
    %c0_i32 = arith.constant 0 : i32
    %c0_i32_0 = arith.constant 0 : i32
    return %c0_i32, %arg1 : i32, i32
  }
  func.func @transform_8(%arg0: i32, %arg1: i32) -> (i32, i32) {
    %c0_i32 = arith.constant 0 : i32
    %c0_i32_0 = arith.constant 0 : i32
    return %c0_i32, %arg1 : i32, i32
  }
  func.func @transform_9(%arg0: i32, %arg1: i32) -> (i32, i32) {
    %c0_i32 = arith.constant 0 : i32
    %c0_i32_0 = arith.constant 0 : i32
    return %c0_i32, %arg1 : i32, i32
  }
  func.func @transform_10(%arg0: i32, %arg1: i32) -> (i32, i32) {
    %c0_i32 = arith.constant 0 : i32
    %c0_i32_0 = arith.constant 0 : i32
    return %c0_i32, %arg1 : i32, i32
  }
  func.func @transform_11(%arg0: i32, %arg1: i32) -> (i32, i32) {
    %c0_i32 = arith.constant 0 : i32
    return %arg0, %arg1 : i32, i32
  }
}

</mosaic_0001>

<llo_original>
// kernel: tpu_custom_call.1
$region0: #{tpu_custom_call.1}
  #allocation0 [shape = 'u32[]', space=smem, size = 0x4, offset = 0x4, fixed_abs, tag = 'smem constant byte address 0x4 - core index']
  #allocation1 [shape = 'u32[144,128]{1,0:T(1,128)}', space=vmem, size = 0x12000, scoped, tag = 'internal scratch']
  #allocation2 [shape = 'bf16[128,512]{1,0:T(16,128)(2,1)}', space=vmem, size = 0x20000, scoped, tag = 'scratch operand']
  %s0 = inlined_call_operand.vmem [shape: f32[256,1], index: 0, kind: input, shape index: {}]
  %s1 = inlined_call_operand.hbm [shape: f32[1,512], index: 1, kind: input, shape index: {}]
  %s2 = inlined_call_operand.hbm [shape: f32[1,512], index: 2, kind: input, shape index: {}]
  %s3 = inlined_call_operand.hbm [shape: bf16[512,512], index: 3, kind: input, shape index: {}]
  %s4 = inlined_call_operand.hbm [shape: f32[1,512], index: 4, kind: input, shape index: {}]
  %s5 = inlined_call_operand.hbm [shape: bf16[512,512], index: 5, kind: input, shape index: {}]
  %s6 = inlined_call_operand.hbm [shape: f32[1,512], index: 6, kind: input, shape index: {}]
  %s7 = inlined_call_operand.hbm [shape: bf16[512,2304], index: 7, kind: input, shape index: {}]
  %s8 = inlined_call_operand.hbm [shape: f32[1,2304], index: 8, kind: input, shape index: {}]
  %s9 = inlined_call_operand.hbm [shape: f32[1,2304], index: 9, kind: input, shape index: {}]
  %s10 = inlined_call_operand.hbm [shape: f32[1,2304], index: 10, kind: input, shape index: {}]
  %s11 = inlined_call_operand.hbm [shape: f32[256,2304], index: 11, kind: output, shape index: {}]
  %s12 = sld [smem:[#allocation0]]
  $region121: #{tpu_custom_call.1} parent=0
    _
  %s14 = ssub.s32 1, %s12
  %s15 = scalar_select 0, %s14, %s12
  $region1: #{tpu_custom_call.1} parent=0
    #allocation3 [shape = 'u8[2048]{0}', space=vmem, size = 0x800, scoped, tag = 'input window, operand 1, single buffered']
    #allocation4 [shape = 's32[2]{0}', space=sflag, size = 0x8, scoped, tag = 'scoped memory for tpu_custom_call.1']
    #allocation5 [shape = 's32[2]{0}', space=sflag, size = 0x8, scoped, tag = 'scoped memory for tpu_custom_call.1']
    #allocation6 [shape = 'u8[2048]{0}', space=vmem, size = 0x800, scoped, tag = 'input window, operand 2, single buffered']
    #allocation7 [shape = 's32[1]{0}', space=sflag, size = 0x4, scoped, tag = 'scoped memory for tpu_custom_call.1']
    #allocation8 [shape = 'u8[524288]{0}', space=vmem, size = 0x80000, scoped, tag = 'input window, operand 3, single buffered']
    #allocation9 [shape = 'u8[2048]{0}', space=vmem, size = 0x800, scoped, tag = 'input window, operand 4, single buffered']
    #allocation10 [shape = 's32[1]{0}', space=sflag, size = 0x4, scoped, tag = 'scoped memory for tpu_custom_call.1']
    #allocation11 [shape = 'u8[524288]{0}', space=vmem, size = 0x80000, scoped, tag = 'input window, operand 5, single buffered']
    #allocation12 [shape = 'u8[2048]{0}', space=vmem, size = 0x800, scoped, tag = 'input window, operand 6, single buffered']
    #allocation13 [shape = 's32[1]{0}', space=sflag, size = 0x4, scoped, tag = 'scoped memory for tpu_custom_call.1']
    #allocation14 [shape = 'u8[786432]{0}', space=vmem, size = 0xc0000, scoped, tag = 'input window, operand 7']
    #allocation15 [shape = 'u8[3072]{0}', space=vmem, size = 0xc00, scoped, tag = 'input window, operand 8']
    #allocation16 [shape = 'u8[3072]{0}', space=vmem, size = 0xc00, scoped, tag = 'input window, operand 9']
    #allocation17 [shape = 'u8[3072]{0}', space=vmem, size = 0xc00, scoped, tag = 'input window, operand 10']
    #allocation18 [shape = 'u8[393216]{0}', space=vmem, size = 0x60000, scoped, tag = 'output window, operand 0']
    %16 = vsyncpa [#allocation4], 0
    %17 = vsyncpa [#allocation7], 0
    %18 = vsyncpa [#allocation10], 0
    %19 = vsyncpa [#allocation13], 0
    %20 = vsyncpa [#allocation5], 0
    %s21 = scalar_lea.sflag [#allocation5], 1
    %22 = vsyncpa %s21, 0
    loop: start=0, step=1, limit=14
    $region2: #{tpu_custom_call.1} parent=1 // loop_pre_header
      _
    $region3: #{tpu_custom_call.1} parent=1 // loop_header
      %s24 = sphi 0, %s28
      %p25 = scmp.ge.s32.totalorder %s24, 14
      %s31 = sphi 0, %s43
      %s32 = sphi 0, %s39
      %s33 = sphi 0, %s31
      %s34 = sphi 0, %s32
      %s35 = sphi 0, %s33
      %s36 = sphi 0, %s34
      %s46 = sphi 0, %s48
      %s49 = sphi 0, %s46
      %s50 = sphi 0, %s49
      %s66 = sphi 0, %s50
      %s70 = sphi 0, %s70
      %s72 = sphi 0, %s70
      %s73 = sphi 0, %s72
      %s87 = sphi 0, %s73
      %s91 = sphi 0, %s91
      %s93 = sphi 0, %s91
      %s94 = sphi 0, %s93
      %s108 = sphi 0, %s94
      %s112 = sphi 0, %s112
      %s114 = sphi 0, %s112
      %s115 = sphi 0, %s114
      %s129 = sphi 0, %s115
      %s133 = sphi 0, %s133
      %s135 = sphi 0, %s133
      %s136 = sphi 0, %s135
      %s150 = sphi 0, %s136
      %s154 = sphi 0, %s154
      %s156 = sphi 0, %s154
      %s157 = sphi 0, %s156
      %s171 = sphi 0, %s157
      %s175 = sphi 0, %s175
      %s177 = sphi 0, %s175
      %s178 = sphi 0, %s177
      %s192 = sphi 0, %s178
      %s198 = sphi 0, %s200
      %s201 = sphi 0, %s198
      %s202 = sphi 0, %s201
      %s218 = sphi 0, %s202
      %s224 = sphi 0, %s226
      %s227 = sphi 0, %s224
      %s228 = sphi 0, %s227
      %s244 = sphi 0, %s228
      %s250 = sphi 0, %s252
      %s253 = sphi 0, %s250
      %s254 = sphi 0, %s253
      %s270 = sphi 0, %s254
      %s276 = sphi 0, %s278
      %s279 = sphi 0, %s276
      %s280 = sphi 0, %s279
      %s296 = sphi 0, %s280
      %s304 = sphi 0, %s306
      %s307 = sphi 0, %s304
      %s308 = sphi 0, %s307
      %s324 = sphi 0, %s308
    $region4: #{tpu_custom_call.1} parent=1 // loop_header_branch
      %27 = sbr.rel (%p25) target = $region8
    $region5: #{tpu_custom_call.1} parent=1 // loop_body
      %s29 = ssub.s32 %s24, 1
      %s30 = ssub.s32 %s24, 2
      %s37 = sadd.s32 1, %s32
      %p38 = scmp.ge.s32.totalorder %s37, 6
      %s39 = scalar_select %p38, 0, %s37
      %s40 = sadd.s32 1, %s31
      %s41 = scalar_select %p38, %s40, %s31
      %p42 = scmp.ge.s32.totalorder %s41, 2
      %s43 = scalar_select %p42, 0, %s41
      %s44 = ssub.s32 %s31, %s43
      %p45 = scmp.eq.s32.totalorder %s44, 0
      %s47 = sadd.s32 %s46, 1
      %s48 = scalar_select %p45, %s46, %s47
      %p51 = pneg %p45
      %p52 = scmp.eq.s32.totalorder %s24, 11
      %p53 = por %p51, %p52
      %p54 = scmp.ne.s32.totalorder %s46, %s49
      %p55 = scmp.eq.s32.totalorder %s24, 0
      %p56 = por %p54, %p55
      %p57 = scmp.ne.s32.totalorder %s46, %s49
      %p58 = scmp.eq.s32.totalorder %s29, 11
      %p59 = por %p57, %p58
      %p60 = scmp.ne.s32.totalorder %s49, %s50
      %p61 = scmp.eq.s32.totalorder %s29, 0
      %p62 = por %p60, %p61
      %p63 = scmp.ne.s32.totalorder %s49, %s50
      %p64 = scmp.eq.s32.totalorder %s30, 11
      %p65 = por %p63, %p64
      %p67 = scmp.ne.s32.totalorder %s50, %s66
      %p68 = scmp.eq.s32.totalorder %s30, 0
      %p69 = por %p67, %p68
      %s71 = sadd.s32 %s70, 1
      %p74 = scmp.eq.s32.totalorder %s24, 11
      %p75 = scmp.ne.s32.totalorder %s70, %s72
      %p76 = scmp.eq.s32.totalorder %s24, 0
      %p77 = por %p75, %p76
      %p78 = scmp.ne.s32.totalorder %s70, %s72
      %p79 = scmp.eq.s32.totalorder %s29, 11
      %p80 = por %p78, %p79
      %p81 = scmp.ne.s32.totalorder %s72, %s73
      %p82 = scmp.eq.s32.totalorder %s29, 0
      %p83 = por %p81, %p82
      %p84 = scmp.ne.s32.totalorder %s72, %s73
      %p85 = scmp.eq.s32.totalorder %s30, 11
      %p86 = por %p84, %p85
      %p88 = scmp.ne.s32.totalorder %s73, %s87
      %p89 = scmp.eq.s32.totalorder %s30, 0
      %p90 = por %p88, %p89
      %s92 = sadd.s32 %s91, 1
      %p95 = scmp.eq.s32.totalorder %s24, 11
      %p96 = scmp.ne.s32.totalorder %s91, %s93
      %p97 = scmp.eq.s32.totalorder %s24, 0
      %p98 = por %p96, %p97
      %p99 = scmp.ne.s32.totalorder %s91, %s93
      %p100 = scmp.eq.s32.totalorder %s29, 11
      %p101 = por %p99, %p100
      %p102 = scmp.ne.s32.totalorder %s93, %s94
      %p103 = scmp.eq.s32.totalorder %s29, 0
      %p104 = por %p102, %p103
      %p105 = scmp.ne.s32.totalorder %s93, %s94
      %p106 = scmp.eq.s32.totalorder %s30, 11
      %p107 = por %p105, %p106
      %p109 = scmp.ne.s32.totalorder %s94, %s108
      %p110 = scmp.eq.s32.totalorder %s30, 0
      %p111 = por %p109, %p110
      %s113 = sadd.s32 %s112, 1
      %p116 = scmp.eq.s32.totalorder %s24, 11
      %p117 = scmp.ne.s32.totalorder %s112, %s114
      %p118 = scmp.eq.s32.totalorder %s24, 0
      %p119 = por %p117, %p118
      %p120 = scmp.ne.s32.totalorder %s112, %s114
      %p121 = scmp.eq.s32.totalorder %s29, 11
      %p122 = por %p120, %p121
      %p123 = scmp.ne.s32.totalorder %s114, %s115
      %p124 = scmp.eq.s32.totalorder %s29, 0
      %p125 = por %p123, %p124
      %p126 = scmp.ne.s32.totalorder %s114, %s115
      %p127 = scmp.eq.s32.totalorder %s30, 11
      %p128 = por %p126, %p127
      %p130 = scmp.ne.s32.totalorder %s115, %s129
      %p131 = scmp.eq.s32.totalorder %s30, 0
      %p132 = por %p130, %p131
      %s134 = sadd.s32 %s133, 1
      %p137 = scmp.eq.s32.totalorder %s24, 11
      %p138 = scmp.ne.s32.totalorder %s133, %s135
      %p139 = scmp.eq.s32.totalorder %s24, 0
      %p140 = por %p138, %p139
      %p141 = scmp.ne.s32.totalorder %s133, %s135
      %p142 = scmp.eq.s32.totalorder %s29, 11
      %p143 = por %p141, %p142
      %p144 = scmp.ne.s32.totalorder %s135, %s136
      %p145 = scmp.eq.s32.totalorder %s29, 0
      %p146 = por %p144, %p145
      %p147 = scmp.ne.s32.totalorder %s135, %s136
      %p148 = scmp.eq.s32.totalorder %s30, 11
      %p149 = por %p147, %p148
      %p151 = scmp.ne.s32.totalorder %s136, %s150
      %p152 = scmp.eq.s32.totalorder %s30, 0
      %p153 = por %p151, %p152
      %s155 = sadd.s32 %s154, 1
      %p158 = scmp.eq.s32.totalorder %s24, 11
      %p159 = scmp.ne.s32.totalorder %s154, %s156
      %p160 = scmp.eq.s32.totalorder %s24, 0
      %p161 = por %p159, %p160
      %p162 = scmp.ne.s32.totalorder %s154, %s156
      %p163 = scmp.eq.s32.totalorder %s29, 11
      %p164 = por %p162, %p163
      %p165 = scmp.ne.s32.totalorder %s156, %s157
      %p166 = scmp.eq.s32.totalorder %s29, 0
      %p167 = por %p165, %p166
      %p168 = scmp.ne.s32.totalorder %s156, %s157
      %p169 = scmp.eq.s32.totalorder %s30, 11
      %p170 = por %p168, %p169
      %p172 = scmp.ne.s32.totalorder %s157, %s171
      %p173 = scmp.eq.s32.totalorder %s30, 0
      %p174 = por %p172, %p173
      %s176 = sadd.s32 %s175, 1
      %p179 = scmp.eq.s32.totalorder %s24, 11
      %p180 = scmp.ne.s32.totalorder %s175, %s177
      %p181 = scmp.eq.s32.totalorder %s24, 0
      %p182 = por %p180, %p181
      %p183 = scmp.ne.s32.totalorder %s175, %s177
      %p184 = scmp.eq.s32.totalorder %s29, 11
      %p185 = por %p183, %p184
      %p186 = scmp.ne.s32.totalorder %s177, %s178
      %p187 = scmp.eq.s32.totalorder %s29, 0
      %p188 = por %p186, %p187
      %p189 = scmp.ne.s32.totalorder %s177, %s178
      %p190 = scmp.eq.s32.totalorder %s30, 11
      %p191 = por %p189, %p190
      %p193 = scmp.ne.s32.totalorder %s178, %s192
      %p194 = scmp.eq.s32.totalorder %s30, 0
      %p195 = por %p193, %p194
      %s196 = ssub.s32 %s32, %s39
      %p197 = scmp.eq.s32.totalorder %s196, 0
      %s199 = sadd.s32 %s198, 1
      %s200 = scalar_select %p197, %s198, %s199
      %p203 = pneg %p197
      %p204 = scmp.eq.s32.totalorder %s24, 11
      %p205 = por %p203, %p204
      %p206 = scmp.ne.s32.totalorder %s198, %s201
      %p207 = scmp.eq.s32.totalorder %s24, 0
      %p208 = por %p206, %p207
      %p209 = scmp.ne.s32.totalorder %s198, %s201
      %p210 = scmp.eq.s32.totalorder %s29, 11
      %p211 = por %p209, %p210
      %p212 = scmp.ne.s32.totalorder %s201, %s202
      %p213 = scmp.eq.s32.totalorder %s29, 0
      %p214 = por %p212, %p213
      %p215 = scmp.ne.s32.totalorder %s201, %s202
      %p216 = scmp.eq.s32.totalorder %s30, 11
      %p217 = por %p215, %p216
      %p219 = scmp.ne.s32.totalorder %s202, %s218
      %p220 = scmp.eq.s32.totalorder %s30, 0
      %p221 = por %p219, %p220
      %s222 = ssub.s32 %s32, %s39
      %p223 = scmp.eq.s32.totalorder %s222, 0
      %s225 = sadd.s32 %s224, 1
      %s226 = scalar_select %p223, %s224, %s225
      %p229 = pneg %p223
      %p230 = scmp.eq.s32.totalorder %s24, 11
      %p231 = por %p229, %p230
      %p232 = scmp.ne.s32.totalorder %s224, %s227
      %p233 = scmp.eq.s32.totalorder %s24, 0
      %p234 = por %p232, %p233
      %p235 = scmp.ne.s32.totalorder %s224, %s227
      %p236 = scmp.eq.s32.totalorder %s29, 11
      %p237 = por %p235, %p236
      %p238 = scmp.ne.s32.totalorder %s227, %s228
      %p239 = scmp.eq.s32.totalorder %s29, 0
      %p240 = por %p238, %p239
      %p241 = scmp.ne.s32.totalorder %s227, %s228
      %p242 = scmp.eq.s32.totalorder %s30, 11
      %p243 = por %p241, %p242
      %p245 = scmp.ne.s32.totalorder %s228, %s244
      %p246 = scmp.eq.s32.totalorder %s30, 0
      %p247 = por %p245, %p246
      %s248 = ssub.s32 %s32, %s39
      %p249 = scmp.eq.s32.totalorder %s248, 0
      %s251 = sadd.s32 %s250, 1
      %s252 = scalar_select %p249, %s250, %s251
      %p255 = pneg %p249
      %p256 = scmp.eq.s32.totalorder %s24, 11
      %p257 = por %p255, %p256
      %p258 = scmp.ne.s32.totalorder %s250, %s253
      %p259 = scmp.eq.s32.totalorder %s24, 0
      %p260 = por %p258, %p259
      %p261 = scmp.ne.s32.totalorder %s250, %s253
      %p262 = scmp.eq.s32.totalorder %s29, 11
      %p263 = por %p261, %p262
      %p264 = scmp.ne.s32.totalorder %s253, %s254
      %p265 = scmp.eq.s32.totalorder %s29, 0
      %p266 = por %p264, %p265
      %p267 = scmp.ne.s32.totalorder %s253, %s254
      %p268 = scmp.eq.s32.totalorder %s30, 11
      %p269 = por %p267, %p268
      %p271 = scmp.ne.s32.totalorder %s254, %s270
      %p272 = scmp.eq.s32.totalorder %s30, 0
      %p273 = por %p271, %p272
      %s274 = ssub.s32 %s32, %s39
      %p275 = scmp.eq.s32.totalorder %s274, 0
      %s277 = sadd.s32 %s276, 1
      %s278 = scalar_select %p275, %s276, %s277
      %p281 = pneg %p275
      %p282 = scmp.eq.s32.totalorder %s24, 11
      %p283 = por %p281, %p282
      %p284 = scmp.ne.s32.totalorder %s276, %s279
      %p285 = scmp.eq.s32.totalorder %s24, 0
      %p286 = por %p284, %p285
      %p287 = scmp.ne.s32.totalorder %s276, %s279
      %p288 = scmp.eq.s32.totalorder %s29, 11
      %p289 = por %p287, %p288
      %p290 = scmp.ne.s32.totalorder %s279, %s280
      %p291 = scmp.eq.s32.totalorder %s29, 0
      %p292 = por %p290, %p291
      %p293 = scmp.ne.s32.totalorder %s279, %s280
      %p294 = scmp.eq.s32.totalorder %s30, 11
      %p295 = por %p293, %p294
      %p297 = scmp.ne.s32.totalorder %s280, %s296
      %p298 = scmp.eq.s32.totalorder %s30, 0
      %p299 = por %p297, %p298
      %s300 = ssub.s32 %s31, %s43
      %s301 = ssub.s32 %s32, %s39
      %s302 = sor.u32 %s300, %s301
      %p303 = scmp.eq.s32.totalorder %s302, 0
      %s305 = sadd.s32 %s304, 1
      %s306 = scalar_select %p303, %s304, %s305
      %p309 = pneg %p303
      %p310 = scmp.eq.s32.totalorder %s24, 11
      %p311 = por %p309, %p310
      %p312 = scmp.ne.s32.totalorder %s304, %s307
      %p313 = scmp.eq.s32.totalorder %s24, 0
      %p314 = por %p312, %p313
      %p315 = scmp.ne.s32.totalorder %s304, %s307
      %p316 = scmp.eq.s32.totalorder %s29, 11
      %p317 = por %p315, %p316
      %p318 = scmp.ne.s32.totalorder %s307, %s308
      %p319 = scmp.eq.s32.totalorder %s29, 0
      %p320 = por %p318, %p319
      %p321 = scmp.ne.s32.totalorder %s307, %s308
      %p322 = scmp.eq.s32.totalorder %s30, 11
      %p323 = por %p321, %p322
      %p325 = scmp.ne.s32.totalorder %s308, %s324
      %p326 = scmp.eq.s32.totalorder %s30, 0
      %p327 = por %p325, %p326
      %p328 = scmp.le.s32.totalorder 1, %s24
      %p329 = scmp.lt.s32.totalorder %s24, 13
      %p330 = pnand %p328, %p329
      %p331 = pneg %p330
      // Predicated region
      $region9: #{tpu_custom_call.1} parent=5 // pred_check
        _
      $region10: #{tpu_custom_call.1} parent=5 // pred_check_branch
        %333 = sbr.rel (%p330) target = $region12
      $region11: #{tpu_custom_call.1} parent=5 // pred_region
        %s334 = ssub.s32 %s24, 1
        // Predicated region
        $region13: #{tpu_custom_call.1} parent=11 // pred_check
          %p335 = pneg %p83
        $region14: #{tpu_custom_call.1} parent=11 // pred_check_branch
          %337 = sbr.rel (%p335) target = $region16
        $region15: #{tpu_custom_call.1} parent=11 // pred_region
          %s339 = ssub.s32 64, 64
          %340 = vsyncadd [#allocation4], %s339
          %s342 = sshll.u32 [#allocation3], 4
          %s343 = int_to_ptr.vmem [resolvable:$true] %s342
          %345 = dma.hbm_to_vmem [thread:$0]  %s1, 64, %s343, [#allocation4]
        $region16: #{tpu_custom_call.1} parent=11 // pred_fallthru
          _
        // Predicated region
        $region17: #{tpu_custom_call.1} parent=11 // pred_check
          %p346 = pneg %p104
        $region18: #{tpu_custom_call.1} parent=11 // pred_check_branch
          %348 = sbr.rel (%p346) target = $region20
        $region19: #{tpu_custom_call.1} parent=11 // pred_region
          %s350 = ssub.s32 64, 64
          %351 = vsyncadd [#allocation7], %s350
          %s353 = sshll.u32 [#allocation6], 4
          %s354 = int_to_ptr.vmem [resolvable:$true] %s353
          %356 = dma.hbm_to_vmem [thread:$0]  %s2, 64, %s354, [#allocation7]
        $region20: #{tpu_custom_call.1} parent=11 // pred_fallthru
          _
        // Predicated region
        $region21: #{tpu_custom_call.1} parent=11 // pred_check
          %p357 = pneg %p125
        $region22: #{tpu_custom_call.1} parent=11 // pred_check_branch
          %359 = sbr.rel (%p357) target = $region24
        $region23: #{tpu_custom_call.1} parent=11 // pred_region
          %s361 = ssub.s32 16384, 16384
          %362 = vsyncadd [#allocation7], %s361
          %s363 = sshll.u32 [#allocation8], 4
          %s364 = int_to_ptr.vmem [resolvable:$true] %s363
          %369 = dma.hbm_to_vmem [thread:$0]  %s3, 16384, %s364, [#allocation7], 256, 256, 16
        $region24: #{tpu_custom_call.1} parent=11 // pred_fallthru
          _
        // Predicated region
        $region25: #{tpu_custom_call.1} parent=11 // pred_check
          %p370 = pneg %p146
        $region26: #{tpu_custom_call.1} parent=11 // pred_check_branch
          %372 = sbr.rel (%p370) target = $region28
        $region27: #{tpu_custom_call.1} parent=11 // pred_region
          %s374 = ssub.s32 64, 64
          %375 = vsyncadd [#allocation10], %s374
          %s377 = sshll.u32 [#allocation9], 4
          %s378 = int_to_ptr.vmem [resolvable:$true] %s377
          %380 = dma.hbm_to_vmem [thread:$0]  %s4, 64, %s378, [#allocation10]
        $region28: #{tpu_custom_call.1} parent=11 // pred_fallthru
          _
        // Predicated region
        $region29: #{tpu_custom_call.1} parent=11 // pred_check
          %p381 = pneg %p167
        $region30: #{tpu_custom_call.1} parent=11 // pred_check_branch
          %383 = sbr.rel (%p381) target = $region32
        $region31: #{tpu_custom_call.1} parent=11 // pred_region
          %s385 = ssub.s32 16384, 16384
          %386 = vsyncadd [#allocation10], %s385
          %s387 = sshll.u32 [#allocation11], 4
          %s388 = int_to_ptr.vmem [resolvable:$true] %s387
          %393 = dma.hbm_to_vmem [thread:$0]  %s5, 16384, %s388, [#allocation10], 256, 256, 16
        $region32: #{tpu_custom_call.1} parent=11 // pred_fallthru
          _
        // Predicated region
        $region33: #{tpu_custom_call.1} parent=11 // pred_check
          %p394 = pneg %p188
        $region34: #{tpu_custom_call.1} parent=11 // pred_check_branch
          %396 = sbr.rel (%p394) target = $region36
        $region35: #{tpu_custom_call.1} parent=11 // pred_region
          %s398 = ssub.s32 64, 64
          %399 = vsyncadd [#allocation13], %s398
          %s401 = sshll.u32 [#allocation12], 4
          %s402 = int_to_ptr.vmem [resolvable:$true] %s401
          %404 = dma.hbm_to_vmem [thread:$0]  %s6, 64, %s402, [#allocation13]
        $region36: #{tpu_custom_call.1} parent=11 // pred_fallthru
          _
      $region12: #{tpu_custom_call.1} parent=5 // pred_fallthru
        _
      %p405 = scmp.lt.s32.totalorder %s24, 12
      // Predicated region
      $region37: #{tpu_custom_call.1} parent=5 // pred_check
        %p406 = pneg %p405
      $region38: #{tpu_custom_call.1} parent=5 // pred_check_branch
        %408 = sbr.rel (%p406) target = $region40
      $region39: #{tpu_custom_call.1} parent=5 // pred_region
        // Predicated region
        $region41: #{tpu_custom_call.1} parent=39 // pred_check
          %p409 = pneg %p56
        $region42: #{tpu_custom_call.1} parent=39 // pred_check_branch
          %411 = sbr.rel (%p409) target = $region44
        $region43: #{tpu_custom_call.1} parent=39 // pred_region
          %s412 = smul.u32 16, %s31
          %p413 = scmp.lt.s32.totalorder %s412, 31
          %s414 = scalar_select %p413, %s412, 31
          %s415 = smul.addr %s414, 8
          %s416 = scalar_lea.vmem %s0, %s415
          %s417 = smul.u32 16, %s31
        $region44: #{tpu_custom_call.1} parent=39 // pred_fallthru
          _
        // Predicated region
        $region45: #{tpu_custom_call.1} parent=39 // pred_check
          %p418 = pneg %p208
        $region46: #{tpu_custom_call.1} parent=39 // pred_check_branch
          %420 = sbr.rel (%p418) target = $region48
        $region47: #{tpu_custom_call.1} parent=39 // pred_region
          %s421 = sand.u32 %s24, 1
          %s422 = scalar_lea.sflag [#allocation4], %s421
          %s423 = sand.u32 %s198, 1
          %s424 = smul.addr %s423, 768
          %s425 = scalar_lea.vmem [#allocation14], %s424
          %s426 = smul.u32 3, %s32
          %s428 = ssub.s32 12288, 12288
          %429 = vsyncadd %s422, %s428
          %s430 = smul.addr %s426, 64
          %s431 = scalar_lea.hbm %s7, %s430
          %s432 = sshll.u32 %s425, 4
          %s433 = int_to_ptr.vmem [resolvable:$true] %s432
          %438 = dma.hbm_to_vmem [thread:$0]  %s431, 12288, %s433, %s422, 1152, 192, 12
        $region48: #{tpu_custom_call.1} parent=39 // pred_fallthru
          _
        // Predicated region
        $region49: #{tpu_custom_call.1} parent=39 // pred_check
          %p439 = pneg %p234
        $region50: #{tpu_custom_call.1} parent=39 // pred_check_branch
          %441 = sbr.rel (%p439) target = $region52
        $region51: #{tpu_custom_call.1} parent=39 // pred_region
          %s442 = sand.u32 %s24, 1
          %s443 = scalar_lea.sflag [#allocation4], %s442
          %s444 = sand.u32 %s224, 1
          %s445 = smul.addr %s444, 3
          %s446 = scalar_lea.vmem [#allocation15], %s445
          %s447 = smul.u32 3, %s32
          %s449 = ssub.s32 48, 48
          %450 = vsyncadd %s443, %s449
          %s451 = smul.addr %s447, 16
          %s452 = scalar_lea.hbm %s8, %s451
          %s454 = sshll.u32 %s446, 4
          %s455 = int_to_ptr.vmem [resolvable:$true] %s454
          %457 = dma.hbm_to_vmem [thread:$0]  %s452, 48, %s455, %s443
        $region52: #{tpu_custom_call.1} parent=39 // pred_fallthru
          _
        // Predicated region
        $region53: #{tpu_custom_call.1} parent=39 // pred_check
          %p458 = pneg %p260
        $region54: #{tpu_custom_call.1} parent=39 // pred_check_branch
          %460 = sbr.rel (%p458) target = $region56
        $region55: #{tpu_custom_call.1} parent=39 // pred_region
          %s461 = sand.u32 %s24, 1
          %s462 = scalar_lea.sflag [#allocation4], %s461
          %s463 = sand.u32 %s250, 1
          %s464 = smul.addr %s463, 3
          %s465 = scalar_lea.vmem [#allocation16], %s464
          %s466 = smul.u32 3, %s32
          %s468 = ssub.s32 48, 48
          %469 = vsyncadd %s462, %s468
          %s470 = smul.addr %s466, 16
          %s471 = scalar_lea.hbm %s9, %s470
          %s473 = sshll.u32 %s465, 4
          %s474 = int_to_ptr.vmem [resolvable:$true] %s473
          %476 = dma.hbm_to_vmem [thread:$0]  %s471, 48, %s474, %s462
        $region56: #{tpu_custom_call.1} parent=39 // pred_fallthru
          _
        // Predicated region
        $region57: #{tpu_custom_call.1} parent=39 // pred_check
          %p477 = pneg %p286
        $region58: #{tpu_custom_call.1} parent=39 // pred_check_branch
          %479 = sbr.rel (%p477) target = $region60
        $region59: #{tpu_custom_call.1} parent=39 // pred_region
          %s480 = sand.u32 %s24, 1
          %s481 = scalar_lea.sflag [#allocation4], %s480
          %s482 = sand.u32 %s276, 1
          %s483 = smul.addr %s482, 3
          %s484 = scalar_lea.vmem [#allocation17], %s483
          %s485 = smul.u32 3, %s32
          %s487 = ssub.s32 48, 48
          %488 = vsyncadd %s481, %s487
          %s489 = smul.addr %s485, 16
          %s490 = scalar_lea.hbm %s10, %s489
          %s492 = sshll.u32 %s484, 4
          %s493 = int_to_ptr.vmem [resolvable:$true] %s492
          %495 = dma.hbm_to_vmem [thread:$0]  %s490, 48, %s493, %s481
        $region60: #{tpu_custom_call.1} parent=39 // pred_fallthru
          _
      $region40: #{tpu_custom_call.1} parent=5 // pred_fallthru
        _
      %p496 = scmp.le.s32.totalorder 1, %s24
      %p497 = scmp.lt.s32.totalorder %s24, 13
      %p498 = pnand %p496, %p497
      %p499 = pneg %p498
      // Predicated region
      $region61: #{tpu_custom_call.1} parent=5 // pred_check
        _
      $region62: #{tpu_custom_call.1} parent=5 // pred_check_branch
        %501 = sbr.rel (%p498) target = $region64
      $region63: #{tpu_custom_call.1} parent=5 // pred_region
        %s502 = ssub.s32 %s24, 1
        // Predicated region
        $region65: #{tpu_custom_call.1} parent=63 // pred_check
          %p503 = pneg %p83
        $region66: #{tpu_custom_call.1} parent=63 // pred_check_branch
          %505 = sbr.rel (%p503) target = $region68
        $region67: #{tpu_custom_call.1} parent=63 // pred_region
          %506 = dma.done [#allocation4], 64
        $region68: #{tpu_custom_call.1} parent=63 // pred_fallthru
          _
        // Predicated region
        $region69: #{tpu_custom_call.1} parent=63 // pred_check
          %p507 = pneg %p104
        $region70: #{tpu_custom_call.1} parent=63 // pred_check_branch
          %509 = sbr.rel (%p507) target = $region72
        $region71: #{tpu_custom_call.1} parent=63 // pred_region
          %510 = dma.done [#allocation7], 64
        $region72: #{tpu_custom_call.1} parent=63 // pred_fallthru
          _
        // Predicated region
        $region73: #{tpu_custom_call.1} parent=63 // pred_check
          %p511 = pneg %p125
        $region74: #{tpu_custom_call.1} parent=63 // pred_check_branch
          %513 = sbr.rel (%p511) target = $region76
        $region75: #{tpu_custom_call.1} parent=63 // pred_region
          %514 = dma.done [#allocation7], 16384
        $region76: #{tpu_custom_call.1} parent=63 // pred_fallthru
          _
        // Predicated region
        $region77: #{tpu_custom_call.1} parent=63 // pred_check
          %p515 = pneg %p146
        $region78: #{tpu_custom_call.1} parent=63 // pred_check_branch
          %517 = sbr.rel (%p515) target = $region80
        $region79: #{tpu_custom_call.1} parent=63 // pred_region
          %518 = dma.done [#allocation10], 64
        $region80: #{tpu_custom_call.1} parent=63 // pred_fallthru
          _
        // Predicated region
        $region81: #{tpu_custom_call.1} parent=63 // pred_check
          %p519 = pneg %p167
        $region82: #{tpu_custom_call.1} parent=63 // pred_check_branch
          %521 = sbr.rel (%p519) target = $region84
        $region83: #{tpu_custom_call.1} parent=63 // pred_region
          %522 = dma.done [#allocation10], 16384
        $region84: #{tpu_custom_call.1} parent=63 // pred_fallthru
          _
        // Predicated region
        $region85: #{tpu_custom_call.1} parent=63 // pred_check
          %p523 = pneg %p188
        $region86: #{tpu_custom_call.1} parent=63 // pred_check_branch
          %525 = sbr.rel (%p523) target = $region88
        $region87: #{tpu_custom_call.1} parent=63 // pred_region
          %526 = dma.done [#allocation13], 64
        $region88: #{tpu_custom_call.1} parent=63 // pred_fallthru
          _
        %s527 = sand.u32 %s29, 1
        %s528 = scalar_lea.sflag [#allocation4], %s527
        %s529 = sand.u32 %s201, 1
        %s530 = smul.addr %s529, 768
        %s531 = scalar_lea.vmem [#allocation14], %s530
        // Predicated region
        $region89: #{tpu_custom_call.1} parent=63 // pred_check
          %p532 = pneg %p214
        $region90: #{tpu_custom_call.1} parent=63 // pred_check_branch
          %534 = sbr.rel (%p532) target = $region92
        $region91: #{tpu_custom_call.1} parent=63 // pred_region
          %535 = dma.done %s528, 12288
        $region92: #{tpu_custom_call.1} parent=63 // pred_fallthru
          _
        %s536 = sand.u32 %s29, 1
        %s537 = scalar_lea.sflag [#allocation4], %s536
        %s538 = sand.u32 %s227, 1
        %s539 = smul.addr %s538, 3
        %s540 = scalar_lea.vmem [#allocation15], %s539
        // Predicated region
        $region93: #{tpu_custom_call.1} parent=63 // pred_check
          %p541 = pneg %p240
        $region94: #{tpu_custom_call.1} parent=63 // pred_check_branch
          %543 = sbr.rel (%p541) target = $region96
        $region95: #{tpu_custom_call.1} parent=63 // pred_region
          %544 = dma.done %s537, 48
        $region96: #{tpu_custom_call.1} parent=63 // pred_fallthru
          _
        %s545 = sand.u32 %s29, 1
        %s546 = scalar_lea.sflag [#allocation4], %s545
        %s547 = sand.u32 %s253, 1
        %s548 = smul.addr %s547, 3
        %s549 = scalar_lea.vmem [#allocation16], %s548
        // Predicated region
        $region97: #{tpu_custom_call.1} parent=63 // pred_check
          %p550 = pneg %p266
        $region98: #{tpu_custom_call.1} parent=63 // pred_check_branch
          %552 = sbr.rel (%p550) target = $region100
        $region99: #{tpu_custom_call.1} parent=63 // pred_region
          %553 = dma.done %s546, 48
        $region100: #{tpu_custom_call.1} parent=63 // pred_fallthru
          _
        %s554 = sand.u32 %s29, 1
        %s555 = scalar_lea.sflag [#allocation4], %s554
        %s556 = sand.u32 %s279, 1
        %s557 = smul.addr %s556, 3
        %s558 = scalar_lea.vmem [#allocation17], %s557
        // Predicated region
        $region101: #{tpu_custom_call.1} parent=63 // pred_check
          %p559 = pneg %p292
        $region102: #{tpu_custom_call.1} parent=63 // pred_check_branch
          %561 = sbr.rel (%p559) target = $region104
        $region103: #{tpu_custom_call.1} parent=63 // pred_region
          %562 = dma.done %s555, 48
        $region104: #{tpu_custom_call.1} parent=63 // pred_fallthru
          _
        %s563 = smul.u32 16, %s33
        %p564 = scmp.lt.s32.totalorder %s563, 31
        %s565 = scalar_select %p564, %s563, 31
        %s566 = smul.addr %s565, 8
        %s567 = scalar_lea.vmem %s0, %s566
        %p568 = pneg %p62
        %p569 = pneg %p59
        %p570 = pneg %p83
        %p571 = pneg %p80
        %p572 = pneg %p104
        %p573 = pneg %p101
        %p574 = pneg %p125
        %p575 = pneg %p122
        %p576 = pneg %p146
        %p577 = pneg %p143
        %p578 = pneg %p167
        %p579 = pneg %p164
        %p580 = pneg %p188
        %p581 = pneg %p185
        %s582 = sand.u32 %s29, 1
        %s583 = scalar_lea.sflag [#allocation4], %s582
        %s584 = sand.u32 %s201, 1
        %s585 = smul.addr %s584, 768
        %s586 = scalar_lea.vmem [#allocation14], %s585
        %p587 = pneg %p214
        %p588 = pneg %p211
        %s589 = sand.u32 %s29, 1
        %s590 = scalar_lea.sflag [#allocation4], %s589
        %s591 = sand.u32 %s227, 1
        %s592 = smul.addr %s591, 3
        %s593 = scalar_lea.vmem [#allocation15], %s592
        %p594 = pneg %p240
        %p595 = pneg %p237
        %s596 = sand.u32 %s29, 1
        %s597 = scalar_lea.sflag [#allocation4], %s596
        %s598 = sand.u32 %s253, 1
        %s599 = smul.addr %s598, 3
        %s600 = scalar_lea.vmem [#allocation16], %s599
        %p601 = pneg %p266
        %p602 = pneg %p263
        %s603 = sand.u32 %s29, 1
        %s604 = scalar_lea.sflag [#allocation4], %s603
        %s605 = sand.u32 %s279, 1
        %s606 = smul.addr %s605, 3
        %s607 = scalar_lea.vmem [#allocation17], %s606
        %p608 = pneg %p292
        %p609 = pneg %p289
        %p610 = pneg %p320
        %p611 = pneg %p317
        %s612 = sand.u32 %s307, 1
        %s613 = scalar_lea.sflag [#allocation5], %s612
        %s614 = sand.u32 %s307, 1
        %s615 = smul.addr %s614, 384
        %s616 = scalar_lea.vmem [#allocation18], %s615
        %s617 = smul.u32 16, %s33
        %p618 = scmp.lt.s32.totalorder %s617, 31
        %s619 = scalar_select %p618, %s617, 31
        %s620 = smul.addr %s619, 8
        %s621 = scalar_lea.vmem %s0, %s620
        %s622 = smul.u32 16, %s33
        %s623 = smul.u32 3, %s34
        %s624 = smul.u32 3, %s34
        %s625 = smul.u32 3, %s34
        %s626 = smul.u32 3, %s34
        %s627 = smul.u32 16, %s33
        %s628 = smul.u32 3, %s34
        %p630 = scmp.eq.s32.totalorder %s34, 0
        // Predicated region
        $region105: #{tpu_custom_call.1} parent=63 // pred_check
          %p631 = pneg %p630
        $region106: #{tpu_custom_call.1} parent=63 // pred_check_branch
          %633 = sbr.rel (%p631) target = $region108
        $region107: #{tpu_custom_call.1} parent=63 // pred_region
          %v634 = vld [vmem:[%s621] sm:$0xff]
          %v635 = vld [vmem:[%s621 + $0x8] sm:$0xff]
          %v636 = vld [vmem:[%s621 + $0x10] sm:$0xff]
          %v637 = vld [vmem:[%s621 + $0x18] sm:$0xff]
          %v638 = vld [vmem:[%s621 + $0x20] sm:$0xff]
          %v639 = vld [vmem:[%s621 + $0x28] sm:$0xff]
          %v640 = vld [vmem:[%s621 + $0x30] sm:$0xff]
          %v641 = vld [vmem:[%s621 + $0x38] sm:$0xff]
          %v642 = vld [vmem:[%s621 + $0x40] sm:$0xff]
          %v643 = vld [vmem:[%s621 + $0x48] sm:$0xff]
          %v644 = vld [vmem:[%s621 + $0x50] sm:$0xff]
          %v645 = vld [vmem:[%s621 + $0x58] sm:$0xff]
          %v646 = vld [vmem:[%s621 + $0x60] sm:$0xff]
          %v647 = vld [vmem:[%s621 + $0x68] sm:$0xff]
          %v648 = vld [vmem:[%s621 + $0x70] sm:$0xff]
          %v649 = vld [vmem:[%s621 + $0x78] sm:$0xff]
          %v650 = vld [vmem:[#allocation3] sm:$0xf]
          %652 = vset.pattern.permute.xlu0 0
          %653 = vperm.xlu0 %652, %v634
          %v654 = vpop.permute.xlu0 %653
          %657 = vset.pattern.permute.xlu0 0
          %658 = vperm.xlu0 %657, %v635
          %v659 = vpop.permute.xlu0 %658
          %662 = vset.pattern.permute.xlu0 0
          %663 = vperm.xlu0 %662, %v636
          %v664 = vpop.permute.xlu0 %663
          %667 = vset.pattern.permute.xlu0 0
          %668 = vperm.xlu0 %667, %v637
          %v669 = vpop.permute.xlu0 %668
          %672 = vset.pattern.permute.xlu0 0
          %673 = vperm.xlu0 %672, %v638
          %v674 = vpop.permute.xlu0 %673
          %677 = vset.pattern.permute.xlu0 0
          %678 = vperm.xlu0 %677, %v639
          %v679 = vpop.permute.xlu0 %678
          %682 = vset.pattern.permute.xlu0 0
          %683 = vperm.xlu0 %682, %v640
          %v684 = vpop.permute.xlu0 %683
          %687 = vset.pattern.permute.xlu0 0
          %688 = vperm.xlu0 %687, %v641
          %v689 = vpop.permute.xlu0 %688
          %692 = vset.pattern.permute.xlu0 0
          %693 = vperm.xlu0 %692, %v642
          %v694 = vpop.permute.xlu0 %693
          %697 = vset.pattern.permute.xlu0 0
          %698 = vperm.xlu0 %697, %v643
          %v699 = vpop.permute.xlu0 %698
          %702 = vset.pattern.permute.xlu0 0
          %703 = vperm.xlu0 %702, %v644
          %v704 = vpop.permute.xlu0 %703
          %707 = vset.pattern.permute.xlu0 0
          %708 = vperm.xlu0 %707, %v645
          %v709 = vpop.permute.xlu0 %708
          %712 = vset.pattern.permute.xlu0 0
          %713 = vperm.xlu0 %712, %v646
          %v714 = vpop.permute.xlu0 %713
          %717 = vset.pattern.permute.xlu0 0
          %718 = vperm.xlu0 %717, %v647
          %v719 = vpop.permute.xlu0 %718
          %722 = vset.pattern.permute.xlu0 0
          %723 = vperm.xlu0 %722, %v648
          %v724 = vpop.permute.xlu0 %723
          %727 = vset.pattern.permute.xlu0 0
          %728 = vperm.xlu0 %727, %v649
          %v729 = vpop.permute.xlu0 %728
          %v732 = vlaneseq
          %v733 = vshrl.u32 %v732, 7
          %v734 = vsub.s32 0, %v733
          %v735 = vrot.slane %v650, %v734
          %v736 = vlaneseq
          %v737 = vshrl.u32 %v736, 7
          %v738 = vsub.s32 1, %v737
          %v739 = vrot.slane %v650, %v738
          %v740 = vlaneseq
          %v741 = vshrl.u32 %v740, 7
          %v742 = vsub.s32 2, %v741
          %v743 = vrot.slane %v650, %v742
          %v744 = vlaneseq
          %v745 = vshrl.u32 %v744, 7
          %v746 = vsub.s32 3, %v745
          %v747 = vrot.slane %v650, %v746
          %v752 = vmul.f32 %v654, %v735
          %v753 = vmul.f32 %v654, %v739
          %v754 = vmul.f32 %v654, %v743
          %v755 = vmul.f32 %v654, %v747
          %v756 = vmul.f32 %v659, %v735
          %v757 = vmul.f32 %v659, %v739
          %v758 = vmul.f32 %v659, %v743
          %v759 = vmul.f32 %v659, %v747
          %v760 = vmul.f32 %v664, %v735
          %v761 = vmul.f32 %v664, %v739
          %v762 = vmul.f32 %v664, %v743
          %v763 = vmul.f32 %v664, %v747
          %v764 = vmul.f32 %v669, %v735
          %v765 = vmul.f32 %v669, %v739
          %v766 = vmul.f32 %v669, %v743
          %v767 = vmul.f32 %v669, %v747
          %v768 = vmul.f32 %v674, %v735
          %v769 = vmul.f32 %v674, %v739
          %v770 = vmul.f32 %v674, %v743
          %v771 = vmul.f32 %v674, %v747
          %v772 = vmul.f32 %v679, %v735
          %v773 = vmul.f32 %v679, %v739
          %v774 = vmul.f32 %v679, %v743
          %v775 = vmul.f32 %v679, %v747
          %v776 = vmul.f32 %v684, %v735
          %v777 = vmul.f32 %v684, %v739
          %v778 = vmul.f32 %v684, %v743
          %v779 = vmul.f32 %v684, %v747
          %v780 = vmul.f32 %v689, %v735
          %v781 = vmul.f32 %v689, %v739
          %v782 = vmul.f32 %v689, %v743
          %v783 = vmul.f32 %v689, %v747
          %v784 = vmul.f32 %v694, %v735
          %v785 = vmul.f32 %v694, %v739
          %v786 = vmul.f32 %v694, %v743
          %v787 = vmul.f32 %v694, %v747
          %v788 = vmul.f32 %v699, %v735
          %v789 = vmul.f32 %v699, %v739
          %v790 = vmul.f32 %v699, %v743
          %v791 = vmul.f32 %v699, %v747
          %v792 = vmul.f32 %v704, %v735
          %v793 = vmul.f32 %v704, %v739
          %v794 = vmul.f32 %v704, %v743
          %v795 = vmul.f32 %v704, %v747
          %v796 = vmul.f32 %v709, %v735
          %v797 = vmul.f32 %v709, %v739
          %v798 = vmul.f32 %v709, %v743
          %v799 = vmul.f32 %v709, %v747
          %v800 = vmul.f32 %v714, %v735
          %v801 = vmul.f32 %v714, %v739
          %v802 = vmul.f32 %v714, %v743
          %v803 = vmul.f32 %v714, %v747
          %v804 = vmul.f32 %v719, %v735
          %v805 = vmul.f32 %v719, %v739
          %v806 = vmul.f32 %v719, %v743
          %v807 = vmul.f32 %v719, %v747
          %v808 = vmul.f32 %v724, %v735
          %v809 = vmul.f32 %v724, %v739
          %v810 = vmul.f32 %v724, %v743
          %v811 = vmul.f32 %v724, %v747
          %v812 = vmul.f32 %v729, %v735
          %v813 = vmul.f32 %v729, %v739
          %v814 = vmul.f32 %v729, %v743
          %v815 = vmul.f32 %v729, %v747
          %v816 = vld [vmem:[#allocation6] sm:$0xf]
          %v818 = vlaneseq
          %v819 = vshrl.u32 %v818, 7
          %v820 = vsub.s32 0, %v819
          %v821 = vrot.slane %v816, %v820
          %v822 = vlaneseq
          %v823 = vshrl.u32 %v822, 7
          %v824 = vsub.s32 1, %v823
          %v825 = vrot.slane %v816, %v824
          %v826 = vlaneseq
          %v827 = vshrl.u32 %v826, 7
          %v828 = vsub.s32 2, %v827
          %v829 = vrot.slane %v816, %v828
          %v830 = vlaneseq
          %v831 = vshrl.u32 %v830, 7
          %v832 = vsub.s32 3, %v831
          %v833 = vrot.slane %v816, %v832
          %v838 = vadd.f32 %v752, %v821
          %v839 = vadd.f32 %v753, %v825
          %v840 = vadd.f32 %v754, %v829
          %v841 = vadd.f32 %v755, %v833
          %v842 = vadd.f32 %v756, %v821
          %v843 = vadd.f32 %v757, %v825
          %v844 = vadd.f32 %v758, %v829
          %v845 = vadd.f32 %v759, %v833
          %v846 = vadd.f32 %v760, %v821
          %v847 = vadd.f32 %v761, %v825
          %v848 = vadd.f32 %v762, %v829
          %v849 = vadd.f32 %v763, %v833
          %v850 = vadd.f32 %v764, %v821
          %v851 = vadd.f32 %v765, %v825
          %v852 = vadd.f32 %v766, %v829
          %v853 = vadd.f32 %v767, %v833
          %v854 = vadd.f32 %v768, %v821
          %v855 = vadd.f32 %v769, %v825
          %v856 = vadd.f32 %v770, %v829
          %v857 = vadd.f32 %v771, %v833
          %v858 = vadd.f32 %v772, %v821
          %v859 = vadd.f32 %v773, %v825
          %v860 = vadd.f32 %v774, %v829
          %v861 = vadd.f32 %v775, %v833
          %v862 = vadd.f32 %v776, %v821
          %v863 = vadd.f32 %v777, %v825
          %v864 = vadd.f32 %v778, %v829
          %v865 = vadd.f32 %v779, %v833
          %v866 = vadd.f32 %v780, %v821
          %v867 = vadd.f32 %v781, %v825
          %v868 = vadd.f32 %v782, %v829
          %v869 = vadd.f32 %v783, %v833
          %v870 = vadd.f32 %v784, %v821
          %v871 = vadd.f32 %v785, %v825
          %v872 = vadd.f32 %v786, %v829
          %v873 = vadd.f32 %v787, %v833
          %v874 = vadd.f32 %v788, %v821
          %v875 = vadd.f32 %v789, %v825
          %v876 = vadd.f32 %v790, %v829
          %v877 = vadd.f32 %v791, %v833
          %v878 = vadd.f32 %v792, %v821
          %v879 = vadd.f32 %v793, %v825
          %v880 = vadd.f32 %v794, %v829
          %v881 = vadd.f32 %v795, %v833
          %v882 = vadd.f32 %v796, %v821
          %v883 = vadd.f32 %v797, %v825
          %v884 = vadd.f32 %v798, %v829
          %v885 = vadd.f32 %v799, %v833
          %v886 = vadd.f32 %v800, %v821
          %v887 = vadd.f32 %v801, %v825
          %v888 = vadd.f32 %v802, %v829
          %v889 = vadd.f32 %v803, %v833
          %v890 = vadd.f32 %v804, %v821
          %v891 = vadd.f32 %v805, %v825
          %v892 = vadd.f32 %v806, %v829
          %v893 = vadd.f32 %v807, %v833
          %v894 = vadd.f32 %v808, %v821
          %v895 = vadd.f32 %v809, %v825
          %v896 = vadd.f32 %v810, %v829
          %v897 = vadd.f32 %v811, %v833
          %v898 = vadd.f32 %v812, %v821
          %v899 = vadd.f32 %v813, %v825
          %v900 = vadd.f32 %v814, %v829
          %v901 = vadd.f32 %v815, %v833
          %v902 = vtanh.pop %v838
          %v903 = vtanh.pop %v839
          %v904 = vtanh.pop %v840
          %v905 = vtanh.pop %v841
          %v906 = vtanh.pop %v842
          %v907 = vtanh.pop %v843
          %v908 = vtanh.pop %v844
          %v909 = vtanh.pop %v845
          %v910 = vtanh.pop %v846
          %v911 = vtanh.pop %v847
          %v912 = vtanh.pop %v848
          %v913 = vtanh.pop %v849
          %v914 = vtanh.pop %v850
          %v915 = vtanh.pop %v851
          %v916 = vtanh.pop %v852
          %v917 = vtanh.pop %v853
          %v918 = vtanh.pop %v854
          %v919 = vtanh.pop %v855
          %v920 = vtanh.pop %v856
          %v921 = vtanh.pop %v857
          %v922 = vtanh.pop %v858
          %v923 = vtanh.pop %v859
          %v924 = vtanh.pop %v860
          %v925 = vtanh.pop %v861
          %v926 = vtanh.pop %v862
          %v927 = vtanh.pop %v863
          %v928 = vtanh.pop %v864
          %v929 = vtanh.pop %v865
          %v930 = vtanh.pop %v866
          %v931 = vtanh.pop %v867
          %v932 = vtanh.pop %v868
          %v933 = vtanh.pop %v869
          %v934 = vtanh.pop %v870
          %v935 = vtanh.pop %v871
          %v936 = vtanh.pop %v872
          %v937 = vtanh.pop %v873
          %v938 = vtanh.pop %v874
          %v939 = vtanh.pop %v875
          %v940 = vtanh.pop %v876
          %v941 = vtanh.pop %v877
          %v942 = vtanh.pop %v878
          %v943 = vtanh.pop %v879
          %v944 = vtanh.pop %v880
          %v945 = vtanh.pop %v881
          %v946 = vtanh.pop %v882
          %v947 = vtanh.pop %v883
          %v948 = vtanh.pop %v884
          %v949 = vtanh.pop %v885
          %v950 = vtanh.pop %v886
          %v951 = vtanh.pop %v887
          %v952 = vtanh.pop %v888
          %v953 = vtanh.pop %v889
          %v954 = vtanh.pop %v890
          %v955 = vtanh.pop %v891
          %v956 = vtanh.pop %v892
          %v957 = vtanh.pop %v893
          %v958 = vtanh.pop %v894
          %v959 = vtanh.pop %v895
          %v960 = vtanh.pop %v896
          %v961 = vtanh.pop %v897
          %v962 = vtanh.pop %v898
          %v963 = vtanh.pop %v899
          %v964 = vtanh.pop %v900
          %v965 = vtanh.pop %v901
          %v966 = vpack.c.bf16 %v906, %v902
          %v967 = vpack.c.bf16 %v907, %v903
          %v968 = vpack.c.bf16 %v908, %v904
          %v969 = vpack.c.bf16 %v909, %v905
          %v970 = vpack.c.bf16 %v914, %v910
          %v971 = vpack.c.bf16 %v915, %v911
          %v972 = vpack.c.bf16 %v916, %v912
          %v973 = vpack.c.bf16 %v917, %v913
          %v974 = vpack.c.bf16 %v922, %v918
          %v975 = vpack.c.bf16 %v923, %v919
          %v976 = vpack.c.bf16 %v924, %v920
          %v977 = vpack.c.bf16 %v925, %v921
          %v978 = vpack.c.bf16 %v930, %v926
          %v979 = vpack.c.bf16 %v931, %v927
          %v980 = vpack.c.bf16 %v932, %v928
          %v981 = vpack.c.bf16 %v933, %v929
          %v982 = vpack.c.bf16 %v938, %v934
          %v983 = vpack.c.bf16 %v939, %v935
          %v984 = vpack.c.bf16 %v940, %v936
          %v985 = vpack.c.bf16 %v941, %v937
          %v986 = vpack.c.bf16 %v946, %v942
          %v987 = vpack.c.bf16 %v947, %v943
          %v988 = vpack.c.bf16 %v948, %v944
          %v989 = vpack.c.bf16 %v949, %v945
          %v990 = vpack.c.bf16 %v954, %v950
          %v991 = vpack.c.bf16 %v955, %v951
          %v992 = vpack.c.bf16 %v956, %v952
          %v993 = vpack.c.bf16 %v957, %v953
          %v994 = vpack.c.bf16 %v962, %v958
          %v995 = vpack.c.bf16 %v963, %v959
          %v996 = vpack.c.bf16 %v964, %v960
          %v997 = vpack.c.bf16 %v965, %v961
          %v998 = vld [vmem:[#allocation8] sm:$0xff]
          %v999 = vld [vmem:[#allocation8 + $0x8] sm:$0xff]
          %v1000 = vld [vmem:[#allocation8 + $0x10] sm:$0xff]
          %v1001 = vld [vmem:[#allocation8 + $0x18] sm:$0xff]
          %v1002 = vld [vmem:[#allocation8 + $0x20] sm:$0xff]
          %v1003 = vld [vmem:[#allocation8 + $0x28] sm:$0xff]
          %v1004 = vld [vmem:[#allocation8 + $0x30] sm:$0xff]
          %v1005 = vld [vmem:[#allocation8 + $0x38] sm:$0xff]
          %v1006 = vld [vmem:[#allocation8 + $0x40] sm:$0xff]
          %v1007 = vld [vmem:[#allocation8 + $0x48] sm:$0xff]
          %v1008 = vld [vmem:[#allocation8 + $0x50] sm:$0xff]
          %v1009 = vld [vmem:[#allocation8 + $0x58] sm:$0xff]
          %v1010 = vld [vmem:[#allocation8 + $0x60] sm:$0xff]
          %v1011 = vld [vmem:[#allocation8 + $0x68] sm:$0xff]
          %v1012 = vld [vmem:[#allocation8 + $0x70] sm:$0xff]
          %v1013 = vld [vmem:[#allocation8 + $0x78] sm:$0xff]
          %v1014 = vld [vmem:[#allocation8 + $0x80] sm:$0xff]
          %v1015 = vld [vmem:[#allocation8 + $0x88] sm:$0xff]
          %v1016 = vld [vmem:[#allocation8 + $0x90] sm:$0xff]
          %v1017 = vld [vmem:[#allocation8 + $0x98] sm:$0xff]
          %v1018 = vld [vmem:[#allocation8 + $0xa0] sm:$0xff]
          %v1019 = vld [vmem:[#allocation8 + $0xa8] sm:$0xff]
          %v1020 = vld [vmem:[#allocation8 + $0xb0] sm:$0xff]
          %v1021 = vld [vmem:[#allocation8 + $0xb8] sm:$0xff]
          %v1022 = vld [vmem:[#allocation8 + $0xc0] sm:$0xff]
          %v1023 = vld [vmem:[#allocation8 + $0xc8] sm:$0xff]
          %v1024 = vld [vmem:[#allocation8 + $0xd0] sm:$0xff]
          %v1025 = vld [vmem:[#allocation8 + $0xd8] sm:$0xff]
          %v1026 = vld [vmem:[#allocation8 + $0xe0] sm:$0xff]
          %v1027 = vld [vmem:[#allocation8 + $0xe8] sm:$0xff]
          %v1028 = vld [vmem:[#allocation8 + $0xf0] sm:$0xff]
          %v1029 = vld [vmem:[#allocation8 + $0xf8] sm:$0xff]
          %v1030 = vld [vmem:[#allocation8 + $0x100] sm:$0xff]
          %v1031 = vld [vmem:[#allocation8 + $0x108] sm:$0xff]
          %v1032 = vld [vmem:[#allocation8 + $0x110] sm:$0xff]
          %v1033 = vld [vmem:[#allocation8 + $0x118] sm:$0xff]
          %v1034 = vld [vmem:[#allocation8 + $0x120] sm:$0xff]
          %v1035 = vld [vmem:[#allocation8 + $0x128] sm:$0xff]
          %v1036 = vld [vmem:[#allocation8 + $0x130] sm:$0xff]
          %v1037 = vld [vmem:[#allocation8 + $0x138] sm:$0xff]
          %v1038 = vld [vmem:[#allocation8 + $0x140] sm:$0xff]
          %v1039 = vld [vmem:[#allocation8 + $0x148] sm:$0xff]
          %v1040 = vld [vmem:[#allocation8 + $0x150] sm:$0xff]
          %v1041 = vld [vmem:[#allocation8 + $0x158] sm:$0xff]
          %v1042 = vld [vmem:[#allocation8 + $0x160] sm:$0xff]
          %v1043 = vld [vmem:[#allocation8 + $0x168] sm:$0xff]
          %v1044 = vld [vmem:[#allocation8 + $0x170] sm:$0xff]
          %v1045 = vld [vmem:[#allocation8 + $0x178] sm:$0xff]
          %v1046 = vld [vmem:[#allocation8 + $0x180] sm:$0xff]
          %v1047 = vld [vmem:[#allocation8 + $0x188] sm:$0xff]
          %v1048 = vld [vmem:[#allocation8 + $0x190] sm:$0xff]
          %v1049 = vld [vmem:[#allocation8 + $0x198] sm:$0xff]
          %v1050 = vld [vmem:[#allocation8 + $0x1a0] sm:$0xff]
          %v1051 = vld [vmem:[#allocation8 + $0x1a8] sm:$0xff]
          %v1052 = vld [vmem:[#allocation8 + $0x1b0] sm:$0xff]
          %v1053 = vld [vmem:[#allocation8 + $0x1b8] sm:$0xff]
          %v1054 = vld [vmem:[#allocation8 + $0x1c0] sm:$0xff]
          %v1055 = vld [vmem:[#allocation8 + $0x1c8] sm:$0xff]
          %v1056 = vld [vmem:[#allocation8 + $0x1d0] sm:$0xff]
          %v1057 = vld [vmem:[#allocation8 + $0x1d8] sm:$0xff]
          %v1058 = vld [vmem:[#allocation8 + $0x1e0] sm:$0xff]
          %v1059 = vld [vmem:[#allocation8 + $0x1e8] sm:$0xff]
          %v1060 = vld [vmem:[#allocation8 + $0x1f0] sm:$0xff]
          %v1061 = vld [vmem:[#allocation8 + $0x1f8] sm:$0xff]
          %v1062 = vld [vmem:[#allocation8 + $0x200] sm:$0xff]
          %v1063 = vld [vmem:[#allocation8 + $0x208] sm:$0xff]
          %v1064 = vld [vmem:[#allocation8 + $0x210] sm:$0xff]
          %v1065 = vld [vmem:[#allocation8 + $0x218] sm:$0xff]
          %v1066 = vld [vmem:[#allocation8 + $0x220] sm:$0xff]
          %v1067 = vld [vmem:[#allocation8 + $0x228] sm:$0xff]
          %v1068 = vld [vmem:[#allocation8 + $0x230] sm:$0xff]
          %v1069 = vld [vmem:[#allocation8 + $0x238] sm:$0xff]
          %v1070 = vld [vmem:[#allocation8 + $0x240] sm:$0xff]
          %v1071 = vld [vmem:[#allocation8 + $0x248] sm:$0xff]
          %v1072 = vld [vmem:[#allocation8 + $0x250] sm:$0xff]
          %v1073 = vld [vmem:[#allocation8 + $0x258] sm:$0xff]
          %v1074 = vld [vmem:[#allocation8 + $0x260] sm:$0xff]
          %v1075 = vld [vmem:[#allocation8 + $0x268] sm:$0xff]
          %v1076 = vld [vmem:[#allocation8 + $0x270] sm:$0xff]
          %v1077 = vld [vmem:[#allocation8 + $0x278] sm:$0xff]
          %v1078 = vld [vmem:[#allocation8 + $0x280] sm:$0xff]
          %v1079 = vld [vmem:[#allocation8 + $0x288] sm:$0xff]
          %v1080 = vld [vmem:[#allocation8 + $0x290] sm:$0xff]
          %v1081 = vld [vmem:[#allocation8 + $0x298] sm:$0xff]
          %v1082 = vld [vmem:[#allocation8 + $0x2a0] sm:$0xff]
          %v1083 = vld [vmem:[#allocation8 + $0x2a8] sm:$0xff]
          %v1084 = vld [vmem:[#allocation8 + $0x2b0] sm:$0xff]
          %v1085 = vld [vmem:[#allocation8 + $0x2b8] sm:$0xff]
          %v1086 = vld [vmem:[#allocation8 + $0x2c0] sm:$0xff]
          %v1087 = vld [vmem:[#allocation8 + $0x2c8] sm:$0xff]
          %v1088 = vld [vmem:[#allocation8 + $0x2d0] sm:$0xff]
          %v1089 = vld [vmem:[#allocation8 + $0x2d8] sm:$0xff]
          %v1090 = vld [vmem:[#allocation8 + $0x2e0] sm:$0xff]
          %v1091 = vld [vmem:[#allocation8 + $0x2e8] sm:$0xff]
          %v1092 = vld [vmem:[#allocation8 + $0x2f0] sm:$0xff]
          %v1093 = vld [vmem:[#allocation8 + $0x2f8] sm:$0xff]
          %v1094 = vld [vmem:[#allocation8 + $0x300] sm:$0xff]
          %v1095 = vld [vmem:[#allocation8 + $0x308] sm:$0xff]
          %v1096 = vld [vmem:[#allocation8 + $0x310] sm:$0xff]
          %v1097 = vld [vmem:[#allocation8 + $0x318] sm:$0xff]
          %v1098 = vld [vmem:[#allocation8 + $0x320] sm:$0xff]
          %v1099 = vld [vmem:[#allocation8 + $0x328] sm:$0xff]
          %v1100 = vld [vmem:[#allocation8 + $0x330] sm:$0xff]
          %v1101 = vld [vmem:[#allocation8 + $0x338] sm:$0xff]
          %v1102 = vld [vmem:[#allocation8 + $0x340] sm:$0xff]
          %v1103 = vld [vmem:[#allocation8 + $0x348] sm:$0xff]
          %v1104 = vld [vmem:[#allocation8 + $0x350] sm:$0xff]
          %v1105 = vld [vmem:[#allocation8 + $0x358] sm:$0xff]
          %v1106 = vld [vmem:[#allocation8 + $0x360] sm:$0xff]
          %v1107 = vld [vmem:[#allocation8 + $0x368] sm:$0xff]
          %v1108 = vld [vmem:[#allocation8 + $0x370] sm:$0xff]
          %v1109 = vld [vmem:[#allocation8 + $0x378] sm:$0xff]
          %v1110 = vld [vmem:[#allocation8 + $0x380] sm:$0xff]
          %v1111 = vld [vmem:[#allocation8 + $0x388] sm:$0xff]
          %v1112 = vld [vmem:[#allocation8 + $0x390] sm:$0xff]
          %v1113 = vld [vmem:[#allocation8 + $0x398] sm:$0xff]
          %v1114 = vld [vmem:[#allocation8 + $0x3a0] sm:$0xff]
          %v1115 = vld [vmem:[#allocation8 + $0x3a8] sm:$0xff]
          %v1116 = vld [vmem:[#allocation8 + $0x3b0] sm:$0xff]
          %v1117 = vld [vmem:[#allocation8 + $0x3b8] sm:$0xff]
          %v1118 = vld [vmem:[#allocation8 + $0x3c0] sm:$0xff]
          %v1119 = vld [vmem:[#allocation8 + $0x3c8] sm:$0xff]
          %v1120 = vld [vmem:[#allocation8 + $0x3d0] sm:$0xff]
          %v1121 = vld [vmem:[#allocation8 + $0x3d8] sm:$0xff]
          %v1122 = vld [vmem:[#allocation8 + $0x3e0] sm:$0xff]
          %v1123 = vld [vmem:[#allocation8 + $0x3e8] sm:$0xff]
          %v1124 = vld [vmem:[#allocation8 + $0x3f0] sm:$0xff]
          %v1125 = vld [vmem:[#allocation8 + $0x3f8] sm:$0xff]
          %v1126 = vld [vmem:[#allocation9] sm:$0xf]
          %v1128 = vlaneseq
          %v1129 = vshrl.u32 %v1128, 7
          %v1130 = vsub.s32 0, %v1129
          %v1131 = vrot.slane %v1126, %v1130
          %v1132 = vlaneseq
          %v1133 = vshrl.u32 %v1132, 7
          %v1134 = vsub.s32 1, %v1133
          %v1135 = vrot.slane %v1126, %v1134
          %v1136 = vlaneseq
          %v1137 = vshrl.u32 %v1136, 7
          %v1138 = vsub.s32 2, %v1137
          %v1139 = vrot.slane %v1126, %v1138
          %v1140 = vlaneseq
          %v1141 = vshrl.u32 %v1140, 7
          %v1142 = vsub.s32 3, %v1141
          %v1143 = vrot.slane %v1126, %v1142
          %v1276 = vunpack.c.l.b16 %v998
          %v1277 = vunpack.c.h.b16 %v998
          %v1278 = vunpack.c.l.b16 %v999
          %v1279 = vunpack.c.h.b16 %v999
          %v1280 = vunpack.c.l.b16 %v1000
          %v1281 = vunpack.c.h.b16 %v1000
          %v1282 = vunpack.c.l.b16 %v1001
          %v1283 = vunpack.c.h.b16 %v1001
          %v1284 = vunpack.c.l.b16 %v1002
          %v1285 = vunpack.c.h.b16 %v1002
          %v1286 = vunpack.c.l.b16 %v1003
          %v1287 = vunpack.c.h.b16 %v1003
          %v1288 = vunpack.c.l.b16 %v1004
          %v1289 = vunpack.c.h.b16 %v1004
          %v1290 = vunpack.c.l.b16 %v1005
          %v1291 = vunpack.c.h.b16 %v1005
          %v1292 = vunpack.c.l.b16 %v1006
          %v1293 = vunpack.c.h.b16 %v1006
          %v1294 = vunpack.c.l.b16 %v1007
          %v1295 = vunpack.c.h.b16 %v1007
          %v1296 = vunpack.c.l.b16 %v1008
          %v1297 = vunpack.c.h.b16 %v1008
          %v1298 = vunpack.c.l.b16 %v1009
          %v1299 = vunpack.c.h.b16 %v1009
          %v1300 = vunpack.c.l.b16 %v1010
          %v1301 = vunpack.c.h.b16 %v1010
          %v1302 = vunpack.c.l.b16 %v1011
          %v1303 = vunpack.c.h.b16 %v1011
          %v1304 = vunpack.c.l.b16 %v1012
          %v1305 = vunpack.c.h.b16 %v1012
          %v1306 = vunpack.c.l.b16 %v1013
          %v1307 = vunpack.c.h.b16 %v1013
          %v1308 = vunpack.c.l.b16 %v1014
          %v1309 = vunpack.c.h.b16 %v1014
          %v1310 = vunpack.c.l.b16 %v1015
          %v1311 = vunpack.c.h.b16 %v1015
          %v1312 = vunpack.c.l.b16 %v1016
          %v1313 = vunpack.c.h.b16 %v1016
          %v1314 = vunpack.c.l.b16 %v1017
          %v1315 = vunpack.c.h.b16 %v1017
          %v1316 = vunpack.c.l.b16 %v1018
          %v1317 = vunpack.c.h.b16 %v1018
          %v1318 = vunpack.c.l.b16 %v1019
          %v1319 = vunpack.c.h.b16 %v1019
          %v1320 = vunpack.c.l.b16 %v1020
          %v1321 = vunpack.c.h.b16 %v1020
          %v1322 = vunpack.c.l.b16 %v1021
          %v1323 = vunpack.c.h.b16 %v1021
          %v1324 = vunpack.c.l.b16 %v1022
          %v1325 = vunpack.c.h.b16 %v1022
          %v1326 = vunpack.c.l.b16 %v1023
          %v1327 = vunpack.c.h.b16 %v1023
          %v1328 = vunpack.c.l.b16 %v1024
          %v1329 = vunpack.c.h.b16 %v1024
          %v1330 = vunpack.c.l.b16 %v1025
          %v1331 = vunpack.c.h.b16 %v1025
          %v1332 = vunpack.c.l.b16 %v1026
          %v1333 = vunpack.c.h.b16 %v1026
          %v1334 = vunpack.c.l.b16 %v1027
          %v1335 = vunpack.c.h.b16 %v1027
          %v1336 = vunpack.c.l.b16 %v1028
          %v1337 = vunpack.c.h.b16 %v1028
          %v1338 = vunpack.c.l.b16 %v1029
          %v1339 = vunpack.c.h.b16 %v1029
          %v1340 = vunpack.c.l.b16 %v1030
          %v1341 = vunpack.c.h.b16 %v1030
          %v1342 = vunpack.c.l.b16 %v1031
          %v1343 = vunpack.c.h.b16 %v1031
          %v1344 = vunpack.c.l.b16 %v1032
          %v1345 = vunpack.c.h.b16 %v1032
          %v1346 = vunpack.c.l.b16 %v1033
          %v1347 = vunpack.c.h.b16 %v1033
          %v1348 = vunpack.c.l.b16 %v1034
          %v1349 = vunpack.c.h.b16 %v1034
          %v1350 = vunpack.c.l.b16 %v1035
          %v1351 = vunpack.c.h.b16 %v1035
          %v1352 = vunpack.c.l.b16 %v1036
          %v1353 = vunpack.c.h.b16 %v1036
          %v1354 = vunpack.c.l.b16 %v1037
          %v1355 = vunpack.c.h.b16 %v1037
          %v1356 = vunpack.c.l.b16 %v1038
          %v1357 = vunpack.c.h.b16 %v1038
          %v1358 = vunpack.c.l.b16 %v1039
          %v1359 = vunpack.c.h.b16 %v1039
          %v1360 = vunpack.c.l.b16 %v1040
          %v1361 = vunpack.c.h.b16 %v1040
          %v1362 = vunpack.c.l.b16 %v1041
          %v1363 = vunpack.c.h.b16 %v1041
          %v1364 = vunpack.c.l.b16 %v1042
          %v1365 = vunpack.c.h.b16 %v1042
          %v1366 = vunpack.c.l.b16 %v1043
          %v1367 = vunpack.c.h.b16 %v1043
          %v1368 = vunpack.c.l.b16 %v1044
          %v1369 = vunpack.c.h.b16 %v1044
          %v1370 = vunpack.c.l.b16 %v1045
          %v1371 = vunpack.c.h.b16 %v1045
          %v1372 = vunpack.c.l.b16 %v1046
          %v1373 = vunpack.c.h.b16 %v1046
          %v1374 = vunpack.c.l.b16 %v1047
          %v1375 = vunpack.c.h.b16 %v1047
          %v1376 = vunpack.c.l.b16 %v1048
          %v1377 = vunpack.c.h.b16 %v1048
          %v1378 = vunpack.c.l.b16 %v1049
          %v1379 = vunpack.c.h.b16 %v1049
          %v1380 = vunpack.c.l.b16 %v1050
          %v1381 = vunpack.c.h.b16 %v1050
          %v1382 = vunpack.c.l.b16 %v1051
          %v1383 = vunpack.c.h.b16 %v1051
          %v1384 = vunpack.c.l.b16 %v1052
          %v1385 = vunpack.c.h.b16 %v1052
          %v1386 = vunpack.c.l.b16 %v1053
          %v1387 = vunpack.c.h.b16 %v1053
          %v1388 = vunpack.c.l.b16 %v1054
          %v1389 = vunpack.c.h.b16 %v1054
          %v1390 = vunpack.c.l.b16 %v1055
          %v1391 = vunpack.c.h.b16 %v1055
          %v1392 = vunpack.c.l.b16 %v1056
          %v1393 = vunpack.c.h.b16 %v1056
          %v1394 = vunpack.c.l.b16 %v1057
          %v1395 = vunpack.c.h.b16 %v1057
          %v1396 = vunpack.c.l.b16 %v1058
          %v1397 = vunpack.c.h.b16 %v1058
          %v1398 = vunpack.c.l.b16 %v1059
          %v1399 = vunpack.c.h.b16 %v1059
          %v1400 = vunpack.c.l.b16 %v1060
          %v1401 = vunpack.c.h.b16 %v1060
          %v1402 = vunpack.c.l.b16 %v1061
          %v1403 = vunpack.c.h.b16 %v1061
          %v1404 = vunpack.c.l.b16 %v1062
          %v1405 = vunpack.c.h.b16 %v1062
          %v1406 = vunpack.c.l.b16 %v1063
          %v1407 = vunpack.c.h.b16 %v1063
          %v1408 = vunpack.c.l.b16 %v1064
          %v1409 = vunpack.c.h.b16 %v1064
          %v1410 = vunpack.c.l.b16 %v1065
          %v1411 = vunpack.c.h.b16 %v1065
          %v1412 = vunpack.c.l.b16 %v1066
          %v1413 = vunpack.c.h.b16 %v1066
          %v1414 = vunpack.c.l.b16 %v1067
          %v1415 = vunpack.c.h.b16 %v1067
          %v1416 = vunpack.c.l.b16 %v1068
          %v1417 = vunpack.c.h.b16 %v1068
          %v1418 = vunpack.c.l.b16 %v1069
          %v1419 = vunpack.c.h.b16 %v1069
          %v1420 = vunpack.c.l.b16 %v1070
          %v1421 = vunpack.c.h.b16 %v1070
          %v1422 = vunpack.c.l.b16 %v1071
          %v1423 = vunpack.c.h.b16 %v1071
          %v1424 = vunpack.c.l.b16 %v1072
          %v1425 = vunpack.c.h.b16 %v1072
          %v1426 = vunpack.c.l.b16 %v1073
          %v1427 = vunpack.c.h.b16 %v1073
          %v1428 = vunpack.c.l.b16 %v1074
          %v1429 = vunpack.c.h.b16 %v1074
          %v1430 = vunpack.c.l.b16 %v1075
          %v1431 = vunpack.c.h.b16 %v1075
          %v1432 = vunpack.c.l.b16 %v1076
          %v1433 = vunpack.c.h.b16 %v1076
          %v1434 = vunpack.c.l.b16 %v1077
          %v1435 = vunpack.c.h.b16 %v1077
          %v1436 = vunpack.c.l.b16 %v1078
          %v1437 = vunpack.c.h.b16 %v1078
          %v1438 = vunpack.c.l.b16 %v1079
          %v1439 = vunpack.c.h.b16 %v1079
          %v1440 = vunpack.c.l.b16 %v1080
          %v1441 = vunpack.c.h.b16 %v1080
          %v1442 = vunpack.c.l.b16 %v1081
          %v1443 = vunpack.c.h.b16 %v1081
          %v1444 = vunpack.c.l.b16 %v1082
          %v1445 = vunpack.c.h.b16 %v1082
          %v1446 = vunpack.c.l.b16 %v1083
          %v1447 = vunpack.c.h.b16 %v1083
          %v1448 = vunpack.c.l.b16 %v1084
          %v1449 = vunpack.c.h.b16 %v1084
          %v1450 = vunpack.c.l.b16 %v1085
          %v1451 = vunpack.c.h.b16 %v1085
          %v1452 = vunpack.c.l.b16 %v1086
          %v1453 = vunpack.c.h.b16 %v1086
          %v1454 = vunpack.c.l.b16 %v1087
          %v1455 = vunpack.c.h.b16 %v1087
          %v1456 = vunpack.c.l.b16 %v1088
          %v1457 = vunpack.c.h.b16 %v1088
          %v1458 = vunpack.c.l.b16 %v1089
          %v1459 = vunpack.c.h.b16 %v1089
          %v1460 = vunpack.c.l.b16 %v1090
          %v1461 = vunpack.c.h.b16 %v1090
          %v1462 = vunpack.c.l.b16 %v1091
          %v1463 = vunpack.c.h.b16 %v1091
          %v1464 = vunpack.c.l.b16 %v1092
          %v1465 = vunpack.c.h.b16 %v1092
          %v1466 = vunpack.c.l.b16 %v1093
          %v1467 = vunpack.c.h.b16 %v1093
          %v1468 = vunpack.c.l.b16 %v1094
          %v1469 = vunpack.c.h.b16 %v1094
          %v1470 = vunpack.c.l.b16 %v1095
          %v1471 = vunpack.c.h.b16 %v1095
          %v1472 = vunpack.c.l.b16 %v1096
          %v1473 = vunpack.c.h.b16 %v1096
          %v1474 = vunpack.c.l.b16 %v1097
          %v1475 = vunpack.c.h.b16 %v1097
          %v1476 = vunpack.c.l.b16 %v1098
          %v1477 = vunpack.c.h.b16 %v1098
          %v1478 = vunpack.c.l.b16 %v1099
          %v1479 = vunpack.c.h.b16 %v1099
          %v1480 = vunpack.c.l.b16 %v1100
          %v1481 = vunpack.c.h.b16 %v1100
          %v1482 = vunpack.c.l.b16 %v1101
          %v1483 = vunpack.c.h.b16 %v1101
          %v1484 = vunpack.c.l.b16 %v1102
          %v1485 = vunpack.c.h.b16 %v1102
          %v1486 = vunpack.c.l.b16 %v1103
          %v1487 = vunpack.c.h.b16 %v1103
          %v1488 = vunpack.c.l.b16 %v1104
          %v1489 = vunpack.c.h.b16 %v1104
          %v1490 = vunpack.c.l.b16 %v1105
          %v1491 = vunpack.c.h.b16 %v1105
          %v1492 = vunpack.c.l.b16 %v1106
          %v1493 = vunpack.c.h.b16 %v1106
          %v1494 = vunpack.c.l.b16 %v1107
          %v1495 = vunpack.c.h.b16 %v1107
          %v1496 = vunpack.c.l.b16 %v1108
          %v1497 = vunpack.c.h.b16 %v1108
          %v1498 = vunpack.c.l.b16 %v1109
          %v1499 = vunpack.c.h.b16 %v1109
          %v1500 = vunpack.c.l.b16 %v1110
          %v1501 = vunpack.c.h.b16 %v1110
          %v1502 = vunpack.c.l.b16 %v1111
          %v1503 = vunpack.c.h.b16 %v1111
          %v1504 = vunpack.c.l.b16 %v1112
          %v1505 = vunpack.c.h.b16 %v1112
          %v1506 = vunpack.c.l.b16 %v1113
          %v1507 = vunpack.c.h.b16 %v1113
          %v1508 = vunpack.c.l.b16 %v1114
          %v1509 = vunpack.c.h.b16 %v1114
          %v1510 = vunpack.c.l.b16 %v1115
          %v1511 = vunpack.c.h.b16 %v1115
          %v1512 = vunpack.c.l.b16 %v1116
          %v1513 = vunpack.c.h.b16 %v1116
          %v1514 = vunpack.c.l.b16 %v1117
          %v1515 = vunpack.c.h.b16 %v1117
          %v1516 = vunpack.c.l.b16 %v1118
          %v1517 = vunpack.c.h.b16 %v1118
          %v1518 = vunpack.c.l.b16 %v1119
          %v1519 = vunpack.c.h.b16 %v1119
          %v1520 = vunpack.c.l.b16 %v1120
          %v1521 = vunpack.c.h.b16 %v1120
          %v1522 = vunpack.c.l.b16 %v1121
          %v1523 = vunpack.c.h.b16 %v1121
          %v1524 = vunpack.c.l.b16 %v1122
          %v1525 = vunpack.c.h.b16 %v1122
          %v1526 = vunpack.c.l.b16 %v1123
          %v1527 = vunpack.c.h.b16 %v1123
          %v1528 = vunpack.c.l.b16 %v1124
          %v1529 = vunpack.c.h.b16 %v1124
          %v1530 = vunpack.c.l.b16 %v1125
          %v1531 = vunpack.c.h.b16 %v1125
          %v1532 = vpack.c.b16 %v1280, %v1276
          %v1533 = vpack.c.b16 %v1281, %v1277
          %v1534 = vpack.c.b16 %v1282, %v1278
          %v1535 = vpack.c.b16 %v1283, %v1279
          %v1536 = vpack.c.b16 %v1288, %v1284
          %v1537 = vpack.c.b16 %v1289, %v1285
          %v1538 = vpack.c.b16 %v1290, %v1286
          %v1539 = vpack.c.b16 %v1291, %v1287
          %v1540 = vpack.c.b16 %v1296, %v1292
          %v1541 = vpack.c.b16 %v1297, %v1293
          %v1542 = vpack.c.b16 %v1298, %v1294
          %v1543 = vpack.c.b16 %v1299, %v1295
          %v1544 = vpack.c.b16 %v1304, %v1300
          %v1545 = vpack.c.b16 %v1305, %v1301
          %v1546 = vpack.c.b16 %v1306, %v1302
          %v1547 = vpack.c.b16 %v1307, %v1303
          %v1548 = vpack.c.b16 %v1312, %v1308
          %v1549 = vpack.c.b16 %v1313, %v1309
          %v1550 = vpack.c.b16 %v1314, %v1310
          %v1551 = vpack.c.b16 %v1315, %v1311
          %v1552 = vpack.c.b16 %v1320, %v1316
          %v1553 = vpack.c.b16 %v1321, %v1317
          %v1554 = vpack.c.b16 %v1322, %v1318
          %v1555 = vpack.c.b16 %v1323, %v1319
          %v1556 = vpack.c.b16 %v1328, %v1324
          %v1557 = vpack.c.b16 %v1329, %v1325
          %v1558 = vpack.c.b16 %v1330, %v1326
          %v1559 = vpack.c.b16 %v1331, %v1327
          %v1560 = vpack.c.b16 %v1336, %v1332
          %v1561 = vpack.c.b16 %v1337, %v1333
          %v1562 = vpack.c.b16 %v1338, %v1334
          %v1563 = vpack.c.b16 %v1339, %v1335
          %v1564 = vpack.c.b16 %v1344, %v1340
          %v1565 = vpack.c.b16 %v1345, %v1341
          %v1566 = vpack.c.b16 %v1346, %v1342
          %v1567 = vpack.c.b16 %v1347, %v1343
          %v1568 = vpack.c.b16 %v1352, %v1348
          %v1569 = vpack.c.b16 %v1353, %v1349
          %v1570 = vpack.c.b16 %v1354, %v1350
          %v1571 = vpack.c.b16 %v1355, %v1351
          %v1572 = vpack.c.b16 %v1360, %v1356
          %v1573 = vpack.c.b16 %v1361, %v1357
          %v1574 = vpack.c.b16 %v1362, %v1358
          %v1575 = vpack.c.b16 %v1363, %v1359
          %v1576 = vpack.c.b16 %v1368, %v1364
          %v1577 = vpack.c.b16 %v1369, %v1365
          %v1578 = vpack.c.b16 %v1370, %v1366
          %v1579 = vpack.c.b16 %v1371, %v1367
          %v1580 = vpack.c.b16 %v1376, %v1372
          %v1581 = vpack.c.b16 %v1377, %v1373
          %v1582 = vpack.c.b16 %v1378, %v1374
          %v1583 = vpack.c.b16 %v1379, %v1375
          %v1584 = vpack.c.b16 %v1384, %v1380
          %v1585 = vpack.c.b16 %v1385, %v1381
          %v1586 = vpack.c.b16 %v1386, %v1382
          %v1587 = vpack.c.b16 %v1387, %v1383
          %v1588 = vpack.c.b16 %v1392, %v1388
          %v1589 = vpack.c.b16 %v1393, %v1389
          %v1590 = vpack.c.b16 %v1394, %v1390
          %v1591 = vpack.c.b16 %v1395, %v1391
          %v1592 = vpack.c.b16 %v1400, %v1396
          %v1593 = vpack.c.b16 %v1401, %v1397
          %v1594 = vpack.c.b16 %v1402, %v1398
          %v1595 = vpack.c.b16 %v1403, %v1399
          %v1596 = vpack.c.b16 %v1408, %v1404
          %v1597 = vpack.c.b16 %v1409, %v1405
          %v1598 = vpack.c.b16 %v1410, %v1406
          %v1599 = vpack.c.b16 %v1411, %v1407
          %v1600 = vpack.c.b16 %v1416, %v1412
          %v1601 = vpack.c.b16 %v1417, %v1413
          %v1602 = vpack.c.b16 %v1418, %v1414
          %v1603 = vpack.c.b16 %v1419, %v1415
          %v1604 = vpack.c.b16 %v1424, %v1420
          %v1605 = vpack.c.b16 %v1425, %v1421
          %v1606 = vpack.c.b16 %v1426, %v1422
          %v1607 = vpack.c.b16 %v1427, %v1423
          %v1608 = vpack.c.b16 %v1432, %v1428
          %v1609 = vpack.c.b16 %v1433, %v1429
          %v1610 = vpack.c.b16 %v1434, %v1430
          %v1611 = vpack.c.b16 %v1435, %v1431
          %v1612 = vpack.c.b16 %v1440, %v1436
          %v1613 = vpack.c.b16 %v1441, %v1437
          %v1614 = vpack.c.b16 %v1442, %v1438
          %v1615 = vpack.c.b16 %v1443, %v1439
          %v1616 = vpack.c.b16 %v1448, %v1444
          %v1617 = vpack.c.b16 %v1449, %v1445
          %v1618 = vpack.c.b16 %v1450, %v1446
          %v1619 = vpack.c.b16 %v1451, %v1447
          %v1620 = vpack.c.b16 %v1456, %v1452
          %v1621 = vpack.c.b16 %v1457, %v1453
          %v1622 = vpack.c.b16 %v1458, %v1454
          %v1623 = vpack.c.b16 %v1459, %v1455
          %v1624 = vpack.c.b16 %v1464, %v1460
          %v1625 = vpack.c.b16 %v1465, %v1461
          %v1626 = vpack.c.b16 %v1466, %v1462
          %v1627 = vpack.c.b16 %v1467, %v1463
          %v1628 = vpack.c.b16 %v1472, %v1468
          %v1629 = vpack.c.b16 %v1473, %v1469
          %v1630 = vpack.c.b16 %v1474, %v1470
          %v1631 = vpack.c.b16 %v1475, %v1471
          %v1632 = vpack.c.b16 %v1480, %v1476
          %v1633 = vpack.c.b16 %v1481, %v1477
          %v1634 = vpack.c.b16 %v1482, %v1478
          %v1635 = vpack.c.b16 %v1483, %v1479
          %v1636 = vpack.c.b16 %v1488, %v1484
          %v1637 = vpack.c.b16 %v1489, %v1485
          %v1638 = vpack.c.b16 %v1490, %v1486
          %v1639 = vpack.c.b16 %v1491, %v1487
          %v1640 = vpack.c.b16 %v1496, %v1492
          %v1641 = vpack.c.b16 %v1497, %v1493
          %v1642 = vpack.c.b16 %v1498, %v1494
          %v1643 = vpack.c.b16 %v1499, %v1495
          %v1644 = vpack.c.b16 %v1504, %v1500
          %v1645 = vpack.c.b16 %v1505, %v1501
          %v1646 = vpack.c.b16 %v1506, %v1502
          %v1647 = vpack.c.b16 %v1507, %v1503
          %v1648 = vpack.c.b16 %v1512, %v1508
          %v1649 = vpack.c.b16 %v1513, %v1509
          %v1650 = vpack.c.b16 %v1514, %v1510
          %v1651 = vpack.c.b16 %v1515, %v1511
          %v1652 = vpack.c.b16 %v1520, %v1516
          %v1653 = vpack.c.b16 %v1521, %v1517
          %v1654 = vpack.c.b16 %v1522, %v1518
          %v1655 = vpack.c.b16 %v1523, %v1519
          %v1656 = vpack.c.b16 %v1528, %v1524
          %v1657 = vpack.c.b16 %v1529, %v1525
          %v1658 = vpack.c.b16 %v1530, %v1526
          %v1659 = vpack.c.b16 %v1531, %v1527
          %1788 = vmatprep.subr.bf16.mxu0 %v1533
          %1789 = vmatpush1.bf16.msra.mxu0 %v1532
          %1790 = vmatprep.subr.bf16.mxu0 %v1537
          %1791 = vmatpush1.bf16.msra.mxu0 %v1536
          %1792 = vmatprep.subr.bf16.mxu0 %v1541
          %1793 = vmatpush1.bf16.msra.mxu0 %v1540
          %1794 = vmatprep.subr.bf16.mxu0 %v1545
          %1795 = vmatpush1.bf16.msra.mxu0 %v1544
          %1796 = vmatprep.subr.bf16.mxu0 %v1549
          %1797 = vmatpush1.bf16.msra.mxu0 %v1548
          %1798 = vmatprep.subr.bf16.mxu0 %v1553
          %1799 = vmatpush1.bf16.msra.mxu0 %v1552
          %1800 = vmatprep.subr.bf16.mxu0 %v1557
          %1801 = vmatpush1.bf16.msra.mxu0 %v1556
          %1802 = vmatprep.subr.bf16.mxu0 %v1561
          %1803 = vmatpush1.bf16.msra.mxu0 %v1560
          %1804 = vmatprep.subr.bf16.mxu0 %v1565
          %1805 = vmatpush1.bf16.msra.mxu0 %v1564
          %1806 = vmatprep.subr.bf16.mxu0 %v1569
          %1807 = vmatpush1.bf16.msra.mxu0 %v1568
          %1808 = vmatprep.subr.bf16.mxu0 %v1573
          %1809 = vmatpush1.bf16.msra.mxu0 %v1572
          %1810 = vmatprep.subr.bf16.mxu0 %v1577
          %1811 = vmatpush1.bf16.msra.mxu0 %v1576
          %1812 = vmatprep.subr.bf16.mxu0 %v1581
          %1813 = vmatpush1.bf16.msra.mxu0 %v1580
          %1814 = vmatprep.subr.bf16.mxu0 %v1585
          %1815 = vmatpush1.bf16.msra.mxu0 %v1584
          %1816 = vmatprep.subr.bf16.mxu0 %v1589
          %1817 = vmatpush1.bf16.msra.mxu0 %v1588
          %1818 = vmatprep.subr.bf16.mxu0 %v1593
          %1819 = vmatpush1.bf16.msra.mxu0 %v1592
          %1820 = vmatprep.mubr.bf16.mxu0 %v967
          %1821 = vmatmul.mubr.bf16.gmra.mrb[0].mxu0 %v966
          %v1822 = vpop.f32.mrb[0].mxu0
          %v1823 = vadd.f32 %v1131, %v1822
          %v1824 = vpop.f32.mrb[0].mxu0
          %v1825 = vadd.f32 %v1135, %v1824
          %v1826 = vpop.f32.mrb[0].mxu0
          %v1827 = vadd.f32 %v1131, %v1826
          %v1828 = vpop.f32.mrb[0].mxu0
          %v1829 = vadd.f32 %v1135, %v1828
          %1830 = vmatprep.mubr.bf16.mxu0 %v971
          %1831 = vmatmul.mubr.bf16.gmra.mrb[0].mxu0 %v970
          %v1832 = vpop.f32.mrb[0].mxu0
          %v1833 = vadd.f32 %v1131, %v1832
          %v1834 = vpop.f32.mrb[0].mxu0
          %v1835 = vadd.f32 %v1135, %v1834
          %v1836 = vpop.f32.mrb[0].mxu0
          %v1837 = vadd.f32 %v1131, %v1836
          %v1838 = vpop.f32.mrb[0].mxu0
          %v1839 = vadd.f32 %v1135, %v1838
          %1840 = vmatprep.mubr.bf16.mxu0 %v975
          %1841 = vmatmul.mubr.bf16.gmra.mrb[0].mxu0 %v974
          %v1842 = vpop.f32.mrb[0].mxu0
          %v1843 = vadd.f32 %v1131, %v1842
          %v1844 = vpop.f32.mrb[0].mxu0
          %v1845 = vadd.f32 %v1135, %v1844
          %v1846 = vpop.f32.mrb[0].mxu0
          %v1847 = vadd.f32 %v1131, %v1846
          %v1848 = vpop.f32.mrb[0].mxu0
          %v1849 = vadd.f32 %v1135, %v1848
          %1850 = vmatprep.mubr.bf16.mxu0 %v979
          %1851 = vmatmul.mubr.bf16.gmra.mrb[0].mxu0 %v978
          %v1852 = vpop.f32.mrb[0].mxu0
          %v1853 = vadd.f32 %v1131, %v1852
          %v1854 = vpop.f32.mrb[0].mxu0
          %v1855 = vadd.f32 %v1135, %v1854
          %v1856 = vpop.f32.mrb[0].mxu0
          %v1857 = vadd.f32 %v1131, %v1856
          %v1858 = vpop.f32.mrb[0].mxu0
          %v1859 = vadd.f32 %v1135, %v1858
          %1860 = vmatprep.mubr.bf16.mxu0 %v983
          %1861 = vmatmul.mubr.bf16.gmra.mrb[0].mxu0 %v982
          %v1862 = vpop.f32.mrb[0].mxu0
          %v1863 = vadd.f32 %v1131, %v1862
          %v1864 = vpop.f32.mrb[0].mxu0
          %v1865 = vadd.f32 %v1135, %v1864
          %v1866 = vpop.f32.mrb[0].mxu0
          %v1867 = vadd.f32 %v1131, %v1866
          %v1868 = vpop.f32.mrb[0].mxu0
          %v1869 = vadd.f32 %v1135, %v1868
          %1870 = vmatprep.mubr.bf16.mxu0 %v987
          %1871 = vmatmul.mubr.bf16.gmra.mrb[0].mxu0 %v986
          %v1872 = vpop.f32.mrb[0].mxu0
          %v1873 = vadd.f32 %v1131, %v1872
          %v1874 = vpop.f32.mrb[0].mxu0
          %v1875 = vadd.f32 %v1135, %v1874
          %v1876 = vpop.f32.mrb[0].mxu0
          %v1877 = vadd.f32 %v1131, %v1876
          %v1878 = vpop.f32.mrb[0].mxu0
          %v1879 = vadd.f32 %v1135, %v1878
          %1880 = vmatprep.mubr.bf16.mxu0 %v991
          %1881 = vmatmul.mubr.bf16.gmra.mrb[0].mxu0 %v990
          %v1882 = vpop.f32.mrb[0].mxu0
          %v1883 = vadd.f32 %v1131, %v1882
          %v1884 = vpop.f32.mrb[0].mxu0
          %v1885 = vadd.f32 %v1135, %v1884
          %v1886 = vpop.f32.mrb[0].mxu0
          %v1887 = vadd.f32 %v1131, %v1886
          %v1888 = vpop.f32.mrb[0].mxu0
          %v1889 = vadd.f32 %v1135, %v1888
          %1890 = vmatprep.mubr.bf16.mxu0 %v995
          %1891 = vmatmul.mubr.bf16.gmra.mrb[0].mxu0 %v994
          %v1892 = vpop.f32.mrb[0].mxu0
          %v1893 = vadd.f32 %v1131, %v1892
          %v1894 = vpop.f32.mrb[0].mxu0
          %v1895 = vadd.f32 %v1135, %v1894
          %v1896 = vpop.f32.mrb[0].mxu0
          %v1897 = vadd.f32 %v1131, %v1896
          %v1898 = vpop.f32.mrb[0].mxu0
          %v1899 = vadd.f32 %v1135, %v1898
          %1900 = vdwg.mxu0
          %1901 = vmatprep.subr.bf16.mxu0 %v1597
          %1902 = vmatpush1.bf16.msra.mxu0 %v1596
          %1903 = vmatprep.subr.bf16.mxu0 %v1601
          %1904 = vmatpush1.bf16.msra.mxu0 %v1600
          %1905 = vmatprep.subr.bf16.mxu0 %v1605
          %1906 = vmatpush1.bf16.msra.mxu0 %v1604
          %1907 = vmatprep.subr.bf16.mxu0 %v1609
          %1908 = vmatpush1.bf16.msra.mxu0 %v1608
          %1909 = vmatprep.subr.bf16.mxu0 %v1613
          %1910 = vmatpush1.bf16.msra.mxu0 %v1612
          %1911 = vmatprep.subr.bf16.mxu0 %v1617
          %1912 = vmatpush1.bf16.msra.mxu0 %v1616
          %1913 = vmatprep.subr.bf16.mxu0 %v1621
          %1914 = vmatpush1.bf16.msra.mxu0 %v1620
          %1915 = vmatprep.subr.bf16.mxu0 %v1625
          %1916 = vmatpush1.bf16.msra.mxu0 %v1624
          %1917 = vmatprep.subr.bf16.mxu0 %v1629
          %1918 = vmatpush1.bf16.msra.mxu0 %v1628
          %1919 = vmatprep.subr.bf16.mxu0 %v1633
          %1920 = vmatpush1.bf16.msra.mxu0 %v1632
          %1921 = vmatprep.subr.bf16.mxu0 %v1637
          %1922 = vmatpush1.bf16.msra.mxu0 %v1636
          %1923 = vmatprep.subr.bf16.mxu0 %v1641
          %1924 = vmatpush1.bf16.msra.mxu0 %v1640
          %1925 = vmatprep.subr.bf16.mxu0 %v1645
          %1926 = vmatpush1.bf16.msra.mxu0 %v1644
          %1927 = vmatprep.subr.bf16.mxu0 %v1649
          %1928 = vmatpush1.bf16.msra.mxu0 %v1648
          %1929 = vmatprep.subr.bf16.mxu0 %v1653
          %1930 = vmatpush1.bf16.msra.mxu0 %v1652
          %1931 = vmatprep.subr.bf16.mxu0 %v1657
          %1932 = vmatpush1.bf16.msra.mxu0 %v1656
          %1933 = vmatprep.mubr.bf16.mxu0 %v969
          %1934 = vmatmul.mubr.bf16.gmra.mrb[0].mxu0 %v968
          %v1935 = vpop.f32.mrb[0].mxu0
          %v1936 = vadd.f32 %v1823, %v1935
          %v1937 = vpop.f32.mrb[0].mxu0
          %v1938 = vadd.f32 %v1825, %v1937
          %v1939 = vpop.f32.mrb[0].mxu0
          %v1940 = vadd.f32 %v1827, %v1939
          %v1941 = vpop.f32.mrb[0].mxu0
          %v1942 = vadd.f32 %v1829, %v1941
          %1943 = vmatprep.mubr.bf16.mxu0 %v973
          %1944 = vmatmul.mubr.bf16.gmra.mrb[0].mxu0 %v972
          %v1945 = vpop.f32.mrb[0].mxu0
          %v1946 = vadd.f32 %v1833, %v1945
          %v1947 = vpop.f32.mrb[0].mxu0
          %v1948 = vadd.f32 %v1835, %v1947
          %v1949 = vpop.f32.mrb[0].mxu0
          %v1950 = vadd.f32 %v1837, %v1949
          %v1951 = vpop.f32.mrb[0].mxu0
          %v1952 = vadd.f32 %v1839, %v1951
          %1953 = vmatprep.mubr.bf16.mxu0 %v977
          %1954 = vmatmul.mubr.bf16.gmra.mrb[0].mxu0 %v976
          %v1955 = vpop.f32.mrb[0].mxu0
          %v1956 = vadd.f32 %v1843, %v1955
          %v1957 = vpop.f32.mrb[0].mxu0
          %v1958 = vadd.f32 %v1845, %v1957
          %v1959 = vpop.f32.mrb[0].mxu0
          %v1960 = vadd.f32 %v1847, %v1959
          %v1961 = vpop.f32.mrb[0].mxu0
          %v1962 = vadd.f32 %v1849, %v1961
          %1963 = vmatprep.mubr.bf16.mxu0 %v981
          %1964 = vmatmul.mubr.bf16.gmra.mrb[0].mxu0 %v980
          %v1965 = vpop.f32.mrb[0].mxu0
          %v1966 = vadd.f32 %v1853, %v1965
          %v1967 = vpop.f32.mrb[0].mxu0
          %v1968 = vadd.f32 %v1855, %v1967
          %v1969 = vpop.f32.mrb[0].mxu0
          %v1970 = vadd.f32 %v1857, %v1969
          %v1971 = vpop.f32.mrb[0].mxu0
          %v1972 = vadd.f32 %v1859, %v1971
          %1973 = vmatprep.mubr.bf16.mxu0 %v985
          %1974 = vmatmul.mubr.bf16.gmra.mrb[0].mxu0 %v984
          %v1975 = vpop.f32.mrb[0].mxu0
          %v1976 = vadd.f32 %v1863, %v1975
          %v1977 = vpop.f32.mrb[0].mxu0
          %v1978 = vadd.f32 %v1865, %v1977
          %v1979 = vpop.f32.mrb[0].mxu0
          %v1980 = vadd.f32 %v1867, %v1979
          %v1981 = vpop.f32.mrb[0].mxu0
          %v1982 = vadd.f32 %v1869, %v1981
          %1983 = vmatprep.mubr.bf16.mxu0 %v989
          %1984 = vmatmul.mubr.bf16.gmra.mrb[0].mxu0 %v988
          %v1985 = vpop.f32.mrb[0].mxu0
          %v1986 = vadd.f32 %v1873, %v1985
          %v1987 = vpop.f32.mrb[0].mxu0
          %v1988 = vadd.f32 %v1875, %v1987
          %v1989 = vpop.f32.mrb[0].mxu0
          %v1990 = vadd.f32 %v1877, %v1989
          %v1991 = vpop.f32.mrb[0].mxu0
          %v1992 = vadd.f32 %v1879, %v1991
          %1993 = vmatprep.mubr.bf16.mxu0 %v993
          %1994 = vmatmul.mubr.bf16.gmra.mrb[0].mxu0 %v992
          %v1995 = vpop.f32.mrb[0].mxu0
          %v1996 = vadd.f32 %v1883, %v1995
          %v1997 = vpop.f32.mrb[0].mxu0
          %v1998 = vadd.f32 %v1885, %v1997
          %v1999 = vpop.f32.mrb[0].mxu0
          %v2000 = vadd.f32 %v1887, %v1999
          %v2001 = vpop.f32.mrb[0].mxu0
          %v2002 = vadd.f32 %v1889, %v2001
          %2003 = vmatprep.mubr.bf16.mxu0 %v997
          %2004 = vmatmul.mubr.bf16.gmra.mrb[0].mxu0 %v996
          %v2005 = vpop.f32.mrb[0].mxu0
          %v2006 = vadd.f32 %v1893, %v2005
          %v2007 = vpop.f32.mrb[0].mxu0
          %v2008 = vadd.f32 %v1895, %v2007
          %v2009 = vpop.f32.mrb[0].mxu0
          %v2010 = vadd.f32 %v1897, %v2009
          %v2011 = vpop.f32.mrb[0].mxu0
          %v2012 = vadd.f32 %v1899, %v2011
          %2013 = vdwg.mxu0
          %2014 = vmatprep.subr.bf16.mxu0 %v1535
          %2015 = vmatpush1.bf16.msra.mxu0 %v1534
          %2016 = vmatprep.subr.bf16.mxu0 %v1539
          %2017 = vmatpush1.bf16.msra.mxu0 %v1538
          %2018 = vmatprep.subr.bf16.mxu0 %v1543
          %2019 = vmatpush1.bf16.msra.mxu0 %v1542
          %2020 = vmatprep.subr.bf16.mxu0 %v1547
          %2021 = vmatpush1.bf16.msra.mxu0 %v1546
          %2022 = vmatprep.subr.bf16.mxu0 %v1551
          %2023 = vmatpush1.bf16.msra.mxu0 %v1550
          %2024 = vmatprep.subr.bf16.mxu0 %v1555
          %2025 = vmatpush1.bf16.msra.mxu0 %v1554
          %2026 = vmatprep.subr.bf16.mxu0 %v1559
          %2027 = vmatpush1.bf16.msra.mxu0 %v1558
          %2028 = vmatprep.subr.bf16.mxu0 %v1563
          %2029 = vmatpush1.bf16.msra.mxu0 %v1562
          %2030 = vmatprep.subr.bf16.mxu0 %v1567
          %2031 = vmatpush1.bf16.msra.mxu0 %v1566
          %2032 = vmatprep.subr.bf16.mxu0 %v1571
          %2033 = vmatpush1.bf16.msra.mxu0 %v1570
          %2034 = vmatprep.subr.bf16.mxu0 %v1575
          %2035 = vmatpush1.bf16.msra.mxu0 %v1574
          %2036 = vmatprep.subr.bf16.mxu0 %v1579
          %2037 = vmatpush1.bf16.msra.mxu0 %v1578
          %2038 = vmatprep.subr.bf16.mxu0 %v1583
          %2039 = vmatpush1.bf16.msra.mxu0 %v1582
          %2040 = vmatprep.subr.bf16.mxu0 %v1587
          %2041 = vmatpush1.bf16.msra.mxu0 %v1586
          %2042 = vmatprep.subr.bf16.mxu0 %v1591
          %2043 = vmatpush1.bf16.msra.mxu0 %v1590
          %2044 = vmatprep.subr.bf16.mxu0 %v1595
          %2045 = vmatpush1.bf16.msra.mxu0 %v1594
          %2046 = vmatprep.mubr.bf16.mxu0 %v967
          %2047 = vmatmul.mubr.bf16.gmra.mrb[0].mxu0 %v966
          %v2048 = vpop.f32.mrb[0].mxu0
          %v2049 = vadd.f32 %v1139, %v2048
          %v2050 = vpop.f32.mrb[0].mxu0
          %v2051 = vadd.f32 %v1143, %v2050
          %v2052 = vpop.f32.mrb[0].mxu0
          %v2053 = vadd.f32 %v1139, %v2052
          %v2054 = vpop.f32.mrb[0].mxu0
          %v2055 = vadd.f32 %v1143, %v2054
          %2056 = vmatprep.mubr.bf16.mxu0 %v971
          %2057 = vmatmul.mubr.bf16.gmra.mrb[0].mxu0 %v970
          %v2058 = vpop.f32.mrb[0].mxu0
          %v2059 = vadd.f32 %v1139, %v2058
          %v2060 = vpop.f32.mrb[0].mxu0
          %v2061 = vadd.f32 %v1143, %v2060
          %v2062 = vpop.f32.mrb[0].mxu0
          %v2063 = vadd.f32 %v1139, %v2062
          %v2064 = vpop.f32.mrb[0].mxu0
          %v2065 = vadd.f32 %v1143, %v2064
          %2066 = vmatprep.mubr.bf16.mxu0 %v975
          %2067 = vmatmul.mubr.bf16.gmra.mrb[0].mxu0 %v974
          %v2068 = vpop.f32.mrb[0].mxu0
          %v2069 = vadd.f32 %v1139, %v2068
          %v2070 = vpop.f32.mrb[0].mxu0
          %v2071 = vadd.f32 %v1143, %v2070
          %v2072 = vpop.f32.mrb[0].mxu0
          %v2073 = vadd.f32 %v1139, %v2072
          %v2074 = vpop.f32.mrb[0].mxu0
          %v2075 = vadd.f32 %v1143, %v2074
          %2076 = vmatprep.mubr.bf16.mxu0 %v979
          %2077 = vmatmul.mubr.bf16.gmra.mrb[0].mxu0 %v978
          %v2078 = vpop.f32.mrb[0].mxu0
          %v2079 = vadd.f32 %v1139, %v2078
          %v2080 = vpop.f32.mrb[0].mxu0
          %v2081 = vadd.f32 %v1143, %v2080
          %v2082 = vpop.f32.mrb[0].mxu0
          %v2083 = vadd.f32 %v1139, %v2082
          %v2084 = vpop.f32.mrb[0].mxu0
          %v2085 = vadd.f32 %v1143, %v2084
          %2086 = vmatprep.mubr.bf16.mxu0 %v983
          %2087 = vmatmul.mubr.bf16.gmra.mrb[0].mxu0 %v982
          %v2088 = vpop.f32.mrb[0].mxu0
          %v2089 = vadd.f32 %v1139, %v2088
          %v2090 = vpop.f32.mrb[0].mxu0
          %v2091 = vadd.f32 %v1143, %v2090
          %v2092 = vpop.f32.mrb[0].mxu0
          %v2093 = vadd.f32 %v1139, %v2092
          %v2094 = vpop.f32.mrb[0].mxu0
          %v2095 = vadd.f32 %v1143, %v2094
          %2096 = vmatprep.mubr.bf16.mxu0 %v987
          %2097 = vmatmul.mubr.bf16.gmra.mrb[0].mxu0 %v986
          %v2098 = vpop.f32.mrb[0].mxu0
          %v2099 = vadd.f32 %v1139, %v2098
          %v2100 = vpop.f32.mrb[0].mxu0
          %v2101 = vadd.f32 %v1143, %v2100
          %v2102 = vpop.f32.mrb[0].mxu0
          %v2103 = vadd.f32 %v1139, %v2102
          %v2104 = vpop.f32.mrb[0].mxu0
          %v2105 = vadd.f32 %v1143, %v2104
          %2106 = vmatprep.mubr.bf16.mxu0 %v991
          %2107 = vmatmul.mubr.bf16.gmra.mrb[0].mxu0 %v990
          %v2108 = vpop.f32.mrb[0].mxu0
          %v2109 = vadd.f32 %v1139, %v2108
          %v2110 = vpop.f32.mrb[0].mxu0
          %v2111 = vadd.f32 %v1143, %v2110
          %v2112 = vpop.f32.mrb[0].mxu0
          %v2113 = vadd.f32 %v1139, %v2112
          %v2114 = vpop.f32.mrb[0].mxu0
          %v2115 = vadd.f32 %v1143, %v2114
          %2116 = vmatprep.mubr.bf16.mxu0 %v995
          %2117 = vmatmul.mubr.bf16.gmra.mrb[0].mxu0 %v994
          %v2118 = vpop.f32.mrb[0].mxu0
          %v2119 = vadd.f32 %v1139, %v2118
          %v2120 = vpop.f32.mrb[0].mxu0
          %v2121 = vadd.f32 %v1143, %v2120
          %v2122 = vpop.f32.mrb[0].mxu0
          %v2123 = vadd.f32 %v1139, %v2122
          %v2124 = vpop.f32.mrb[0].mxu0
          %v2125 = vadd.f32 %v1143, %v2124
          %2126 = vdwg.mxu0
          %2127 = vmatprep.subr.bf16.mxu0 %v1599
          %2128 = vmatpush1.bf16.msra.mxu0 %v1598
          %2129 = vmatprep.subr.bf16.mxu0 %v1603
          %2130 = vmatpush1.bf16.msra.mxu0 %v1602
          %2131 = vmatprep.subr.bf16.mxu0 %v1607
          %2132 = vmatpush1.bf16.msra.mxu0 %v1606
          %2133 = vmatprep.subr.bf16.mxu0 %v1611
          %2134 = vmatpush1.bf16.msra.mxu0 %v1610
          %2135 = vmatprep.subr.bf16.mxu0 %v1615
          %2136 = vmatpush1.bf16.msra.mxu0 %v1614
          %2137 = vmatprep.subr.bf16.mxu0 %v1619
          %2138 = vmatpush1.bf16.msra.mxu0 %v1618
          %2139 = vmatprep.subr.bf16.mxu0 %v1623
          %2140 = vmatpush1.bf16.msra.mxu0 %v1622
          %2141 = vmatprep.subr.bf16.mxu0 %v1627
          %2142 = vmatpush1.bf16.msra.mxu0 %v1626
          %2143 = vmatprep.subr.bf16.mxu0 %v1631
          %2144 = vmatpush1.bf16.msra.mxu0 %v1630
          %2145 = vmatprep.subr.bf16.mxu0 %v1635
          %2146 = vmatpush1.bf16.msra.mxu0 %v1634
          %2147 = vmatprep.subr.bf16.mxu0 %v1639
          %2148 = vmatpush1.bf16.msra.mxu0 %v1638
          %2149 = vmatprep.subr.bf16.mxu0 %v1643
          %2150 = vmatpush1.bf16.msra.mxu0 %v1642
          %2151 = vmatprep.subr.bf16.mxu0 %v1647
          %2152 = vmatpush1.bf16.msra.mxu0 %v1646
          %2153 = vmatprep.subr.bf16.mxu0 %v1651
          %2154 = vmatpush1.bf16.msra.mxu0 %v1650
          %2155 = vmatprep.subr.bf16.mxu0 %v1655
          %2156 = vmatpush1.bf16.msra.mxu0 %v1654
          %2157 = vmatprep.subr.bf16.mxu0 %v1659
          %2158 = vmatpush1.bf16.msra.mxu0 %v1658
          %2159 = vmatprep.mubr.bf16.mxu0 %v969
          %2160 = vmatmul.mubr.bf16.gmra.mrb[0].mxu0 %v968
          %v2161 = vpop.f32.mrb[0].mxu0
          %v2162 = vadd.f32 %v2049, %v2161
          %v2163 = vpop.f32.mrb[0].mxu0
          %v2164 = vadd.f32 %v2051, %v2163
          %v2165 = vpop.f32.mrb[0].mxu0
          %v2166 = vadd.f32 %v2053, %v2165
          %v2167 = vpop.f32.mrb[0].mxu0
          %v2168 = vadd.f32 %v2055, %v2167
          %2169 = vmatprep.mubr.bf16.mxu0 %v973
          %2170 = vmatmul.mubr.bf16.gmra.mrb[0].mxu0 %v972
          %v2171 = vpop.f32.mrb[0].mxu0
          %v2172 = vadd.f32 %v2059, %v2171
          %v2173 = vpop.f32.mrb[0].mxu0
          %v2174 = vadd.f32 %v2061, %v2173
          %v2175 = vpop.f32.mrb[0].mxu0
          %v2176 = vadd.f32 %v2063, %v2175
          %v2177 = vpop.f32.mrb[0].mxu0
          %v2178 = vadd.f32 %v2065, %v2177
          %2179 = vmatprep.mubr.bf16.mxu0 %v977
          %2180 = vmatmul.mubr.bf16.gmra.mrb[0].mxu0 %v976
          %v2181 = vpop.f32.mrb[0].mxu0
          %v2182 = vadd.f32 %v2069, %v2181
          %v2183 = vpop.f32.mrb[0].mxu0
          %v2184 = vadd.f32 %v2071, %v2183
          %v2185 = vpop.f32.mrb[0].mxu0
          %v2186 = vadd.f32 %v2073, %v2185
          %v2187 = vpop.f32.mrb[0].mxu0
          %v2188 = vadd.f32 %v2075, %v2187
          %2189 = vmatprep.mubr.bf16.mxu0 %v981
          %2190 = vmatmul.mubr.bf16.gmra.mrb[0].mxu0 %v980
          %v2191 = vpop.f32.mrb[0].mxu0
          %v2192 = vadd.f32 %v2079, %v2191
          %v2193 = vpop.f32.mrb[0].mxu0
          %v2194 = vadd.f32 %v2081, %v2193
          %v2195 = vpop.f32.mrb[0].mxu0
          %v2196 = vadd.f32 %v2083, %v2195
          %v2197 = vpop.f32.mrb[0].mxu0
          %v2198 = vadd.f32 %v2085, %v2197
          %2199 = vmatprep.mubr.bf16.mxu0 %v985
          %2200 = vmatmul.mubr.bf16.gmra.mrb[0].mxu0 %v984
          %v2201 = vpop.f32.mrb[0].mxu0
          %v2202 = vadd.f32 %v2089, %v2201
          %v2203 = vpop.f32.mrb[0].mxu0
          %v2204 = vadd.f32 %v2091, %v2203
          %v2205 = vpop.f32.mrb[0].mxu0
          %v2206 = vadd.f32 %v2093, %v2205
          %v2207 = vpop.f32.mrb[0].mxu0
          %v2208 = vadd.f32 %v2095, %v2207
          %2209 = vmatprep.mubr.bf16.mxu0 %v989
          %2210 = vmatmul.mubr.bf16.gmra.mrb[0].mxu0 %v988
          %v2211 = vpop.f32.mrb[0].mxu0
          %v2212 = vadd.f32 %v2099, %v2211
          %v2213 = vpop.f32.mrb[0].mxu0
          %v2214 = vadd.f32 %v2101, %v2213
          %v2215 = vpop.f32.mrb[0].mxu0
          %v2216 = vadd.f32 %v2103, %v2215
          %v2217 = vpop.f32.mrb[0].mxu0
          %v2218 = vadd.f32 %v2105, %v2217
          %2219 = vmatprep.mubr.bf16.mxu0 %v993
          %2220 = vmatmul.mubr.bf16.gmra.mrb[0].mxu0 %v992
          %v2221 = vpop.f32.mrb[0].mxu0
          %v2222 = vadd.f32 %v2109, %v2221
          %v2223 = vpop.f32.mrb[0].mxu0
          %v2224 = vadd.f32 %v2111, %v2223
          %v2225 = vpop.f32.mrb[0].mxu0
          %v2226 = vadd.f32 %v2113, %v2225
          %v2227 = vpop.f32.mrb[0].mxu0
          %v2228 = vadd.f32 %v2115, %v2227
          %2229 = vmatprep.mubr.bf16.mxu0 %v997
          %2230 = vmatmul.mubr.bf16.gmra.mrb[0].mxu0 %v996
          %v2231 = vpop.f32.mrb[0].mxu0
          %v2232 = vadd.f32 %v2119, %v2231
          %v2233 = vpop.f32.mrb[0].mxu0
          %v2234 = vadd.f32 %v2121, %v2233
          %v2235 = vpop.f32.mrb[0].mxu0
          %v2236 = vadd.f32 %v2123, %v2235
          %v2237 = vpop.f32.mrb[0].mxu0
          %v2238 = vadd.f32 %v2125, %v2237
          %2239 = vdwg.mxu0
          %v2240 = vtanh.pop %v1936
          %v2241 = vtanh.pop %v1938
          %v2242 = vtanh.pop %v2162
          %v2243 = vtanh.pop %v2164
          %v2244 = vtanh.pop %v1940
          %v2245 = vtanh.pop %v1942
          %v2246 = vtanh.pop %v2166
          %v2247 = vtanh.pop %v2168
          %v2248 = vtanh.pop %v1946
          %v2249 = vtanh.pop %v1948
          %v2250 = vtanh.pop %v2172
          %v2251 = vtanh.pop %v2174
          %v2252 = vtanh.pop %v1950
          %v2253 = vtanh.pop %v1952
          %v2254 = vtanh.pop %v2176
          %v2255 = vtanh.pop %v2178
          %v2256 = vtanh.pop %v1956
          %v2257 = vtanh.pop %v1958
          %v2258 = vtanh.pop %v2182
          %v2259 = vtanh.pop %v2184
          %v2260 = vtanh.pop %v1960
          %v2261 = vtanh.pop %v1962
          %v2262 = vtanh.pop %v2186
          %v2263 = vtanh.pop %v2188
          %v2264 = vtanh.pop %v1966
          %v2265 = vtanh.pop %v1968
          %v2266 = vtanh.pop %v2192
          %v2267 = vtanh.pop %v2194
          %v2268 = vtanh.pop %v1970
          %v2269 = vtanh.pop %v1972
          %v2270 = vtanh.pop %v2196
          %v2271 = vtanh.pop %v2198
          %v2272 = vtanh.pop %v1976
          %v2273 = vtanh.pop %v1978
          %v2274 = vtanh.pop %v2202
          %v2275 = vtanh.pop %v2204
          %v2276 = vtanh.pop %v1980
          %v2277 = vtanh.pop %v1982
          %v2278 = vtanh.pop %v2206
          %v2279 = vtanh.pop %v2208
          %v2280 = vtanh.pop %v1986
          %v2281 = vtanh.pop %v1988
          %v2282 = vtanh.pop %v2212
          %v2283 = vtanh.pop %v2214
          %v2284 = vtanh.pop %v1990
          %v2285 = vtanh.pop %v1992
          %v2286 = vtanh.pop %v2216
          %v2287 = vtanh.pop %v2218
          %v2288 = vtanh.pop %v1996
          %v2289 = vtanh.pop %v1998
          %v2290 = vtanh.pop %v2222
          %v2291 = vtanh.pop %v2224
          %v2292 = vtanh.pop %v2000
          %v2293 = vtanh.pop %v2002
          %v2294 = vtanh.pop %v2226
          %v2295 = vtanh.pop %v2228
          %v2296 = vtanh.pop %v2006
          %v2297 = vtanh.pop %v2008
          %v2298 = vtanh.pop %v2232
          %v2299 = vtanh.pop %v2234
          %v2300 = vtanh.pop %v2010
          %v2301 = vtanh.pop %v2012
          %v2302 = vtanh.pop %v2236
          %v2303 = vtanh.pop %v2238
          %v2304 = vpack.c.bf16 %v2244, %v2240
          %v2305 = vpack.c.bf16 %v2245, %v2241
          %v2306 = vpack.c.bf16 %v2246, %v2242
          %v2307 = vpack.c.bf16 %v2247, %v2243
          %v2308 = vpack.c.bf16 %v2252, %v2248
          %v2309 = vpack.c.bf16 %v2253, %v2249
          %v2310 = vpack.c.bf16 %v2254, %v2250
          %v2311 = vpack.c.bf16 %v2255, %v2251
          %v2312 = vpack.c.bf16 %v2260, %v2256
          %v2313 = vpack.c.bf16 %v2261, %v2257
          %v2314 = vpack.c.bf16 %v2262, %v2258
          %v2315 = vpack.c.bf16 %v2263, %v2259
          %v2316 = vpack.c.bf16 %v2268, %v2264
          %v2317 = vpack.c.bf16 %v2269, %v2265
          %v2318 = vpack.c.bf16 %v2270, %v2266
          %v2319 = vpack.c.bf16 %v2271, %v2267
          %v2320 = vpack.c.bf16 %v2276, %v2272
          %v2321 = vpack.c.bf16 %v2277, %v2273
          %v2322 = vpack.c.bf16 %v2278, %v2274
          %v2323 = vpack.c.bf16 %v2279, %v2275
          %v2324 = vpack.c.bf16 %v2284, %v2280
          %v2325 = vpack.c.bf16 %v2285, %v2281
          %v2326 = vpack.c.bf16 %v2286, %v2282
          %v2327 = vpack.c.bf16 %v2287, %v2283
          %v2328 = vpack.c.bf16 %v2292, %v2288
          %v2329 = vpack.c.bf16 %v2293, %v2289
          %v2330 = vpack.c.bf16 %v2294, %v2290
          %v2331 = vpack.c.bf16 %v2295, %v2291
          %v2332 = vpack.c.bf16 %v2300, %v2296
          %v2333 = vpack.c.bf16 %v2301, %v2297
          %v2334 = vpack.c.bf16 %v2302, %v2298
          %v2335 = vpack.c.bf16 %v2303, %v2299
          %v2336 = vld [vmem:[#allocation11] sm:$0xff]
          %v2337 = vld [vmem:[#allocation11 + $0x8] sm:$0xff]
          %v2338 = vld [vmem:[#allocation11 + $0x10] sm:$0xff]
          %v2339 = vld [vmem:[#allocation11 + $0x18] sm:$0xff]
          %v2340 = vld [vmem:[#allocation11 + $0x20] sm:$0xff]
          %v2341 = vld [vmem:[#allocation11 + $0x28] sm:$0xff]
          %v2342 = vld [vmem:[#allocation11 + $0x30] sm:$0xff]
          %v2343 = vld [vmem:[#allocation11 + $0x38] sm:$0xff]
          %v2344 = vld [vmem:[#allocation11 + $0x40] sm:$0xff]
          %v2345 = vld [vmem:[#allocation11 + $0x48] sm:$0xff]
          %v2346 = vld [vmem:[#allocation11 + $0x50] sm:$0xff]
          %v2347 = vld [vmem:[#allocation11 + $0x58] sm:$0xff]
          %v2348 = vld [vmem:[#allocation11 + $0x60] sm:$0xff]
          %v2349 = vld [vmem:[#allocation11 + $0x68] sm:$0xff]
          %v2350 = vld [vmem:[#allocation11 + $0x70] sm:$0xff]
          %v2351 = vld [vmem:[#allocation11 + $0x78] sm:$0xff]
          %v2352 = vld [vmem:[#allocation11 + $0x80] sm:$0xff]
          %v2353 = vld [vmem:[#allocation11 + $0x88] sm:$0xff]
          %v2354 = vld [vmem:[#allocation11 + $0x90] sm:$0xff]
          %v2355 = vld [vmem:[#allocation11 + $0x98] sm:$0xff]
          %v2356 = vld [vmem:[#allocation11 + $0xa0] sm:$0xff]
          %v2357 = vld [vmem:[#allocation11 + $0xa8] sm:$0xff]
          %v2358 = vld [vmem:[#allocation11 + $0xb0] sm:$0xff]
          %v2359 = vld [vmem:[#allocation11 + $0xb8] sm:$0xff]
          %v2360 = vld [vmem:[#allocation11 + $0xc0] sm:$0xff]
          %v2361 = vld [vmem:[#allocation11 + $0xc8] sm:$0xff]
          %v2362 = vld [vmem:[#allocation11 + $0xd0] sm:$0xff]
          %v2363 = vld [vmem:[#allocation11 + $0xd8] sm:$0xff]
          %v2364 = vld [vmem:[#allocation11 + $0xe0] sm:$0xff]
          %v2365 = vld [vmem:[#allocation11 + $0xe8] sm:$0xff]
          %v2366 = vld [vmem:[#allocation11 + $0xf0] sm:$0xff]
          %v2367 = vld [vmem:[#allocation11 + $0xf8] sm:$0xff]
          %v2368 = vld [vmem:[#allocation11 + $0x100] sm:$0xff]
          %v2369 = vld [vmem:[#allocation11 + $0x108] sm:$0xff]
          %v2370 = vld [vmem:[#allocation11 + $0x110] sm:$0xff]
          %v2371 = vld [vmem:[#allocation11 + $0x118] sm:$0xff]
          %v2372 = vld [vmem:[#allocation11 + $0x120] sm:$0xff]
          %v2373 = vld [vmem:[#allocation11 + $0x128] sm:$0xff]
          %v2374 = vld [vmem:[#allocation11 + $0x130] sm:$0xff]
          %v2375 = vld [vmem:[#allocation11 + $0x138] sm:$0xff]
          %v2376 = vld [vmem:[#allocation11 + $0x140] sm:$0xff]
          %v2377 = vld [vmem:[#allocation11 + $0x148] sm:$0xff]
          %v2378 = vld [vmem:[#allocation11 + $0x150] sm:$0xff]
          %v2379 = vld [vmem:[#allocation11 + $0x158] sm:$0xff]
          %v2380 = vld [vmem:[#allocation11 + $0x160] sm:$0xff]
          %v2381 = vld [vmem:[#allocation11 + $0x168] sm:$0xff]
          %v2382 = vld [vmem:[#allocation11 + $0x170] sm:$0xff]
          %v2383 = vld [vmem:[#allocation11 + $0x178] sm:$0xff]
          %v2384 = vld [vmem:[#allocation11 + $0x180] sm:$0xff]
          %v2385 = vld [vmem:[#allocation11 + $0x188] sm:$0xff]
          %v2386 = vld [vmem:[#allocation11 + $0x190] sm:$0xff]
          %v2387 = vld [vmem:[#allocation11 + $0x198] sm:$0xff]
          %v2388 = vld [vmem:[#allocation11 + $0x1a0] sm:$0xff]
          %v2389 = vld [vmem:[#allocation11 + $0x1a8] sm:$0xff]
          %v2390 = vld [vmem:[#allocation11 + $0x1b0] sm:$0xff]
          %v2391 = vld [vmem:[#allocation11 + $0x1b8] sm:$0xff]
          %v2392 = vld [vmem:[#allocation11 + $0x1c0] sm:$0xff]
          %v2393 = vld [vmem:[#allocation11 + $0x1c8] sm:$0xff]
          %v2394 = vld [vmem:[#allocation11 + $0x1d0] sm:$0xff]
          %v2395 = vld [vmem:[#allocation11 + $0x1d8] sm:$0xff]
          %v2396 = vld [vmem:[#allocation11 + $0x1e0] sm:$0xff]
          %v2397 = vld [vmem:[#allocation11 + $0x1e8] sm:$0xff]
          %v2398 = vld [vmem:[#allocation11 + $0x1f0] sm:$0xff]
          %v2399 = vld [vmem:[#allocation11 + $0x1f8] sm:$0xff]
          %v2400 = vld [vmem:[#allocation11 + $0x200] sm:$0xff]
          %v2401 = vld [vmem:[#allocation11 + $0x208] sm:$0xff]
          %v2402 = vld [vmem:[#allocation11 + $0x210] sm:$0xff]
          %v2403 = vld [vmem:[#allocation11 + $0x218] sm:$0xff]
          %v2404 = vld [vmem:[#allocation11 + $0x220] sm:$0xff]
          %v2405 = vld [vmem:[#allocation11 + $0x228] sm:$0xff]
          %v2406 = vld [vmem:[#allocation11 + $0x230] sm:$0xff]
          %v2407 = vld [vmem:[#allocation11 + $0x238] sm:$0xff]
          %v2408 = vld [vmem:[#allocation11 + $0x240] sm:$0xff]
          %v2409 = vld [vmem:[#allocation11 + $0x248] sm:$0xff]
          %v2410 = vld [vmem:[#allocation11 + $0x250] sm:$0xff]
          %v2411 = vld [vmem:[#allocation11 + $0x258] sm:$0xff]
          %v2412 = vld [vmem:[#allocation11 + $0x260] sm:$0xff]
          %v2413 = vld [vmem:[#allocation11 + $0x268] sm:$0xff]
          %v2414 = vld [vmem:[#allocation11 + $0x270] sm:$0xff]
          %v2415 = vld [vmem:[#allocation11 + $0x278] sm:$0xff]
          %v2416 = vld [vmem:[#allocation11 + $0x280] sm:$0xff]
          %v2417 = vld [vmem:[#allocation11 + $0x288] sm:$0xff]
          %v2418 = vld [vmem:[#allocation11 + $0x290] sm:$0xff]
          %v2419 = vld [vmem:[#allocation11 + $0x298] sm:$0xff]
          %v2420 = vld [vmem:[#allocation11 + $0x2a0] sm:$0xff]
          %v2421 = vld [vmem:[#allocation11 + $0x2a8] sm:$0xff]
          %v2422 = vld [vmem:[#allocation11 + $0x2b0] sm:$0xff]
          %v2423 = vld [vmem:[#allocation11 + $0x2b8] sm:$0xff]
          %v2424 = vld [vmem:[#allocation11 + $0x2c0] sm:$0xff]
          %v2425 = vld [vmem:[#allocation11 + $0x2c8] sm:$0xff]
          %v2426 = vld [vmem:[#allocation11 + $0x2d0] sm:$0xff]
          %v2427 = vld [vmem:[#allocation11 + $0x2d8] sm:$0xff]
          %v2428 = vld [vmem:[#allocation11 + $0x2e0] sm:$0xff]
          %v2429 = vld [vmem:[#allocation11 + $0x2e8] sm:$0xff]
          %v2430 = vld [vmem:[#allocation11 + $0x2f0] sm:$0xff]
          %v2431 = vld [vmem:[#allocation11 + $0x2f8] sm:$0xff]
          %v2432 = vld [vmem:[#allocation11 + $0x300] sm:$0xff]
          %v2433 = vld [vmem:[#allocation11 + $0x308] sm:$0xff]
          %v2434 = vld [vmem:[#allocation11 + $0x310] sm:$0xff]
          %v2435 = vld [vmem:[#allocation11 + $0x318] sm:$0xff]
          %v2436 = vld [vmem:[#allocation11 + $0x320] sm:$0xff]
          %v2437 = vld [vmem:[#allocation11 + $0x328] sm:$0xff]
          %v2438 = vld [vmem:[#allocation11 + $0x330] sm:$0xff]
          %v2439 = vld [vmem:[#allocation11 + $0x338] sm:$0xff]
          %v2440 = vld [vmem:[#allocation11 + $0x340] sm:$0xff]
          %v2441 = vld [vmem:[#allocation11 + $0x348] sm:$0xff]
          %v2442 = vld [vmem:[#allocation11 + $0x350] sm:$0xff]
          %v2443 = vld [vmem:[#allocation11 + $0x358] sm:$0xff]
          %v2444 = vld [vmem:[#allocation11 + $0x360] sm:$0xff]
          %v2445 = vld [vmem:[#allocation11 + $0x368] sm:$0xff]
          %v2446 = vld [vmem:[#allocation11 + $0x370] sm:$0xff]
          %v2447 = vld [vmem:[#allocation11 + $0x378] sm:$0xff]
          %v2448 = vld [vmem:[#allocation11 + $0x380] sm:$0xff]
          %v2449 = vld [vmem:[#allocation11 + $0x388] sm:$0xff]
          %v2450 = vld [vmem:[#allocation11 + $0x390] sm:$0xff]
          %v2451 = vld [vmem:[#allocation11 + $0x398] sm:$0xff]
          %v2452 = vld [vmem:[#allocation11 + $0x3a0] sm:$0xff]
          %v2453 = vld [vmem:[#allocation11 + $0x3a8] sm:$0xff]
          %v2454 = vld [vmem:[#allocation11 + $0x3b0] sm:$0xff]
          %v2455 = vld [vmem:[#allocation11 + $0x3b8] sm:$0xff]
          %v2456 = vld [vmem:[#allocation11 + $0x3c0] sm:$0xff]
          %v2457 = vld [vmem:[#allocation11 + $0x3c8] sm:$0xff]
          %v2458 = vld [vmem:[#allocation11 + $0x3d0] sm:$0xff]
          %v2459 = vld [vmem:[#allocation11 + $0x3d8] sm:$0xff]
          %v2460 = vld [vmem:[#allocation11 + $0x3e0] sm:$0xff]
          %v2461 = vld [vmem:[#allocation11 + $0x3e8] sm:$0xff]
          %v2462 = vld [vmem:[#allocation11 + $0x3f0] sm:$0xff]
          %v2463 = vld [vmem:[#allocation11 + $0x3f8] sm:$0xff]
          %v2464 = vld [vmem:[#allocation12] sm:$0xf]
          %v2466 = vlaneseq
          %v2467 = vshrl.u32 %v2466, 7
          %v2468 = vsub.s32 0, %v2467
          %v2469 = vrot.slane %v2464, %v2468
          %v2470 = vlaneseq
          %v2471 = vshrl.u32 %v2470, 7
          %v2472 = vsub.s32 1, %v2471
          %v2473 = vrot.slane %v2464, %v2472
          %v2474 = vlaneseq
          %v2475 = vshrl.u32 %v2474, 7
          %v2476 = vsub.s32 2, %v2475
          %v2477 = vrot.slane %v2464, %v2476
          %v2478 = vlaneseq
          %v2479 = vshrl.u32 %v2478, 7
          %v2480 = vsub.s32 3, %v2479
          %v2481 = vrot.slane %v2464, %v2480
          %v2614 = vunpack.c.l.b16 %v2336
          %v2615 = vunpack.c.h.b16 %v2336
          %v2616 = vunpack.c.l.b16 %v2337
          %v2617 = vunpack.c.h.b16 %v2337
          %v2618 = vunpack.c.l.b16 %v2338
          %v2619 = vunpack.c.h.b16 %v2338
          %v2620 = vunpack.c.l.b16 %v2339
          %v2621 = vunpack.c.h.b16 %v2339
          %v2622 = vunpack.c.l.b16 %v2340
          %v2623 = vunpack.c.h.b16 %v2340
          %v2624 = vunpack.c.l.b16 %v2341
          %v2625 = vunpack.c.h.b16 %v2341
          %v2626 = vunpack.c.l.b16 %v2342
          %v2627 = vunpack.c.h.b16 %v2342
          %v2628 = vunpack.c.l.b16 %v2343
          %v2629 = vunpack.c.h.b16 %v2343
          %v2630 = vunpack.c.l.b16 %v2344
          %v2631 = vunpack.c.h.b16 %v2344
          %v2632 = vunpack.c.l.b16 %v2345
          %v2633 = vunpack.c.h.b16 %v2345
          %v2634 = vunpack.c.l.b16 %v2346
          %v2635 = vunpack.c.h.b16 %v2346
          %v2636 = vunpack.c.l.b16 %v2347
          %v2637 = vunpack.c.h.b16 %v2347
          %v2638 = vunpack.c.l.b16 %v2348
          %v2639 = vunpack.c.h.b16 %v2348
          %v2640 = vunpack.c.l.b16 %v2349
          %v2641 = vunpack.c.h.b16 %v2349
          %v2642 = vunpack.c.l.b16 %v2350
          %v2643 = vunpack.c.h.b16 %v2350
          %v2644 = vunpack.c.l.b16 %v2351
          %v2645 = vunpack.c.h.b16 %v2351
          %v2646 = vunpack.c.l.b16 %v2352
          %v2647 = vunpack.c.h.b16 %v2352
          %v2648 = vunpack.c.l.b16 %v2353
          %v2649 = vunpack.c.h.b16 %v2353
          %v2650 = vunpack.c.l.b16 %v2354
          %v2651 = vunpack.c.h.b16 %v2354
          %v2652 = vunpack.c.l.b16 %v2355
          %v2653 = vunpack.c.h.b16 %v2355
          %v2654 = vunpack.c.l.b16 %v2356
          %v2655 = vunpack.c.h.b16 %v2356
          %v2656 = vunpack.c.l.b16 %v2357
          %v2657 = vunpack.c.h.b16 %v2357
          %v2658 = vunpack.c.l.b16 %v2358
          %v2659 = vunpack.c.h.b16 %v2358
          %v2660 = vunpack.c.l.b16 %v2359
          %v2661 = vunpack.c.h.b16 %v2359
          %v2662 = vunpack.c.l.b16 %v2360
          %v2663 = vunpack.c.h.b16 %v2360
          %v2664 = vunpack.c.l.b16 %v2361
          %v2665 = vunpack.c.h.b16 %v2361
          %v2666 = vunpack.c.l.b16 %v2362
          %v2667 = vunpack.c.h.b16 %v2362
          %v2668 = vunpack.c.l.b16 %v2363
          %v2669 = vunpack.c.h.b16 %v2363
          %v2670 = vunpack.c.l.b16 %v2364
          %v2671 = vunpack.c.h.b16 %v2364
          %v2672 = vunpack.c.l.b16 %v2365
          %v2673 = vunpack.c.h.b16 %v2365
          %v2674 = vunpack.c.l.b16 %v2366
          %v2675 = vunpack.c.h.b16 %v2366
          %v2676 = vunpack.c.l.b16 %v2367
          %v2677 = vunpack.c.h.b16 %v2367
          %v2678 = vunpack.c.l.b16 %v2368
          %v2679 = vunpack.c.h.b16 %v2368
          %v2680 = vunpack.c.l.b16 %v2369
          %v2681 = vunpack.c.h.b16 %v2369
          %v2682 = vunpack.c.l.b16 %v2370
          %v2683 = vunpack.c.h.b16 %v2370
          %v2684 = vunpack.c.l.b16 %v2371
          %v2685 = vunpack.c.h.b16 %v2371
          %v2686 = vunpack.c.l.b16 %v2372
          %v2687 = vunpack.c.h.b16 %v2372
          %v2688 = vunpack.c.l.b16 %v2373
          %v2689 = vunpack.c.h.b16 %v2373
          %v2690 = vunpack.c.l.b16 %v2374
          %v2691 = vunpack.c.h.b16 %v2374
          %v2692 = vunpack.c.l.b16 %v2375
          %v2693 = vunpack.c.h.b16 %v2375
          %v2694 = vunpack.c.l.b16 %v2376
          %v2695 = vunpack.c.h.b16 %v2376
          %v2696 = vunpack.c.l.b16 %v2377
          %v2697 = vunpack.c.h.b16 %v2377
          %v2698 = vunpack.c.l.b16 %v2378
          %v2699 = vunpack.c.h.b16 %v2378
          %v2700 = vunpack.c.l.b16 %v2379
          %v2701 = vunpack.c.h.b16 %v2379
          %v2702 = vunpack.c.l.b16 %v2380
          %v2703 = vunpack.c.h.b16 %v2380
          %v2704 = vunpack.c.l.b16 %v2381
          %v2705 = vunpack.c.h.b16 %v2381
          %v2706 = vunpack.c.l.b16 %v2382
          %v2707 = vunpack.c.h.b16 %v2382
          %v2708 = vunpack.c.l.b16 %v2383
          %v2709 = vunpack.c.h.b16 %v2383
          %v2710 = vunpack.c.l.b16 %v2384
          %v2711 = vunpack.c.h.b16 %v2384
          %v2712 = vunpack.c.l.b16 %v2385
          %v2713 = vunpack.c.h.b16 %v2385
          %v2714 = vunpack.c.l.b16 %v2386
          %v2715 = vunpack.c.h.b16 %v2386
          %v2716 = vunpack.c.l.b16 %v2387
          %v2717 = vunpack.c.h.b16 %v2387
          %v2718 = vunpack.c.l.b16 %v2388
          %v2719 = vunpack.c.h.b16 %v2388
          %v2720 = vunpack.c.l.b16 %v2389
          %v2721 = vunpack.c.h.b16 %v2389
          %v2722 = vunpack.c.l.b16 %v2390
          %v2723 = vunpack.c.h.b16 %v2390
          %v2724 = vunpack.c.l.b16 %v2391
          %v2725 = vunpack.c.h.b16 %v2391
          %v2726 = vunpack.c.l.b16 %v2392
          %v2727 = vunpack.c.h.b16 %v2392
          %v2728 = vunpack.c.l.b16 %v2393
          %v2729 = vunpack.c.h.b16 %v2393
          %v2730 = vunpack.c.l.b16 %v2394
          %v2731 = vunpack.c.h.b16 %v2394
          %v2732 = vunpack.c.l.b16 %v2395
          %v2733 = vunpack.c.h.b16 %v2395
          %v2734 = vunpack.c.l.b16 %v2396
          %v2735 = vunpack.c.h.b16 %v2396
          %v2736 = vunpack.c.l.b16 %v2397
          %v2737 = vunpack.c.h.b16 %v2397
          %v2738 = vunpack.c.l.b16 %v2398
          %v2739 = vunpack.c.h.b16 %v2398
          %v2740 = vunpack.c.l.b16 %v2399
          %v2741 = vunpack.c.h.b16 %v2399
          %v2742 = vunpack.c.l.b16 %v2400
          %v2743 = vunpack.c.h.b16 %v2400
          %v2744 = vunpack.c.l.b16 %v2401
          %v2745 = vunpack.c.h.b16 %v2401
          %v2746 = vunpack.c.l.b16 %v2402
          %v2747 = vunpack.c.h.b16 %v2402
          %v2748 = vunpack.c.l.b16 %v2403
          %v2749 = vunpack.c.h.b16 %v2403
          %v2750 = vunpack.c.l.b16 %v2404
          %v2751 = vunpack.c.h.b16 %v2404
          %v2752 = vunpack.c.l.b16 %v2405
          %v2753 = vunpack.c.h.b16 %v2405
          %v2754 = vunpack.c.l.b16 %v2406
          %v2755 = vunpack.c.h.b16 %v2406
          %v2756 = vunpack.c.l.b16 %v2407
          %v2757 = vunpack.c.h.b16 %v2407
          %v2758 = vunpack.c.l.b16 %v2408
          %v2759 = vunpack.c.h.b16 %v2408
          %v2760 = vunpack.c.l.b16 %v2409
          %v2761 = vunpack.c.h.b16 %v2409
          %v2762 = vunpack.c.l.b16 %v2410
          %v2763 = vunpack.c.h.b16 %v2410
          %v2764 = vunpack.c.l.b16 %v2411
          %v2765 = vunpack.c.h.b16 %v2411
          %v2766 = vunpack.c.l.b16 %v2412
          %v2767 = vunpack.c.h.b16 %v2412
          %v2768 = vunpack.c.l.b16 %v2413
          %v2769 = vunpack.c.h.b16 %v2413
          %v2770 = vunpack.c.l.b16 %v2414
          %v2771 = vunpack.c.h.b16 %v2414
          %v2772 = vunpack.c.l.b16 %v2415
          %v2773 = vunpack.c.h.b16 %v2415
          %v2774 = vunpack.c.l.b16 %v2416
          %v2775 = vunpack.c.h.b16 %v2416
          %v2776 = vunpack.c.l.b16 %v2417
          %v2777 = vunpack.c.h.b16 %v2417
          %v2778 = vunpack.c.l.b16 %v2418
          %v2779 = vunpack.c.h.b16 %v2418
          %v2780 = vunpack.c.l.b16 %v2419
          %v2781 = vunpack.c.h.b16 %v2419
          %v2782 = vunpack.c.l.b16 %v2420
          %v2783 = vunpack.c.h.b16 %v2420
          %v2784 = vunpack.c.l.b16 %v2421
          %v2785 = vunpack.c.h.b16 %v2421
          %v2786 = vunpack.c.l.b16 %v2422
          %v2787 = vunpack.c.h.b16 %v2422
          %v2788 = vunpack.c.l.b16 %v2423
          %v2789 = vunpack.c.h.b16 %v2423
          %v2790 = vunpack.c.l.b16 %v2424
          %v2791 = vunpack.c.h.b16 %v2424
          %v2792 = vunpack.c.l.b16 %v2425
          %v2793 = vunpack.c.h.b16 %v2425
          %v2794 = vunpack.c.l.b16 %v2426
          %v2795 = vunpack.c.h.b16 %v2426
          %v2796 = vunpack.c.l.b16 %v2427
          %v2797 = vunpack.c.h.b16 %v2427
          %v2798 = vunpack.c.l.b16 %v2428
          %v2799 = vunpack.c.h.b16 %v2428
          %v2800 = vunpack.c.l.b16 %v2429
          %v2801 = vunpack.c.h.b16 %v2429
          %v2802 = vunpack.c.l.b16 %v2430
          %v2803 = vunpack.c.h.b16 %v2430
          %v2804 = vunpack.c.l.b16 %v2431
          %v2805 = vunpack.c.h.b16 %v2431
          %v2806 = vunpack.c.l.b16 %v2432
          %v2807 = vunpack.c.h.b16 %v2432
          %v2808 = vunpack.c.l.b16 %v2433
          %v2809 = vunpack.c.h.b16 %v2433
          %v2810 = vunpack.c.l.b16 %v2434
          %v2811 = vunpack.c.h.b16 %v2434
          %v2812 = vunpack.c.l.b16 %v2435
          %v2813 = vunpack.c.h.b16 %v2435
          %v2814 = vunpack.c.l.b16 %v2436
          %v2815 = vunpack.c.h.b16 %v2436
          %v2816 = vunpack.c.l.b16 %v2437
          %v2817 = vunpack.c.h.b16 %v2437
          %v2818 = vunpack.c.l.b16 %v2438
          %v2819 = vunpack.c.h.b16 %v2438
          %v2820 = vunpack.c.l.b16 %v2439
          %v2821 = vunpack.c.h.b16 %v2439
          %v2822 = vunpack.c.l.b16 %v2440
          %v2823 = vunpack.c.h.b16 %v2440
          %v2824 = vunpack.c.l.b16 %v2441
          %v2825 = vunpack.c.h.b16 %v2441
          %v2826 = vunpack.c.l.b16 %v2442
          %v2827 = vunpack.c.h.b16 %v2442
          %v2828 = vunpack.c.l.b16 %v2443
          %v2829 = vunpack.c.h.b16 %v2443
          %v2830 = vunpack.c.l.b16 %v2444
          %v2831 = vunpack.c.h.b16 %v2444
          %v2832 = vunpack.c.l.b16 %v2445
          %v2833 = vunpack.c.h.b16 %v2445
          %v2834 = vunpack.c.l.b16 %v2446
          %v2835 = vunpack.c.h.b16 %v2446
          %v2836 = vunpack.c.l.b16 %v2447
          %v2837 = vunpack.c.h.b16 %v2447
          %v2838 = vunpack.c.l.b16 %v2448
          %v2839 = vunpack.c.h.b16 %v2448
          %v2840 = vunpack.c.l.b16 %v2449
          %v2841 = vunpack.c.h.b16 %v2449
          %v2842 = vunpack.c.l.b16 %v2450
          %v2843 = vunpack.c.h.b16 %v2450
          %v2844 = vunpack.c.l.b16 %v2451
          %v2845 = vunpack.c.h.b16 %v2451
          %v2846 = vunpack.c.l.b16 %v2452
          %v2847 = vunpack.c.h.b16 %v2452
          %v2848 = vunpack.c.l.b16 %v2453
          %v2849 = vunpack.c.h.b16 %v2453
          %v2850 = vunpack.c.l.b16 %v2454
          %v2851 = vunpack.c.h.b16 %v2454
          %v2852 = vunpack.c.l.b16 %v2455
          %v2853 = vunpack.c.h.b16 %v2455
          %v2854 = vunpack.c.l.b16 %v2456
          %v2855 = vunpack.c.h.b16 %v2456
          %v2856 = vunpack.c.l.b16 %v2457
          %v2857 = vunpack.c.h.b16 %v2457
          %v2858 = vunpack.c.l.b16 %v2458
          %v2859 = vunpack.c.h.b16 %v2458
          %v2860 = vunpack.c.l.b16 %v2459
          %v2861 = vunpack.c.h.b16 %v2459
          %v2862 = vunpack.c.l.b16 %v2460
          %v2863 = vunpack.c.h.b16 %v2460
          %v2864 = vunpack.c.l.b16 %v2461
          %v2865 = vunpack.c.h.b16 %v2461
          %v2866 = vunpack.c.l.b16 %v2462
          %v2867 = vunpack.c.h.b16 %v2462
          %v2868 = vunpack.c.l.b16 %v2463
          %v2869 = vunpack.c.h.b16 %v2463
          %v2870 = vpack.c.b16 %v2618, %v2614
          %v2871 = vpack.c.b16 %v2619, %v2615
          %v2872 = vpack.c.b16 %v2620, %v2616
          %v2873 = vpack.c.b16 %v2621, %v2617
          %v2874 = vpack.c.b16 %v2626, %v2622
          %v2875 = vpack.c.b16 %v2627, %v2623
          %v2876 = vpack.c.b16 %v2628, %v2624
          %v2877 = vpack.c.b16 %v2629, %v2625
          %v2878 = vpack.c.b16 %v2634, %v2630
          %v2879 = vpack.c.b16 %v2635, %v2631
          %v2880 = vpack.c.b16 %v2636, %v2632
          %v2881 = vpack.c.b16 %v2637, %v2633
          %v2882 = vpack.c.b16 %v2642, %v2638
          %v2883 = vpack.c.b16 %v2643, %v2639
          %v2884 = vpack.c.b16 %v2644, %v2640
          %v2885 = vpack.c.b16 %v2645, %v2641
          %v2886 = vpack.c.b16 %v2650, %v2646
          %v2887 = vpack.c.b16 %v2651, %v2647
          %v2888 = vpack.c.b16 %v2652, %v2648
          %v2889 = vpack.c.b16 %v2653, %v2649
          %v2890 = vpack.c.b16 %v2658, %v2654
          %v2891 = vpack.c.b16 %v2659, %v2655
          %v2892 = vpack.c.b16 %v2660, %v2656
          %v2893 = vpack.c.b16 %v2661, %v2657
          %v2894 = vpack.c.b16 %v2666, %v2662
          %v2895 = vpack.c.b16 %v2667, %v2663
          %v2896 = vpack.c.b16 %v2668, %v2664
          %v2897 = vpack.c.b16 %v2669, %v2665
          %v2898 = vpack.c.b16 %v2674, %v2670
          %v2899 = vpack.c.b16 %v2675, %v2671
          %v2900 = vpack.c.b16 %v2676, %v2672
          %v2901 = vpack.c.b16 %v2677, %v2673
          %v2902 = vpack.c.b16 %v2682, %v2678
          %v2903 = vpack.c.b16 %v2683, %v2679
          %v2904 = vpack.c.b16 %v2684, %v2680
          %v2905 = vpack.c.b16 %v2685, %v2681
          %v2906 = vpack.c.b16 %v2690, %v2686
          %v2907 = vpack.c.b16 %v2691, %v2687
          %v2908 = vpack.c.b16 %v2692, %v2688
          %v2909 = vpack.c.b16 %v2693, %v2689
          %v2910 = vpack.c.b16 %v2698, %v2694
          %v2911 = vpack.c.b16 %v2699, %v2695
          %v2912 = vpack.c.b16 %v2700, %v2696
          %v2913 = vpack.c.b16 %v2701, %v2697
          %v2914 = vpack.c.b16 %v2706, %v2702
          %v2915 = vpack.c.b16 %v2707, %v2703
          %v2916 = vpack.c.b16 %v2708, %v2704
          %v2917 = vpack.c.b16 %v2709, %v2705
          %v2918 = vpack.c.b16 %v2714, %v2710
          %v2919 = vpack.c.b16 %v2715, %v2711
          %v2920 = vpack.c.b16 %v2716, %v2712
          %v2921 = vpack.c.b16 %v2717, %v2713
          %v2922 = vpack.c.b16 %v2722, %v2718
          %v2923 = vpack.c.b16 %v2723, %v2719
          %v2924 = vpack.c.b16 %v2724, %v2720
          %v2925 = vpack.c.b16 %v2725, %v2721
          %v2926 = vpack.c.b16 %v2730, %v2726
          %v2927 = vpack.c.b16 %v2731, %v2727
          %v2928 = vpack.c.b16 %v2732, %v2728
          %v2929 = vpack.c.b16 %v2733, %v2729
          %v2930 = vpack.c.b16 %v2738, %v2734
          %v2931 = vpack.c.b16 %v2739, %v2735
          %v2932 = vpack.c.b16 %v2740, %v2736
          %v2933 = vpack.c.b16 %v2741, %v2737
          %v2934 = vpack.c.b16 %v2746, %v2742
          %v2935 = vpack.c.b16 %v2747, %v2743
          %v2936 = vpack.c.b16 %v2748, %v2744
          %v2937 = vpack.c.b16 %v2749, %v2745
          %v2938 = vpack.c.b16 %v2754, %v2750
          %v2939 = vpack.c.b16 %v2755, %v2751
          %v2940 = vpack.c.b16 %v2756, %v2752
          %v2941 = vpack.c.b16 %v2757, %v2753
          %v2942 = vpack.c.b16 %v2762, %v2758
          %v2943 = vpack.c.b16 %v2763, %v2759
          %v2944 = vpack.c.b16 %v2764, %v2760
          %v2945 = vpack.c.b16 %v2765, %v2761
          %v2946 = vpack.c.b16 %v2770, %v2766
          %v2947 = vpack.c.b16 %v2771, %v2767
          %v2948 = vpack.c.b16 %v2772, %v2768
          %v2949 = vpack.c.b16 %v2773, %v2769
          %v2950 = vpack.c.b16 %v2778, %v2774
          %v2951 = vpack.c.b16 %v2779, %v2775
          %v2952 = vpack.c.b16 %v2780, %v2776
          %v2953 = vpack.c.b16 %v2781, %v2777
          %v2954 = vpack.c.b16 %v2786, %v2782
          %v2955 = vpack.c.b16 %v2787, %v2783
          %v2956 = vpack.c.b16 %v2788, %v2784
          %v2957 = vpack.c.b16 %v2789, %v2785
          %v2958 = vpack.c.b16 %v2794, %v2790
          %v2959 = vpack.c.b16 %v2795, %v2791
          %v2960 = vpack.c.b16 %v2796, %v2792
          %v2961 = vpack.c.b16 %v2797, %v2793
          %v2962 = vpack.c.b16 %v2802, %v2798
          %v2963 = vpack.c.b16 %v2803, %v2799
          %v2964 = vpack.c.b16 %v2804, %v2800
          %v2965 = vpack.c.b16 %v2805, %v2801
          %v2966 = vpack.c.b16 %v2810, %v2806
          %v2967 = vpack.c.b16 %v2811, %v2807
          %v2968 = vpack.c.b16 %v2812, %v2808
          %v2969 = vpack.c.b16 %v2813, %v2809
          %v2970 = vpack.c.b16 %v2818, %v2814
          %v2971 = vpack.c.b16 %v2819, %v2815
          %v2972 = vpack.c.b16 %v2820, %v2816
          %v2973 = vpack.c.b16 %v2821, %v2817
          %v2974 = vpack.c.b16 %v2826, %v2822
          %v2975 = vpack.c.b16 %v2827, %v2823
          %v2976 = vpack.c.b16 %v2828, %v2824
          %v2977 = vpack.c.b16 %v2829, %v2825
          %v2978 = vpack.c.b16 %v2834, %v2830
          %v2979 = vpack.c.b16 %v2835, %v2831
          %v2980 = vpack.c.b16 %v2836, %v2832
          %v2981 = vpack.c.b16 %v2837, %v2833
          %v2982 = vpack.c.b16 %v2842, %v2838
          %v2983 = vpack.c.b16 %v2843, %v2839
          %v2984 = vpack.c.b16 %v2844, %v2840
          %v2985 = vpack.c.b16 %v2845, %v2841
          %v2986 = vpack.c.b16 %v2850, %v2846
          %v2987 = vpack.c.b16 %v2851, %v2847
          %v2988 = vpack.c.b16 %v2852, %v2848
          %v2989 = vpack.c.b16 %v2853, %v2849
          %v2990 = vpack.c.b16 %v2858, %v2854
          %v2991 = vpack.c.b16 %v2859, %v2855
          %v2992 = vpack.c.b16 %v2860, %v2856
          %v2993 = vpack.c.b16 %v2861, %v2857
          %v2994 = vpack.c.b16 %v2866, %v2862
          %v2995 = vpack.c.b16 %v2867, %v2863
          %v2996 = vpack.c.b16 %v2868, %v2864
          %v2997 = vpack.c.b16 %v2869, %v2865
          %3126 = vmatprep.subr.bf16.mxu0 %v2871
          %3127 = vmatpush1.bf16.msra.mxu0 %v2870
          %3128 = vmatprep.subr.bf16.mxu0 %v2875
          %3129 = vmatpush1.bf16.msra.mxu0 %v2874
          %3130 = vmatprep.subr.bf16.mxu0 %v2879
          %3131 = vmatpush1.bf16.msra.mxu0 %v2878
          %3132 = vmatprep.subr.bf16.mxu0 %v2883
          %3133 = vmatpush1.bf16.msra.mxu0 %v2882
          %3134 = vmatprep.subr.bf16.mxu0 %v2887
          %3135 = vmatpush1.bf16.msra.mxu0 %v2886
          %3136 = vmatprep.subr.bf16.mxu0 %v2891
          %3137 = vmatpush1.bf16.msra.mxu0 %v2890
          %3138 = vmatprep.subr.bf16.mxu0 %v2895
          %3139 = vmatpush1.bf16.msra.mxu0 %v2894
          %3140 = vmatprep.subr.bf16.mxu0 %v2899
          %3141 = vmatpush1.bf16.msra.mxu0 %v2898
          %3142 = vmatprep.subr.bf16.mxu0 %v2903
          %3143 = vmatpush1.bf16.msra.mxu0 %v2902
          %3144 = vmatprep.subr.bf16.mxu0 %v2907
          %3145 = vmatpush1.bf16.msra.mxu0 %v2906
          %3146 = vmatprep.subr.bf16.mxu0 %v2911
          %3147 = vmatpush1.bf16.msra.mxu0 %v2910
          %3148 = vmatprep.subr.bf16.mxu0 %v2915
          %3149 = vmatpush1.bf16.msra.mxu0 %v2914
          %3150 = vmatprep.subr.bf16.mxu0 %v2919
          %3151 = vmatpush1.bf16.msra.mxu0 %v2918
          %3152 = vmatprep.subr.bf16.mxu0 %v2923
          %3153 = vmatpush1.bf16.msra.mxu0 %v2922
          %3154 = vmatprep.subr.bf16.mxu0 %v2927
          %3155 = vmatpush1.bf16.msra.mxu0 %v2926
          %3156 = vmatprep.subr.bf16.mxu0 %v2931
          %3157 = vmatpush1.bf16.msra.mxu0 %v2930
          %3158 = vmatprep.mubr.bf16.mxu0 %v2305
          %3159 = vmatmul.mubr.bf16.gmra.mrb[0].mxu0 %v2304
          %v3160 = vpop.f32.mrb[0].mxu0
          %v3161 = vadd.f32 %v2469, %v3160
          %v3162 = vpop.f32.mrb[0].mxu0
          %v3163 = vadd.f32 %v2473, %v3162
          %v3164 = vpop.f32.mrb[0].mxu0
          %v3165 = vadd.f32 %v2469, %v3164
          %v3166 = vpop.f32.mrb[0].mxu0
          %v3167 = vadd.f32 %v2473, %v3166
          %3168 = vmatprep.mubr.bf16.mxu0 %v2309
          %3169 = vmatmul.mubr.bf16.gmra.mrb[0].mxu0 %v2308
          %v3170 = vpop.f32.mrb[0].mxu0
          %v3171 = vadd.f32 %v2469, %v3170
          %v3172 = vpop.f32.mrb[0].mxu0
          %v3173 = vadd.f32 %v2473, %v3172
          %v3174 = vpop.f32.mrb[0].mxu0
          %v3175 = vadd.f32 %v2469, %v3174
          %v3176 = vpop.f32.mrb[0].mxu0
          %v3177 = vadd.f32 %v2473, %v3176
          %3178 = vmatprep.mubr.bf16.mxu0 %v2313
          %3179 = vmatmul.mubr.bf16.gmra.mrb[0].mxu0 %v2312
          %v3180 = vpop.f32.mrb[0].mxu0
          %v3181 = vadd.f32 %v2469, %v3180
          %v3182 = vpop.f32.mrb[0].mxu0
          %v3183 = vadd.f32 %v2473, %v3182
          %v3184 = vpop.f32.mrb[0].mxu0
          %v3185 = vadd.f32 %v2469, %v3184
          %v3186 = vpop.f32.mrb[0].mxu0
          %v3187 = vadd.f32 %v2473, %v3186
          %3188 = vmatprep.mubr.bf16.mxu0 %v2317
          %3189 = vmatmul.mubr.bf16.gmra.mrb[0].mxu0 %v2316
          %v3190 = vpop.f32.mrb[0].mxu0
          %v3191 = vadd.f32 %v2469, %v3190
          %v3192 = vpop.f32.mrb[0].mxu0
          %v3193 = vadd.f32 %v2473, %v3192
          %v3194 = vpop.f32.mrb[0].mxu0
          %v3195 = vadd.f32 %v2469, %v3194
          %v3196 = vpop.f32.mrb[0].mxu0
          %v3197 = vadd.f32 %v2473, %v3196
          %3198 = vmatprep.mubr.bf16.mxu0 %v2321
          %3199 = vmatmul.mubr.bf16.gmra.mrb[0].mxu0 %v2320
          %v3200 = vpop.f32.mrb[0].mxu0
          %v3201 = vadd.f32 %v2469, %v3200
          %v3202 = vpop.f32.mrb[0].mxu0
          %v3203 = vadd.f32 %v2473, %v3202
          %v3204 = vpop.f32.mrb[0].mxu0
          %v3205 = vadd.f32 %v2469, %v3204
          %v3206 = vpop.f32.mrb[0].mxu0
          %v3207 = vadd.f32 %v2473, %v3206
          %3208 = vmatprep.mubr.bf16.mxu0 %v2325
          %3209 = vmatmul.mubr.bf16.gmra.mrb[0].mxu0 %v2324
          %v3210 = vpop.f32.mrb[0].mxu0
          %v3211 = vadd.f32 %v2469, %v3210
          %v3212 = vpop.f32.mrb[0].mxu0
          %v3213 = vadd.f32 %v2473, %v3212
          %v3214 = vpop.f32.mrb[0].mxu0
          %v3215 = vadd.f32 %v2469, %v3214
          %v3216 = vpop.f32.mrb[0].mxu0
          %v3217 = vadd.f32 %v2473, %v3216
          %3218 = vmatprep.mubr.bf16.mxu0 %v2329
          %3219 = vmatmul.mubr.bf16.gmra.mrb[0].mxu0 %v2328
          %v3220 = vpop.f32.mrb[0].mxu0
          %v3221 = vadd.f32 %v2469, %v3220
          %v3222 = vpop.f32.mrb[0].mxu0
          %v3223 = vadd.f32 %v2473, %v3222
          %v3224 = vpop.f32.mrb[0].mxu0
          %v3225 = vadd.f32 %v2469, %v3224
          %v3226 = vpop.f32.mrb[0].mxu0
          %v3227 = vadd.f32 %v2473, %v3226
          %3228 = vmatprep.mubr.bf16.mxu0 %v2333
          %3229 = vmatmul.mubr.bf16.gmra.mrb[0].mxu0 %v2332
          %v3230 = vpop.f32.mrb[0].mxu0
          %v3231 = vadd.f32 %v2469, %v3230
          %v3232 = vpop.f32.mrb[0].mxu0
          %v3233 = vadd.f32 %v2473, %v3232
          %v3234 = vpop.f32.mrb[0].mxu0
          %v3235 = vadd.f32 %v2469, %v3234
          %v3236 = vpop.f32.mrb[0].mxu0
          %v3237 = vadd.f32 %v2473, %v3236
          %3238 = vdwg.mxu0
          %3239 = vmatprep.subr.bf16.mxu0 %v2935
          %3240 = vmatpush1.bf16.msra.mxu0 %v2934
          %3241 = vmatprep.subr.bf16.mxu0 %v2939
          %3242 = vmatpush1.bf16.msra.mxu0 %v2938
          %3243 = vmatprep.subr.bf16.mxu0 %v2943
          %3244 = vmatpush1.bf16.msra.mxu0 %v2942
          %3245 = vmatprep.subr.bf16.mxu0 %v2947
          %3246 = vmatpush1.bf16.msra.mxu0 %v2946
          %3247 = vmatprep.subr.bf16.mxu0 %v2951
          %3248 = vmatpush1.bf16.msra.mxu0 %v2950
          %3249 = vmatprep.subr.bf16.mxu0 %v2955
          %3250 = vmatpush1.bf16.msra.mxu0 %v2954
          %3251 = vmatprep.subr.bf16.mxu0 %v2959
          %3252 = vmatpush1.bf16.msra.mxu0 %v2958
          %3253 = vmatprep.subr.bf16.mxu0 %v2963
          %3254 = vmatpush1.bf16.msra.mxu0 %v2962
          %3255 = vmatprep.subr.bf16.mxu0 %v2967
          %3256 = vmatpush1.bf16.msra.mxu0 %v2966
          %3257 = vmatprep.subr.bf16.mxu0 %v2971
          %3258 = vmatpush1.bf16.msra.mxu0 %v2970
          %3259 = vmatprep.subr.bf16.mxu0 %v2975
          %3260 = vmatpush1.bf16.msra.mxu0 %v2974
          %3261 = vmatprep.subr.bf16.mxu0 %v2979
          %3262 = vmatpush1.bf16.msra.mxu0 %v2978
          %3263 = vmatprep.subr.bf16.mxu0 %v2983
          %3264 = vmatpush1.bf16.msra.mxu0 %v2982
          %3265 = vmatprep.subr.bf16.mxu0 %v2987
          %3266 = vmatpush1.bf16.msra.mxu0 %v2986
          %3267 = vmatprep.subr.bf16.mxu0 %v2991
          %3268 = vmatpush1.bf16.msra.mxu0 %v2990
          %3269 = vmatprep.subr.bf16.mxu0 %v2995
          %3270 = vmatpush1.bf16.msra.mxu0 %v2994
          %3271 = vmatprep.mubr.bf16.mxu0 %v2307
          %3272 = vmatmul.mubr.bf16.gmra.mrb[0].mxu0 %v2306
          %v3273 = vpop.f32.mrb[0].mxu0
          %v3274 = vadd.f32 %v3161, %v3273
          %v3275 = vpop.f32.mrb[0].mxu0
          %v3276 = vadd.f32 %v3163, %v3275
          %v3277 = vpop.f32.mrb[0].mxu0
          %v3278 = vadd.f32 %v3165, %v3277
          %v3279 = vpop.f32.mrb[0].mxu0
          %v3280 = vadd.f32 %v3167, %v3279
          %3281 = vmatprep.mubr.bf16.mxu0 %v2311
          %3282 = vmatmul.mubr.bf16.gmra.mrb[0].mxu0 %v2310
          %v3283 = vpop.f32.mrb[0].mxu0
          %v3284 = vadd.f32 %v3171, %v3283
          %v3285 = vpop.f32.mrb[0].mxu0
          %v3286 = vadd.f32 %v3173, %v3285
          %v3287 = vpop.f32.mrb[0].mxu0
          %v3288 = vadd.f32 %v3175, %v3287
          %v3289 = vpop.f32.mrb[0].mxu0
          %v3290 = vadd.f32 %v3177, %v3289
          %3291 = vmatprep.mubr.bf16.mxu0 %v2315
          %3292 = vmatmul.mubr.bf16.gmra.mrb[0].mxu0 %v2314
          %v3293 = vpop.f32.mrb[0].mxu0
          %v3294 = vadd.f32 %v3181, %v3293
          %v3295 = vpop.f32.mrb[0].mxu0
          %v3296 = vadd.f32 %v3183, %v3295
          %v3297 = vpop.f32.mrb[0].mxu0
          %v3298 = vadd.f32 %v3185, %v3297
          %v3299 = vpop.f32.mrb[0].mxu0
          %v3300 = vadd.f32 %v3187, %v3299
          %3301 = vmatprep.mubr.bf16.mxu0 %v2319
          %3302 = vmatmul.mubr.bf16.gmra.mrb[0].mxu0 %v2318
          %v3303 = vpop.f32.mrb[0].mxu0
          %v3304 = vadd.f32 %v3191, %v3303
          %v3305 = vpop.f32.mrb[0].mxu0
          %v3306 = vadd.f32 %v3193, %v3305
          %v3307 = vpop.f32.mrb[0].mxu0
          %v3308 = vadd.f32 %v3195, %v3307
          %v3309 = vpop.f32.mrb[0].mxu0
          %v3310 = vadd.f32 %v3197, %v3309
          %3311 = vmatprep.mubr.bf16.mxu0 %v2323
          %3312 = vmatmul.mubr.bf16.gmra.mrb[0].mxu0 %v2322
          %v3313 = vpop.f32.mrb[0].mxu0
          %v3314 = vadd.f32 %v3201, %v3313
          %v3315 = vpop.f32.mrb[0].mxu0
          %v3316 = vadd.f32 %v3203, %v3315
          %v3317 = vpop.f32.mrb[0].mxu0
          %v3318 = vadd.f32 %v3205, %v3317
          %v3319 = vpop.f32.mrb[0].mxu0
          %v3320 = vadd.f32 %v3207, %v3319
          %3321 = vmatprep.mubr.bf16.mxu0 %v2327
          %3322 = vmatmul.mubr.bf16.gmra.mrb[0].mxu0 %v2326
          %v3323 = vpop.f32.mrb[0].mxu0
          %v3324 = vadd.f32 %v3211, %v3323
          %v3325 = vpop.f32.mrb[0].mxu0
          %v3326 = vadd.f32 %v3213, %v3325
          %v3327 = vpop.f32.mrb[0].mxu0
          %v3328 = vadd.f32 %v3215, %v3327
          %v3329 = vpop.f32.mrb[0].mxu0
          %v3330 = vadd.f32 %v3217, %v3329
          %3331 = vmatprep.mubr.bf16.mxu0 %v2331
          %3332 = vmatmul.mubr.bf16.gmra.mrb[0].mxu0 %v2330
          %v3333 = vpop.f32.mrb[0].mxu0
          %v3334 = vadd.f32 %v3221, %v3333
          %v3335 = vpop.f32.mrb[0].mxu0
          %v3336 = vadd.f32 %v3223, %v3335
          %v3337 = vpop.f32.mrb[0].mxu0
          %v3338 = vadd.f32 %v3225, %v3337
          %v3339 = vpop.f32.mrb[0].mxu0
          %v3340 = vadd.f32 %v3227, %v3339
          %3341 = vmatprep.mubr.bf16.mxu0 %v2335
          %3342 = vmatmul.mubr.bf16.gmra.mrb[0].mxu0 %v2334
          %v3343 = vpop.f32.mrb[0].mxu0
          %v3344 = vadd.f32 %v3231, %v3343
          %v3345 = vpop.f32.mrb[0].mxu0
          %v3346 = vadd.f32 %v3233, %v3345
          %v3347 = vpop.f32.mrb[0].mxu0
          %v3348 = vadd.f32 %v3235, %v3347
          %v3349 = vpop.f32.mrb[0].mxu0
          %v3350 = vadd.f32 %v3237, %v3349
          %3351 = vdwg.mxu0
          %3352 = vmatprep.subr.bf16.mxu0 %v2873
          %3353 = vmatpush1.bf16.msra.mxu0 %v2872
          %3354 = vmatprep.subr.bf16.mxu0 %v2877
          %3355 = vmatpush1.bf16.msra.mxu0 %v2876
          %3356 = vmatprep.subr.bf16.mxu0 %v2881
          %3357 = vmatpush1.bf16.msra.mxu0 %v2880
          %3358 = vmatprep.subr.bf16.mxu0 %v2885
          %3359 = vmatpush1.bf16.msra.mxu0 %v2884
          %3360 = vmatprep.subr.bf16.mxu0 %v2889
          %3361 = vmatpush1.bf16.msra.mxu0 %v2888
          %3362 = vmatprep.subr.bf16.mxu0 %v2893
          %3363 = vmatpush1.bf16.msra.mxu0 %v2892
          %3364 = vmatprep.subr.bf16.mxu0 %v2897
          %3365 = vmatpush1.bf16.msra.mxu0 %v2896
          %3366 = vmatprep.subr.bf16.mxu0 %v2901
          %3367 = vmatpush1.bf16.msra.mxu0 %v2900
          %3368 = vmatprep.subr.bf16.mxu0 %v2905
          %3369 = vmatpush1.bf16.msra.mxu0 %v2904
          %3370 = vmatprep.subr.bf16.mxu0 %v2909
          %3371 = vmatpush1.bf16.msra.mxu0 %v2908
          %3372 = vmatprep.subr.bf16.mxu0 %v2913
          %3373 = vmatpush1.bf16.msra.mxu0 %v2912
          %3374 = vmatprep.subr.bf16.mxu0 %v2917
          %3375 = vmatpush1.bf16.msra.mxu0 %v2916
          %3376 = vmatprep.subr.bf16.mxu0 %v2921
          %3377 = vmatpush1.bf16.msra.mxu0 %v2920
          %3378 = vmatprep.subr.bf16.mxu0 %v2925
          %3379 = vmatpush1.bf16.msra.mxu0 %v2924
          %3380 = vmatprep.subr.bf16.mxu0 %v2929
          %3381 = vmatpush1.bf16.msra.mxu0 %v2928
          %3382 = vmatprep.subr.bf16.mxu0 %v2933
          %3383 = vmatpush1.bf16.msra.mxu0 %v2932
          %3384 = vmatprep.mubr.bf16.mxu0 %v2305
          %3385 = vmatmul.mubr.bf16.gmra.mrb[0].mxu0 %v2304
          %v3386 = vpop.f32.mrb[0].mxu0
          %v3387 = vadd.f32 %v2477, %v3386
          %v3388 = vpop.f32.mrb[0].mxu0
          %v3389 = vadd.f32 %v2481, %v3388
          %v3390 = vpop.f32.mrb[0].mxu0
          %v3391 = vadd.f32 %v2477, %v3390
          %v3392 = vpop.f32.mrb[0].mxu0
          %v3393 = vadd.f32 %v2481, %v3392
          %3394 = vmatprep.mubr.bf16.mxu0 %v2309
          %3395 = vmatmul.mubr.bf16.gmra.mrb[0].mxu0 %v2308
          %v3396 = vpop.f32.mrb[0].mxu0
          %v3397 = vadd.f32 %v2477, %v3396
          %v3398 = vpop.f32.mrb[0].mxu0
          %v3399 = vadd.f32 %v2481, %v3398
          %v3400 = vpop.f32.mrb[0].mxu0
          %v3401 = vadd.f32 %v2477, %v3400
          %v3402 = vpop.f32.mrb[0].mxu0
          %v3403 = vadd.f32 %v2481, %v3402
          %3404 = vmatprep.mubr.bf16.mxu0 %v2313
          %3405 = vmatmul.mubr.bf16.gmra.mrb[0].mxu0 %v2312
          %v3406 = vpop.f32.mrb[0].mxu0
          %v3407 = vadd.f32 %v2477, %v3406
          %v3408 = vpop.f32.mrb[0].mxu0
          %v3409 = vadd.f32 %v2481, %v3408
          %v3410 = vpop.f32.mrb[0].mxu0
          %v3411 = vadd.f32 %v2477, %v3410
          %v3412 = vpop.f32.mrb[0].mxu0
          %v3413 = vadd.f32 %v2481, %v3412
          %3414 = vmatprep.mubr.bf16.mxu0 %v2317
          %3415 = vmatmul.mubr.bf16.gmra.mrb[0].mxu0 %v2316
          %v3416 = vpop.f32.mrb[0].mxu0
          %v3417 = vadd.f32 %v2477, %v3416
          %v3418 = vpop.f32.mrb[0].mxu0
          %v3419 = vadd.f32 %v2481, %v3418
          %v3420 = vpop.f32.mrb[0].mxu0
          %v3421 = vadd.f32 %v2477, %v3420
          %v3422 = vpop.f32.mrb[0].mxu0
          %v3423 = vadd.f32 %v2481, %v3422
          %3424 = vmatprep.mubr.bf16.mxu0 %v2321
          %3425 = vmatmul.mubr.bf16.gmra.mrb[0].mxu0 %v2320
          %v3426 = vpop.f32.mrb[0].mxu0
          %v3427 = vadd.f32 %v2477, %v3426
          %v3428 = vpop.f32.mrb[0].mxu0
          %v3429 = vadd.f32 %v2481, %v3428
          %v3430 = vpop.f32.mrb[0].mxu0
          %v3431 = vadd.f32 %v2477, %v3430
          %v3432 = vpop.f32.mrb[0].mxu0
          %v3433 = vadd.f32 %v2481, %v3432
          %3434 = vmatprep.mubr.bf16.mxu0 %v2325
          %3435 = vmatmul.mubr.bf16.gmra.mrb[0].mxu0 %v2324
          %v3436 = vpop.f32.mrb[0].mxu0
          %v3437 = vadd.f32 %v2477, %v3436
          %v3438 = vpop.f32.mrb[0].mxu0
          %v3439 = vadd.f32 %v2481, %v3438
          %v3440 = vpop.f32.mrb[0].mxu0
          %v3441 = vadd.f32 %v2477, %v3440
          %v3442 = vpop.f32.mrb[0].mxu0
          %v3443 = vadd.f32 %v2481, %v3442
          %3444 = vmatprep.mubr.bf16.mxu0 %v2329
          %3445 = vmatmul.mubr.bf16.gmra.mrb[0].mxu0 %v2328
          %v3446 = vpop.f32.mrb[0].mxu0
          %v3447 = vadd.f32 %v2477, %v3446
          %v3448 = vpop.f32.mrb[0].mxu0
          %v3449 = vadd.f32 %v2481, %v3448
          %v3450 = vpop.f32.mrb[0].mxu0
          %v3451 = vadd.f32 %v2477, %v3450
          %v3452 = vpop.f32.mrb[0].mxu0
          %v3453 = vadd.f32 %v2481, %v3452
          %3454 = vmatprep.mubr.bf16.mxu0 %v2333
          %3455 = vmatmul.mubr.bf16.gmra.mrb[0].mxu0 %v2332
          %v3456 = vpop.f32.mrb[0].mxu0
          %v3457 = vadd.f32 %v2477, %v3456
          %v3458 = vpop.f32.mrb[0].mxu0
          %v3459 = vadd.f32 %v2481, %v3458
          %v3460 = vpop.f32.mrb[0].mxu0
          %v3461 = vadd.f32 %v2477, %v3460
          %v3462 = vpop.f32.mrb[0].mxu0
          %v3463 = vadd.f32 %v2481, %v3462
          %3464 = vdwg.mxu0
          %3465 = vmatprep.subr.bf16.mxu0 %v2937
          %3466 = vmatpush1.bf16.msra.mxu0 %v2936
          %3467 = vmatprep.subr.bf16.mxu0 %v2941
          %3468 = vmatpush1.bf16.msra.mxu0 %v2940
          %3469 = vmatprep.subr.bf16.mxu0 %v2945
          %3470 = vmatpush1.bf16.msra.mxu0 %v2944
          %3471 = vmatprep.subr.bf16.mxu0 %v2949
          %3472 = vmatpush1.bf16.msra.mxu0 %v2948
          %3473 = vmatprep.subr.bf16.mxu0 %v2953
          %3474 = vmatpush1.bf16.msra.mxu0 %v2952
          %3475 = vmatprep.subr.bf16.mxu0 %v2957
          %3476 = vmatpush1.bf16.msra.mxu0 %v2956
          %3477 = vmatprep.subr.bf16.mxu0 %v2961
          %3478 = vmatpush1.bf16.msra.mxu0 %v2960
          %3479 = vmatprep.subr.bf16.mxu0 %v2965
          %3480 = vmatpush1.bf16.msra.mxu0 %v2964
          %3481 = vmatprep.subr.bf16.mxu0 %v2969
          %3482 = vmatpush1.bf16.msra.mxu0 %v2968
          %3483 = vmatprep.subr.bf16.mxu0 %v2973
          %3484 = vmatpush1.bf16.msra.mxu0 %v2972
          %3485 = vmatprep.subr.bf16.mxu0 %v2977
          %3486 = vmatpush1.bf16.msra.mxu0 %v2976
          %3487 = vmatprep.subr.bf16.mxu0 %v2981
          %3488 = vmatpush1.bf16.msra.mxu0 %v2980
          %3489 = vmatprep.subr.bf16.mxu0 %v2985
          %3490 = vmatpush1.bf16.msra.mxu0 %v2984
          %3491 = vmatprep.subr.bf16.mxu0 %v2989
          %3492 = vmatpush1.bf16.msra.mxu0 %v2988
          %3493 = vmatprep.subr.bf16.mxu0 %v2993
          %3494 = vmatpush1.bf16.msra.mxu0 %v2992
          %3495 = vmatprep.subr.bf16.mxu0 %v2997
          %3496 = vmatpush1.bf16.msra.mxu0 %v2996
          %3497 = vmatprep.mubr.bf16.mxu0 %v2307
          %3498 = vmatmul.mubr.bf16.gmra.mrb[0].mxu0 %v2306
          %v3499 = vpop.f32.mrb[0].mxu0
          %v3500 = vadd.f32 %v3387, %v3499
          %v3501 = vpop.f32.mrb[0].mxu0
          %v3502 = vadd.f32 %v3389, %v3501
          %v3503 = vpop.f32.mrb[0].mxu0
          %v3504 = vadd.f32 %v3391, %v3503
          %v3505 = vpop.f32.mrb[0].mxu0
          %v3506 = vadd.f32 %v3393, %v3505
          %3507 = vmatprep.mubr.bf16.mxu0 %v2311
          %3508 = vmatmul.mubr.bf16.gmra.mrb[0].mxu0 %v2310
          %v3509 = vpop.f32.mrb[0].mxu0
          %v3510 = vadd.f32 %v3397, %v3509
          %v3511 = vpop.f32.mrb[0].mxu0
          %v3512 = vadd.f32 %v3399, %v3511
          %v3513 = vpop.f32.mrb[0].mxu0
          %v3514 = vadd.f32 %v3401, %v3513
          %v3515 = vpop.f32.mrb[0].mxu0
          %v3516 = vadd.f32 %v3403, %v3515
          %3517 = vmatprep.mubr.bf16.mxu0 %v2315
          %3518 = vmatmul.mubr.bf16.gmra.mrb[0].mxu0 %v2314
          %v3519 = vpop.f32.mrb[0].mxu0
          %v3520 = vadd.f32 %v3407, %v3519
          %v3521 = vpop.f32.mrb[0].mxu0
          %v3522 = vadd.f32 %v3409, %v3521
          %v3523 = vpop.f32.mrb[0].mxu0
          %v3524 = vadd.f32 %v3411, %v3523
          %v3525 = vpop.f32.mrb[0].mxu0
          %v3526 = vadd.f32 %v3413, %v3525
          %3527 = vmatprep.mubr.bf16.mxu0 %v2319
          %3528 = vmatmul.mubr.bf16.gmra.mrb[0].mxu0 %v2318
          %v3529 = vpop.f32.mrb[0].mxu0
          %v3530 = vadd.f32 %v3417, %v3529
          %v3531 = vpop.f32.mrb[0].mxu0
          %v3532 = vadd.f32 %v3419, %v3531
          %v3533 = vpop.f32.mrb[0].mxu0
          %v3534 = vadd.f32 %v3421, %v3533
          %v3535 = vpop.f32.mrb[0].mxu0
          %v3536 = vadd.f32 %v3423, %v3535
          %3537 = vmatprep.mubr.bf16.mxu0 %v2323
          %3538 = vmatmul.mubr.bf16.gmra.mrb[0].mxu0 %v2322
          %v3539 = vpop.f32.mrb[0].mxu0
          %v3540 = vadd.f32 %v3427, %v3539
          %v3541 = vpop.f32.mrb[0].mxu0
          %v3542 = vadd.f32 %v3429, %v3541
          %v3543 = vpop.f32.mrb[0].mxu0
          %v3544 = vadd.f32 %v3431, %v3543
          %v3545 = vpop.f32.mrb[0].mxu0
          %v3546 = vadd.f32 %v3433, %v3545
          %3547 = vmatprep.mubr.bf16.mxu0 %v2327
          %3548 = vmatmul.mubr.bf16.gmra.mrb[0].mxu0 %v2326
          %v3549 = vpop.f32.mrb[0].mxu0
          %v3550 = vadd.f32 %v3437, %v3549
          %v3551 = vpop.f32.mrb[0].mxu0
          %v3552 = vadd.f32 %v3439, %v3551
          %v3553 = vpop.f32.mrb[0].mxu0
          %v3554 = vadd.f32 %v3441, %v3553
          %v3555 = vpop.f32.mrb[0].mxu0
          %v3556 = vadd.f32 %v3443, %v3555
          %3557 = vmatprep.mubr.bf16.mxu0 %v2331
          %3558 = vmatmul.mubr.bf16.gmra.mrb[0].mxu0 %v2330
          %v3559 = vpop.f32.mrb[0].mxu0
          %v3560 = vadd.f32 %v3447, %v3559
          %v3561 = vpop.f32.mrb[0].mxu0
          %v3562 = vadd.f32 %v3449, %v3561
          %v3563 = vpop.f32.mrb[0].mxu0
          %v3564 = vadd.f32 %v3451, %v3563
          %v3565 = vpop.f32.mrb[0].mxu0
          %v3566 = vadd.f32 %v3453, %v3565
          %3567 = vmatprep.mubr.bf16.mxu0 %v2335
          %3568 = vmatmul.mubr.bf16.gmra.mrb[0].mxu0 %v2334
          %v3569 = vpop.f32.mrb[0].mxu0
          %v3570 = vadd.f32 %v3457, %v3569
          %v3571 = vpop.f32.mrb[0].mxu0
          %v3572 = vadd.f32 %v3459, %v3571
          %v3573 = vpop.f32.mrb[0].mxu0
          %v3574 = vadd.f32 %v3461, %v3573
          %v3575 = vpop.f32.mrb[0].mxu0
          %v3576 = vadd.f32 %v3463, %v3575
          %3577 = vdwg.mxu0
          %v3578 = vtanh.pop %v3274
          %v3579 = vtanh.pop %v3276
          %v3580 = vtanh.pop %v3500
          %v3581 = vtanh.pop %v3502
          %v3582 = vtanh.pop %v3278
          %v3583 = vtanh.pop %v3280
          %v3584 = vtanh.pop %v3504
          %v3585 = vtanh.pop %v3506
          %v3586 = vtanh.pop %v3284
          %v3587 = vtanh.pop %v3286
          %v3588 = vtanh.pop %v3510
          %v3589 = vtanh.pop %v3512
          %v3590 = vtanh.pop %v3288
          %v3591 = vtanh.pop %v3290
          %v3592 = vtanh.pop %v3514
          %v3593 = vtanh.pop %v3516
          %v3594 = vtanh.pop %v3294
          %v3595 = vtanh.pop %v3296
          %v3596 = vtanh.pop %v3520
          %v3597 = vtanh.pop %v3522
          %v3598 = vtanh.pop %v3298
          %v3599 = vtanh.pop %v3300
          %v3600 = vtanh.pop %v3524
          %v3601 = vtanh.pop %v3526
          %v3602 = vtanh.pop %v3304
          %v3603 = vtanh.pop %v3306
          %v3604 = vtanh.pop %v3530
          %v3605 = vtanh.pop %v3532
          %v3606 = vtanh.pop %v3308
          %v3607 = vtanh.pop %v3310
          %v3608 = vtanh.pop %v3534
          %v3609 = vtanh.pop %v3536
          %v3610 = vtanh.pop %v3314
          %v3611 = vtanh.pop %v3316
          %v3612 = vtanh.pop %v3540
          %v3613 = vtanh.pop %v3542
          %v3614 = vtanh.pop %v3318
          %v3615 = vtanh.pop %v3320
          %v3616 = vtanh.pop %v3544
          %v3617 = vtanh.pop %v3546
          %v3618 = vtanh.pop %v3324
          %v3619 = vtanh.pop %v3326
          %v3620 = vtanh.pop %v3550
          %v3621 = vtanh.pop %v3552
          %v3622 = vtanh.pop %v3328
          %v3623 = vtanh.pop %v3330
          %v3624 = vtanh.pop %v3554
          %v3625 = vtanh.pop %v3556
          %v3626 = vtanh.pop %v3334
          %v3627 = vtanh.pop %v3336
          %v3628 = vtanh.pop %v3560
          %v3629 = vtanh.pop %v3562
          %v3630 = vtanh.pop %v3338
          %v3631 = vtanh.pop %v3340
          %v3632 = vtanh.pop %v3564
          %v3633 = vtanh.pop %v3566
          %v3634 = vtanh.pop %v3344
          %v3635 = vtanh.pop %v3346
          %v3636 = vtanh.pop %v3570
          %v3637 = vtanh.pop %v3572
          %v3638 = vtanh.pop %v3348
          %v3639 = vtanh.pop %v3350
          %v3640 = vtanh.pop %v3574
          %v3641 = vtanh.pop %v3576
          %v3642 = vpack.c.bf16 %v3582, %v3578
          %v3643 = vpack.c.bf16 %v3583, %v3579
          %v3644 = vpack.c.bf16 %v3584, %v3580
          %v3645 = vpack.c.bf16 %v3585, %v3581
          %v3646 = vpack.c.bf16 %v3590, %v3586
          %v3647 = vpack.c.bf16 %v3591, %v3587
          %v3648 = vpack.c.bf16 %v3592, %v3588
          %v3649 = vpack.c.bf16 %v3593, %v3589
          %v3650 = vpack.c.bf16 %v3598, %v3594
          %v3651 = vpack.c.bf16 %v3599, %v3595
          %v3652 = vpack.c.bf16 %v3600, %v3596
          %v3653 = vpack.c.bf16 %v3601, %v3597
          %v3654 = vpack.c.bf16 %v3606, %v3602
          %v3655 = vpack.c.bf16 %v3607, %v3603
          %v3656 = vpack.c.bf16 %v3608, %v3604
          %v3657 = vpack.c.bf16 %v3609, %v3605
          %v3658 = vpack.c.bf16 %v3614, %v3610
          %v3659 = vpack.c.bf16 %v3615, %v3611
          %v3660 = vpack.c.bf16 %v3616, %v3612
          %v3661 = vpack.c.bf16 %v3617, %v3613
          %v3662 = vpack.c.bf16 %v3622, %v3618
          %v3663 = vpack.c.bf16 %v3623, %v3619
          %v3664 = vpack.c.bf16 %v3624, %v3620
          %v3665 = vpack.c.bf16 %v3625, %v3621
          %v3666 = vpack.c.bf16 %v3630, %v3626
          %v3667 = vpack.c.bf16 %v3631, %v3627
          %v3668 = vpack.c.bf16 %v3632, %v3628
          %v3669 = vpack.c.bf16 %v3633, %v3629
          %v3670 = vpack.c.bf16 %v3638, %v3634
          %v3671 = vpack.c.bf16 %v3639, %v3635
          %v3672 = vpack.c.bf16 %v3640, %v3636
          %v3673 = vpack.c.bf16 %v3641, %v3637
          %3674 = vst [vmem:[#allocation2] sm:$0xff] %v3642
          %3675 = vst [vmem:[#allocation2 + $0x8] sm:$0xff] %v3643
          %3676 = vst [vmem:[#allocation2 + $0x10] sm:$0xff] %v3644
          %3677 = vst [vmem:[#allocation2 + $0x18] sm:$0xff] %v3645
          %3678 = vst [vmem:[#allocation2 + $0x20] sm:$0xff] %v3646
          %3679 = vst [vmem:[#allocation2 + $0x28] sm:$0xff] %v3647
          %3680 = vst [vmem:[#allocation2 + $0x30] sm:$0xff] %v3648
          %3681 = vst [vmem:[#allocation2 + $0x38] sm:$0xff] %v3649
          %3682 = vst [vmem:[#allocation2 + $0x40] sm:$0xff] %v3650
          %3683 = vst [vmem:[#allocation2 + $0x48] sm:$0xff] %v3651
          %3684 = vst [vmem:[#allocation2 + $0x50] sm:$0xff] %v3652
          %3685 = vst [vmem:[#allocation2 + $0x58] sm:$0xff] %v3653
          %3686 = vst [vmem:[#allocation2 + $0x60] sm:$0xff] %v3654
          %3687 = vst [vmem:[#allocation2 + $0x68] sm:$0xff] %v3655
          %3688 = vst [vmem:[#allocation2 + $0x70] sm:$0xff] %v3656
          %3689 = vst [vmem:[#allocation2 + $0x78] sm:$0xff] %v3657
          %3690 = vst [vmem:[#allocation2 + $0x80] sm:$0xff] %v3658
          %3691 = vst [vmem:[#allocation2 + $0x88] sm:$0xff] %v3659
          %3692 = vst [vmem:[#allocation2 + $0x90] sm:$0xff] %v3660
          %3693 = vst [vmem:[#allocation2 + $0x98] sm:$0xff] %v3661
          %3694 = vst [vmem:[#allocation2 + $0xa0] sm:$0xff] %v3662
          %3695 = vst [vmem:[#allocation2 + $0xa8] sm:$0xff] %v3663
          %3696 = vst [vmem:[#allocation2 + $0xb0] sm:$0xff] %v3664
          %3697 = vst [vmem:[#allocation2 + $0xb8] sm:$0xff] %v3665
          %3698 = vst [vmem:[#allocation2 + $0xc0] sm:$0xff] %v3666
          %3699 = vst [vmem:[#allocation2 + $0xc8] sm:$0xff] %v3667
          %3700 = vst [vmem:[#allocation2 + $0xd0] sm:$0xff] %v3668
          %3701 = vst [vmem:[#allocation2 + $0xd8] sm:$0xff] %v3669
          %3702 = vst [vmem:[#allocation2 + $0xe0] sm:$0xff] %v3670
          %3703 = vst [vmem:[#allocation2 + $0xe8] sm:$0xff] %v3671
          %3704 = vst [vmem:[#allocation2 + $0xf0] sm:$0xff] %v3672
          %3705 = vst [vmem:[#allocation2 + $0xf8] sm:$0xff] %v3673
        $region108: #{tpu_custom_call.1} parent=63 // pred_fallthru
          _
        %v3706 = vld [vmem:[#allocation2] sm:$0xff]
        %v3707 = vld [vmem:[#allocation2 + $0x8] sm:$0xff]
        %v3708 = vld [vmem:[#allocation2 + $0x10] sm:$0xff]
        %v3709 = vld [vmem:[#allocation2 + $0x18] sm:$0xff]
        %v3710 = vld [vmem:[#allocation2 + $0x20] sm:$0xff]
        %v3711 = vld [vmem:[#allocation2 + $0x28] sm:$0xff]
        %v3712 = vld [vmem:[#allocation2 + $0x30] sm:$0xff]
        %v3713 = vld [vmem:[#allocation2 + $0x38] sm:$0xff]
        %v3714 = vld [vmem:[#allocation2 + $0x40] sm:$0xff]
        %v3715 = vld [vmem:[#allocation2 + $0x48] sm:$0xff]
        %v3716 = vld [vmem:[#allocation2 + $0x50] sm:$0xff]
        %v3717 = vld [vmem:[#allocation2 + $0x58] sm:$0xff]
        %v3718 = vld [vmem:[#allocation2 + $0x60] sm:$0xff]
        %v3719 = vld [vmem:[#allocation2 + $0x68] sm:$0xff]
        %v3720 = vld [vmem:[#allocation2 + $0x70] sm:$0xff]
        %v3721 = vld [vmem:[#allocation2 + $0x78] sm:$0xff]
        %v3722 = vld [vmem:[#allocation2 + $0x80] sm:$0xff]
        %v3723 = vld [vmem:[#allocation2 + $0x88] sm:$0xff]
        %v3724 = vld [vmem:[#allocation2 + $0x90] sm:$0xff]
        %v3725 = vld [vmem:[#allocation2 + $0x98] sm:$0xff]
        %v3726 = vld [vmem:[#allocation2 + $0xa0] sm:$0xff]
        %v3727 = vld [vmem:[#allocation2 + $0xa8] sm:$0xff]
        %v3728 = vld [vmem:[#allocation2 + $0xb0] sm:$0xff]
        %v3729 = vld [vmem:[#allocation2 + $0xb8] sm:$0xff]
        %v3730 = vld [vmem:[#allocation2 + $0xc0] sm:$0xff]
        %v3731 = vld [vmem:[#allocation2 + $0xc8] sm:$0xff]
        %v3732 = vld [vmem:[#allocation2 + $0xd0] sm:$0xff]
        %v3733 = vld [vmem:[#allocation2 + $0xd8] sm:$0xff]
        %v3734 = vld [vmem:[#allocation2 + $0xe0] sm:$0xff]
        %v3735 = vld [vmem:[#allocation2 + $0xe8] sm:$0xff]
        %v3736 = vld [vmem:[#allocation2 + $0xf0] sm:$0xff]
        %v3737 = vld [vmem:[#allocation2 + $0xf8] sm:$0xff]
        %v3738 = vld [vmem:[%s531] sm:$0xff]
        %v3739 = vld [vmem:[%s531 + $0x8] sm:$0xf]
        %v3740 = vld [vmem:[%s531 + $0xc] sm:$0xff]
        %v3741 = vld [vmem:[%s531 + $0x14] sm:$0xf]
        %v3742 = vld [vmem:[%s531 + $0x18] sm:$0xff]
        %v3743 = vld [vmem:[%s531 + $0x20] sm:$0xf]
        %v3744 = vld [vmem:[%s531 + $0x24] sm:$0xff]
        %v3745 = vld [vmem:[%s531 + $0x2c] sm:$0xf]
        %v3746 = vld [vmem:[%s531 + $0x30] sm:$0xff]
        %v3747 = vld [vmem:[%s531 + $0x38] sm:$0xf]
        %v3748 = vld [vmem:[%s531 + $0x3c] sm:$0xff]
        %v3749 = vld [vmem:[%s531 + $0x44] sm:$0xf]
        %v3750 = vld [vmem:[%s531 + $0x48] sm:$0xff]
        %v3751 = vld [vmem:[%s531 + $0x50] sm:$0xf]
        %v3752 = vld [vmem:[%s531 + $0x54] sm:$0xff]
        %v3753 = vld [vmem:[%s531 + $0x5c] sm:$0xf]
        %v3754 = vld [vmem:[%s531 + $0x60] sm:$0xff]
        %v3755 = vld [vmem:[%s531 + $0x68] sm:$0xf]
        %v3756 = vld [vmem:[%s531 + $0x6c] sm:$0xff]
        %v3757 = vld [vmem:[%s531 + $0x74] sm:$0xf]
        %v3758 = vld [vmem:[%s531 + $0x78] sm:$0xff]
        %v3759 = vld [vmem:[%s531 + $0x80] sm:$0xf]
        %v3760 = vld [vmem:[%s531 + $0x84] sm:$0xff]
        %v3761 = vld [vmem:[%s531 + $0x8c] sm:$0xf]
        %v3762 = vld [vmem:[%s531 + $0x90] sm:$0xff]
        %v3763 = vld [vmem:[%s531 + $0x98] sm:$0xf]
        %v3764 = vld [vmem:[%s531 + $0x9c] sm:$0xff]
        %v3765 = vld [vmem:[%s531 + $0xa4] sm:$0xf]
        %v3766 = vld [vmem:[%s531 + $0xa8] sm:$0xff]
        %v3767 = vld [vmem:[%s531 + $0xb0] sm:$0xf]
        %v3768 = vld [vmem:[%s531 + $0xb4] sm:$0xff]
        %v3769 = vld [vmem:[%s531 + $0xbc] sm:$0xf]
        %v3770 = vld [vmem:[%s531 + $0xc0] sm:$0xff]
        %v3771 = vld [vmem:[%s531 + $0xc8] sm:$0xf]
        %v3772 = vld [vmem:[%s531 + $0xcc] sm:$0xff]
        %v3773 = vld [vmem:[%s531 + $0xd4] sm:$0xf]
        %v3774 = vld [vmem:[%s531 + $0xd8] sm:$0xff]
        %v3775 = vld [vmem:[%s531 + $0xe0] sm:$0xf]
        %v3776 = vld [vmem:[%s531 + $0xe4] sm:$0xff]
        %v3777 = vld [vmem:[%s531 + $0xec] sm:$0xf]
        %v3778 = vld [vmem:[%s531 + $0xf0] sm:$0xff]
        %v3779 = vld [vmem:[%s531 + $0xf8] sm:$0xf]
        %v3780 = vld [vmem:[%s531 + $0xfc] sm:$0xff]
        %v3781 = vld [vmem:[%s531 + $0x104] sm:$0xf]
        %v3782 = vld [vmem:[%s531 + $0x108] sm:$0xff]
        %v3783 = vld [vmem:[%s531 + $0x110] sm:$0xf]
        %v3784 = vld [vmem:[%s531 + $0x114] sm:$0xff]
        %v3785 = vld [vmem:[%s531 + $0x11c] sm:$0xf]
        %v3786 = vld [vmem:[%s531 + $0x120] sm:$0xff]
        %v3787 = vld [vmem:[%s531 + $0x128] sm:$0xf]
        %v3788 = vld [vmem:[%s531 + $0x12c] sm:$0xff]
        %v3789 = vld [vmem:[%s531 + $0x134] sm:$0xf]
        %v3790 = vld [vmem:[%s531 + $0x138] sm:$0xff]
        %v3791 = vld [vmem:[%s531 + $0x140] sm:$0xf]
        %v3792 = vld [vmem:[%s531 + $0x144] sm:$0xff]
        %v3793 = vld [vmem:[%s531 + $0x14c] sm:$0xf]
        %v3794 = vld [vmem:[%s531 + $0x150] sm:$0xff]
        %v3795 = vld [vmem:[%s531 + $0x158] sm:$0xf]
        %v3796 = vld [vmem:[%s531 + $0x15c] sm:$0xff]
        %v3797 = vld [vmem:[%s531 + $0x164] sm:$0xf]
        %v3798 = vld [vmem:[%s531 + $0x168] sm:$0xff]
        %v3799 = vld [vmem:[%s531 + $0x170] sm:$0xf]
        %v3800 = vld [vmem:[%s531 + $0x174] sm:$0xff]
        %v3801 = vld [vmem:[%s531 + $0x17c] sm:$0xf]
        %v3802 = vld [vmem:[%s531 + $0x180] sm:$0xff]
        %v3803 = vld [vmem:[%s531 + $0x188] sm:$0xf]
        %v3804 = vld [vmem:[%s531 + $0x18c] sm:$0xff]
        %v3805 = vld [vmem:[%s531 + $0x194] sm:$0xf]
        %v3806 = vld [vmem:[%s531 + $0x198] sm:$0xff]
        %v3807 = vld [vmem:[%s531 + $0x1a0] sm:$0xf]
        %v3808 = vld [vmem:[%s531 + $0x1a4] sm:$0xff]
        %v3809 = vld [vmem:[%s531 + $0x1ac] sm:$0xf]
        %v3810 = vld [vmem:[%s531 + $0x1b0] sm:$0xff]
        %v3811 = vld [vmem:[%s531 + $0x1b8] sm:$0xf]
        %v3812 = vld [vmem:[%s531 + $0x1bc] sm:$0xff]
        %v3813 = vld [vmem:[%s531 + $0x1c4] sm:$0xf]
        %v3814 = vld [vmem:[%s531 + $0x1c8] sm:$0xff]
        %v3815 = vld [vmem:[%s531 + $0x1d0] sm:$0xf]
        %v3816 = vld [vmem:[%s531 + $0x1d4] sm:$0xff]
        %v3817 = vld [vmem:[%s531 + $0x1dc] sm:$0xf]
        %v3818 = vld [vmem:[%s531 + $0x1e0] sm:$0xff]
        %v3819 = vld [vmem:[%s531 + $0x1e8] sm:$0xf]
        %v3820 = vld [vmem:[%s531 + $0x1ec] sm:$0xff]
        %v3821 = vld [vmem:[%s531 + $0x1f4] sm:$0xf]
        %v3822 = vld [vmem:[%s531 + $0x1f8] sm:$0xff]
        %v3823 = vld [vmem:[%s531 + $0x200] sm:$0xf]
        %v3824 = vld [vmem:[%s531 + $0x204] sm:$0xff]
        %v3825 = vld [vmem:[%s531 + $0x20c] sm:$0xf]
        %v3826 = vld [vmem:[%s531 + $0x210] sm:$0xff]
        %v3827 = vld [vmem:[%s531 + $0x218] sm:$0xf]
        %v3828 = vld [vmem:[%s531 + $0x21c] sm:$0xff]
        %v3829 = vld [vmem:[%s531 + $0x224] sm:$0xf]
        %v3830 = vld [vmem:[%s531 + $0x228] sm:$0xff]
        %v3831 = vld [vmem:[%s531 + $0x230] sm:$0xf]
        %v3832 = vld [vmem:[%s531 + $0x234] sm:$0xff]
        %v3833 = vld [vmem:[%s531 + $0x23c] sm:$0xf]
        %v3834 = vld [vmem:[%s531 + $0x240] sm:$0xff]
        %v3835 = vld [vmem:[%s531 + $0x248] sm:$0xf]
        %v3836 = vld [vmem:[%s531 + $0x24c] sm:$0xff]
        %v3837 = vld [vmem:[%s531 + $0x254] sm:$0xf]
        %v3838 = vld [vmem:[%s531 + $0x258] sm:$0xff]
        %v3839 = vld [vmem:[%s531 + $0x260] sm:$0xf]
        %v3840 = vld [vmem:[%s531 + $0x264] sm:$0xff]
        %v3841 = vld [vmem:[%s531 + $0x26c] sm:$0xf]
        %v3842 = vld [vmem:[%s531 + $0x270] sm:$0xff]
        %v3843 = vld [vmem:[%s531 + $0x278] sm:$0xf]
        %v3844 = vld [vmem:[%s531 + $0x27c] sm:$0xff]
        %v3845 = vld [vmem:[%s531 + $0x284] sm:$0xf]
        %v3846 = vld [vmem:[%s531 + $0x288] sm:$0xff]
        %v3847 = vld [vmem:[%s531 + $0x290] sm:$0xf]
        %v3848 = vld [vmem:[%s531 + $0x294] sm:$0xff]
        %v3849 = vld [vmem:[%s531 + $0x29c] sm:$0xf]
        %v3850 = vld [vmem:[%s531 + $0x2a0] sm:$0xff]
        %v3851 = vld [vmem:[%s531 + $0x2a8] sm:$0xf]
        %v3852 = vld [vmem:[%s531 + $0x2ac] sm:$0xff]
        %v3853 = vld [vmem:[%s531 + $0x2b4] sm:$0xf]
        %v3854 = vld [vmem:[%s531 + $0x2b8] sm:$0xff]
        %v3855 = vld [vmem:[%s531 + $0x2c0] sm:$0xf]
        %v3856 = vld [vmem:[%s531 + $0x2c4] sm:$0xff]
        %v3857 = vld [vmem:[%s531 + $0x2cc] sm:$0xf]
        %v3858 = vld [vmem:[%s531 + $0x2d0] sm:$0xff]
        %v3859 = vld [vmem:[%s531 + $0x2d8] sm:$0xf]
        %v3860 = vld [vmem:[%s531 + $0x2dc] sm:$0xff]
        %v3861 = vld [vmem:[%s531 + $0x2e4] sm:$0xf]
        %v3862 = vld [vmem:[%s531 + $0x2e8] sm:$0xff]
        %v3863 = vld [vmem:[%s531 + $0x2f0] sm:$0xf]
        %v3864 = vld [vmem:[%s531 + $0x2f4] sm:$0xff]
        %v3865 = vld [vmem:[%s531 + $0x2fc] sm:$0xf]
        %v3866 = vld [vmem:[%s540] sm:$0x7]
        %v3868 = vlaneseq
        %v3869 = vshrl.u32 %v3868, 7
        %v3870 = vsub.s32 0, %v3869
        %v3871 = vrot.slane %v3866, %v3870
        %v3872 = vlaneseq
        %v3873 = vshrl.u32 %v3872, 7
        %v3874 = vsub.s32 1, %v3873
        %v3875 = vrot.slane %v3866, %v3874
        %v3876 = vlaneseq
        %v3877 = vshrl.u32 %v3876, 7
        %v3878 = vsub.s32 2, %v3877
        %v3879 = vrot.slane %v3866, %v3878
        %v4011 = vunpack.c.l.b16 %v3738
        %v4012 = vunpack.c.h.b16 %v3738
        %v4013 = vunpack.c.l.b16 %v3739
        %v4014 = vunpack.c.l.b16 %v3740
        %v4015 = vunpack.c.h.b16 %v3740
        %v4016 = vunpack.c.l.b16 %v3741
        %v4017 = vunpack.c.l.b16 %v3742
        %v4018 = vunpack.c.h.b16 %v3742
        %v4019 = vunpack.c.l.b16 %v3743
        %v4020 = vunpack.c.l.b16 %v3744
        %v4021 = vunpack.c.h.b16 %v3744
        %v4022 = vunpack.c.l.b16 %v3745
        %v4023 = vunpack.c.l.b16 %v3746
        %v4024 = vunpack.c.h.b16 %v3746
        %v4025 = vunpack.c.l.b16 %v3747
        %v4026 = vunpack.c.l.b16 %v3748
        %v4027 = vunpack.c.h.b16 %v3748
        %v4028 = vunpack.c.l.b16 %v3749
        %v4029 = vunpack.c.l.b16 %v3750
        %v4030 = vunpack.c.h.b16 %v3750
        %v4031 = vunpack.c.l.b16 %v3751
        %v4032 = vunpack.c.l.b16 %v3752
        %v4033 = vunpack.c.h.b16 %v3752
        %v4034 = vunpack.c.l.b16 %v3753
        %v4035 = vunpack.c.l.b16 %v3754
        %v4036 = vunpack.c.h.b16 %v3754
        %v4037 = vunpack.c.l.b16 %v3755
        %v4038 = vunpack.c.l.b16 %v3756
        %v4039 = vunpack.c.h.b16 %v3756
        %v4040 = vunpack.c.l.b16 %v3757
        %v4041 = vunpack.c.l.b16 %v3758
        %v4042 = vunpack.c.h.b16 %v3758
        %v4043 = vunpack.c.l.b16 %v3759
        %v4044 = vunpack.c.l.b16 %v3760
        %v4045 = vunpack.c.h.b16 %v3760
        %v4046 = vunpack.c.l.b16 %v3761
        %v4047 = vunpack.c.l.b16 %v3762
        %v4048 = vunpack.c.h.b16 %v3762
        %v4049 = vunpack.c.l.b16 %v3763
        %v4050 = vunpack.c.l.b16 %v3764
        %v4051 = vunpack.c.h.b16 %v3764
        %v4052 = vunpack.c.l.b16 %v3765
        %v4053 = vunpack.c.l.b16 %v3766
        %v4054 = vunpack.c.h.b16 %v3766
        %v4055 = vunpack.c.l.b16 %v3767
        %v4056 = vunpack.c.l.b16 %v3768
        %v4057 = vunpack.c.h.b16 %v3768
        %v4058 = vunpack.c.l.b16 %v3769
        %v4059 = vunpack.c.l.b16 %v3770
        %v4060 = vunpack.c.h.b16 %v3770
        %v4061 = vunpack.c.l.b16 %v3771
        %v4062 = vunpack.c.l.b16 %v3772
        %v4063 = vunpack.c.h.b16 %v3772
        %v4064 = vunpack.c.l.b16 %v3773
        %v4065 = vunpack.c.l.b16 %v3774
        %v4066 = vunpack.c.h.b16 %v3774
        %v4067 = vunpack.c.l.b16 %v3775
        %v4068 = vunpack.c.l.b16 %v3776
        %v4069 = vunpack.c.h.b16 %v3776
        %v4070 = vunpack.c.l.b16 %v3777
        %v4071 = vunpack.c.l.b16 %v3778
        %v4072 = vunpack.c.h.b16 %v3778
        %v4073 = vunpack.c.l.b16 %v3779
        %v4074 = vunpack.c.l.b16 %v3780
        %v4075 = vunpack.c.h.b16 %v3780
        %v4076 = vunpack.c.l.b16 %v3781
        %v4077 = vunpack.c.l.b16 %v3782
        %v4078 = vunpack.c.h.b16 %v3782
        %v4079 = vunpack.c.l.b16 %v3783
        %v4080 = vunpack.c.l.b16 %v3784
        %v4081 = vunpack.c.h.b16 %v3784
        %v4082 = vunpack.c.l.b16 %v3785
        %v4083 = vunpack.c.l.b16 %v3786
        %v4084 = vunpack.c.h.b16 %v3786
        %v4085 = vunpack.c.l.b16 %v3787
        %v4086 = vunpack.c.l.b16 %v3788
        %v4087 = vunpack.c.h.b16 %v3788
        %v4088 = vunpack.c.l.b16 %v3789
        %v4089 = vunpack.c.l.b16 %v3790
        %v4090 = vunpack.c.h.b16 %v3790
        %v4091 = vunpack.c.l.b16 %v3791
        %v4092 = vunpack.c.l.b16 %v3792
        %v4093 = vunpack.c.h.b16 %v3792
        %v4094 = vunpack.c.l.b16 %v3793
        %v4095 = vunpack.c.l.b16 %v3794
        %v4096 = vunpack.c.h.b16 %v3794
        %v4097 = vunpack.c.l.b16 %v3795
        %v4098 = vunpack.c.l.b16 %v3796
        %v4099 = vunpack.c.h.b16 %v3796
        %v4100 = vunpack.c.l.b16 %v3797
        %v4101 = vunpack.c.l.b16 %v3798
        %v4102 = vunpack.c.h.b16 %v3798
        %v4103 = vunpack.c.l.b16 %v3799
        %v4104 = vunpack.c.l.b16 %v3800
        %v4105 = vunpack.c.h.b16 %v3800
        %v4106 = vunpack.c.l.b16 %v3801
        %v4107 = vunpack.c.l.b16 %v3802
        %v4108 = vunpack.c.h.b16 %v3802
        %v4109 = vunpack.c.l.b16 %v3803
        %v4110 = vunpack.c.l.b16 %v3804
        %v4111 = vunpack.c.h.b16 %v3804
        %v4112 = vunpack.c.l.b16 %v3805
        %v4113 = vunpack.c.l.b16 %v3806
        %v4114 = vunpack.c.h.b16 %v3806
        %v4115 = vunpack.c.l.b16 %v3807
        %v4116 = vunpack.c.l.b16 %v3808
        %v4117 = vunpack.c.h.b16 %v3808
        %v4118 = vunpack.c.l.b16 %v3809
        %v4119 = vunpack.c.l.b16 %v3810
        %v4120 = vunpack.c.h.b16 %v3810
        %v4121 = vunpack.c.l.b16 %v3811
        %v4122 = vunpack.c.l.b16 %v3812
        %v4123 = vunpack.c.h.b16 %v3812
        %v4124 = vunpack.c.l.b16 %v3813
        %v4125 = vunpack.c.l.b16 %v3814
        %v4126 = vunpack.c.h.b16 %v3814
        %v4127 = vunpack.c.l.b16 %v3815
        %v4128 = vunpack.c.l.b16 %v3816
        %v4129 = vunpack.c.h.b16 %v3816
        %v4130 = vunpack.c.l.b16 %v3817
        %v4131 = vunpack.c.l.b16 %v3818
        %v4132 = vunpack.c.h.b16 %v3818
        %v4133 = vunpack.c.l.b16 %v3819
        %v4134 = vunpack.c.l.b16 %v3820
        %v4135 = vunpack.c.h.b16 %v3820
        %v4136 = vunpack.c.l.b16 %v3821
        %v4137 = vunpack.c.l.b16 %v3822
        %v4138 = vunpack.c.h.b16 %v3822
        %v4139 = vunpack.c.l.b16 %v3823
        %v4140 = vunpack.c.l.b16 %v3824
        %v4141 = vunpack.c.h.b16 %v3824
        %v4142 = vunpack.c.l.b16 %v3825
        %v4143 = vunpack.c.l.b16 %v3826
        %v4144 = vunpack.c.h.b16 %v3826
        %v4145 = vunpack.c.l.b16 %v3827
        %v4146 = vunpack.c.l.b16 %v3828
        %v4147 = vunpack.c.h.b16 %v3828
        %v4148 = vunpack.c.l.b16 %v3829
        %v4149 = vunpack.c.l.b16 %v3830
        %v4150 = vunpack.c.h.b16 %v3830
        %v4151 = vunpack.c.l.b16 %v3831
        %v4152 = vunpack.c.l.b16 %v3832
        %v4153 = vunpack.c.h.b16 %v3832
        %v4154 = vunpack.c.l.b16 %v3833
        %v4155 = vunpack.c.l.b16 %v3834
        %v4156 = vunpack.c.h.b16 %v3834
        %v4157 = vunpack.c.l.b16 %v3835
        %v4158 = vunpack.c.l.b16 %v3836
        %v4159 = vunpack.c.h.b16 %v3836
        %v4160 = vunpack.c.l.b16 %v3837
        %v4161 = vunpack.c.l.b16 %v3838
        %v4162 = vunpack.c.h.b16 %v3838
        %v4163 = vunpack.c.l.b16 %v3839
        %v4164 = vunpack.c.l.b16 %v3840
        %v4165 = vunpack.c.h.b16 %v3840
        %v4166 = vunpack.c.l.b16 %v3841
        %v4167 = vunpack.c.l.b16 %v3842
        %v4168 = vunpack.c.h.b16 %v3842
        %v4169 = vunpack.c.l.b16 %v3843
        %v4170 = vunpack.c.l.b16 %v3844
        %v4171 = vunpack.c.h.b16 %v3844
        %v4172 = vunpack.c.l.b16 %v3845
        %v4173 = vunpack.c.l.b16 %v3846
        %v4174 = vunpack.c.h.b16 %v3846
        %v4175 = vunpack.c.l.b16 %v3847
        %v4176 = vunpack.c.l.b16 %v3848
        %v4177 = vunpack.c.h.b16 %v3848
        %v4178 = vunpack.c.l.b16 %v3849
        %v4179 = vunpack.c.l.b16 %v3850
        %v4180 = vunpack.c.h.b16 %v3850
        %v4181 = vunpack.c.l.b16 %v3851
        %v4182 = vunpack.c.l.b16 %v3852
        %v4183 = vunpack.c.h.b16 %v3852
        %v4184 = vunpack.c.l.b16 %v3853
        %v4185 = vunpack.c.l.b16 %v3854
        %v4186 = vunpack.c.h.b16 %v3854
        %v4187 = vunpack.c.l.b16 %v3855
        %v4188 = vunpack.c.l.b16 %v3856
        %v4189 = vunpack.c.h.b16 %v3856
        %v4190 = vunpack.c.l.b16 %v3857
        %v4191 = vunpack.c.l.b16 %v3858
        %v4192 = vunpack.c.h.b16 %v3858
        %v4193 = vunpack.c.l.b16 %v3859
        %v4194 = vunpack.c.l.b16 %v3860
        %v4195 = vunpack.c.h.b16 %v3860
        %v4196 = vunpack.c.l.b16 %v3861
        %v4197 = vunpack.c.l.b16 %v3862
        %v4198 = vunpack.c.h.b16 %v3862
        %v4199 = vunpack.c.l.b16 %v3863
        %v4200 = vunpack.c.l.b16 %v3864
        %v4201 = vunpack.c.h.b16 %v3864
        %v4202 = vunpack.c.l.b16 %v3865
        %v4203 = vpack.c.b16 %v4014, %v4011
        %v4204 = vpack.c.b16 %v4015, %v4012
        %v4205 = vpack.c.b16 %v4016, %v4013
        %v4206 = vpack.c.b16 %v4020, %v4017
        %v4207 = vpack.c.b16 %v4021, %v4018
        %v4208 = vpack.c.b16 %v4022, %v4019
        %v4209 = vpack.c.b16 %v4026, %v4023
        %v4210 = vpack.c.b16 %v4027, %v4024
        %v4211 = vpack.c.b16 %v4028, %v4025
        %v4212 = vpack.c.b16 %v4032, %v4029
        %v4213 = vpack.c.b16 %v4033, %v4030
        %v4214 = vpack.c.b16 %v4034, %v4031
        %v4215 = vpack.c.b16 %v4038, %v4035
        %v4216 = vpack.c.b16 %v4039, %v4036
        %v4217 = vpack.c.b16 %v4040, %v4037
        %v4218 = vpack.c.b16 %v4044, %v4041
        %v4219 = vpack.c.b16 %v4045, %v4042
        %v4220 = vpack.c.b16 %v4046, %v4043
        %v4221 = vpack.c.b16 %v4050, %v4047
        %v4222 = vpack.c.b16 %v4051, %v4048
        %v4223 = vpack.c.b16 %v4052, %v4049
        %v4224 = vpack.c.b16 %v4056, %v4053
        %v4225 = vpack.c.b16 %v4057, %v4054
        %v4226 = vpack.c.b16 %v4058, %v4055
        %v4227 = vpack.c.b16 %v4062, %v4059
        %v4228 = vpack.c.b16 %v4063, %v4060
        %v4229 = vpack.c.b16 %v4064, %v4061
        %v4230 = vpack.c.b16 %v4068, %v4065
        %v4231 = vpack.c.b16 %v4069, %v4066
        %v4232 = vpack.c.b16 %v4070, %v4067
        %v4233 = vpack.c.b16 %v4074, %v4071
        %v4234 = vpack.c.b16 %v4075, %v4072
        %v4235 = vpack.c.b16 %v4076, %v4073
        %v4236 = vpack.c.b16 %v4080, %v4077
        %v4237 = vpack.c.b16 %v4081, %v4078
        %v4238 = vpack.c.b16 %v4082, %v4079
        %v4239 = vpack.c.b16 %v4086, %v4083
        %v4240 = vpack.c.b16 %v4087, %v4084
        %v4241 = vpack.c.b16 %v4088, %v4085
        %v4242 = vpack.c.b16 %v4092, %v4089
        %v4243 = vpack.c.b16 %v4093, %v4090
        %v4244 = vpack.c.b16 %v4094, %v4091
        %v4245 = vpack.c.b16 %v4098, %v4095
        %v4246 = vpack.c.b16 %v4099, %v4096
        %v4247 = vpack.c.b16 %v4100, %v4097
        %v4248 = vpack.c.b16 %v4104, %v4101
        %v4249 = vpack.c.b16 %v4105, %v4102
        %v4250 = vpack.c.b16 %v4106, %v4103
        %v4251 = vpack.c.b16 %v4110, %v4107
        %v4252 = vpack.c.b16 %v4111, %v4108
        %v4253 = vpack.c.b16 %v4112, %v4109
        %v4254 = vpack.c.b16 %v4116, %v4113
        %v4255 = vpack.c.b16 %v4117, %v4114
        %v4256 = vpack.c.b16 %v4118, %v4115
        %v4257 = vpack.c.b16 %v4122, %v4119
        %v4258 = vpack.c.b16 %v4123, %v4120
        %v4259 = vpack.c.b16 %v4124, %v4121
        %v4260 = vpack.c.b16 %v4128, %v4125
        %v4261 = vpack.c.b16 %v4129, %v4126
        %v4262 = vpack.c.b16 %v4130, %v4127
        %v4263 = vpack.c.b16 %v4134, %v4131
        %v4264 = vpack.c.b16 %v4135, %v4132
        %v4265 = vpack.c.b16 %v4136, %v4133
        %v4266 = vpack.c.b16 %v4140, %v4137
        %v4267 = vpack.c.b16 %v4141, %v4138
        %v4268 = vpack.c.b16 %v4142, %v4139
        %v4269 = vpack.c.b16 %v4146, %v4143
        %v4270 = vpack.c.b16 %v4147, %v4144
        %v4271 = vpack.c.b16 %v4148, %v4145
        %v4272 = vpack.c.b16 %v4152, %v4149
        %v4273 = vpack.c.b16 %v4153, %v4150
        %v4274 = vpack.c.b16 %v4154, %v4151
        %v4275 = vpack.c.b16 %v4158, %v4155
        %v4276 = vpack.c.b16 %v4159, %v4156
        %v4277 = vpack.c.b16 %v4160, %v4157
        %v4278 = vpack.c.b16 %v4164, %v4161
        %v4279 = vpack.c.b16 %v4165, %v4162
        %v4280 = vpack.c.b16 %v4166, %v4163
        %v4281 = vpack.c.b16 %v4170, %v4167
        %v4282 = vpack.c.b16 %v4171, %v4168
        %v4283 = vpack.c.b16 %v4172, %v4169
        %v4284 = vpack.c.b16 %v4176, %v4173
        %v4285 = vpack.c.b16 %v4177, %v4174
        %v4286 = vpack.c.b16 %v4178, %v4175
        %v4287 = vpack.c.b16 %v4182, %v4179
        %v4288 = vpack.c.b16 %v4183, %v4180
        %v4289 = vpack.c.b16 %v4184, %v4181
        %v4290 = vpack.c.b16 %v4188, %v4185
        %v4291 = vpack.c.b16 %v4189, %v4186
        %v4292 = vpack.c.b16 %v4190, %v4187
        %v4293 = vpack.c.b16 %v4194, %v4191
        %v4294 = vpack.c.b16 %v4195, %v4192
        %v4295 = vpack.c.b16 %v4196, %v4193
        %v4296 = vpack.c.b16 %v4200, %v4197
        %v4297 = vpack.c.b16 %v4201, %v4198
        %v4298 = vpack.c.b16 %v4202, %v4199
        %4395 = vmatprep.subr.bf16.mxu0 %v4204
        %4396 = vmatpush1.bf16.msra.mxu0 %v4203
        %4397 = vmatprep.subr.bf16.mxu0 %v4207
        %4398 = vmatpush1.bf16.msra.mxu0 %v4206
        %4399 = vmatprep.subr.bf16.mxu0 %v4210
        %4400 = vmatpush1.bf16.msra.mxu0 %v4209
        %4401 = vmatprep.subr.bf16.mxu0 %v4213
        %4402 = vmatpush1.bf16.msra.mxu0 %v4212
        %4403 = vmatprep.subr.bf16.mxu0 %v4216
        %4404 = vmatpush1.bf16.msra.mxu0 %v4215
        %4405 = vmatprep.subr.bf16.mxu0 %v4219
        %4406 = vmatpush1.bf16.msra.mxu0 %v4218
        %4407 = vmatprep.subr.bf16.mxu0 %v4222
        %4408 = vmatpush1.bf16.msra.mxu0 %v4221
        %4409 = vmatprep.subr.bf16.mxu0 %v4225
        %4410 = vmatpush1.bf16.msra.mxu0 %v4224
        %4411 = vmatprep.subr.bf16.mxu0 %v4228
        %4412 = vmatpush1.bf16.msra.mxu0 %v4227
        %4413 = vmatprep.subr.bf16.mxu0 %v4231
        %4414 = vmatpush1.bf16.msra.mxu0 %v4230
        %4415 = vmatprep.subr.bf16.mxu0 %v4234
        %4416 = vmatpush1.bf16.msra.mxu0 %v4233
        %4417 = vmatprep.subr.bf16.mxu0 %v4237
        %4418 = vmatpush1.bf16.msra.mxu0 %v4236
        %4419 = vmatprep.subr.bf16.mxu0 %v4240
        %4420 = vmatpush1.bf16.msra.mxu0 %v4239
        %4421 = vmatprep.subr.bf16.mxu0 %v4243
        %4422 = vmatpush1.bf16.msra.mxu0 %v4242
        %4423 = vmatprep.subr.bf16.mxu0 %v4246
        %4424 = vmatpush1.bf16.msra.mxu0 %v4245
        %4425 = vmatprep.subr.bf16.mxu0 %v4249
        %4426 = vmatpush1.bf16.msra.mxu0 %v4248
        %4427 = vmatprep.mubr.bf16.mxu0 %v3707
        %4428 = vmatmul.mubr.bf16.gmra.mrb[0].mxu0 %v3706
        %v4429 = vpop.f32.mrb[0].mxu0
        %v4430 = vadd.f32 %v3871, %v4429
        %v4431 = vpop.f32.mrb[0].mxu0
        %v4432 = vadd.f32 %v3875, %v4431
        %v4433 = vpop.f32.mrb[0].mxu0
        %v4434 = vadd.f32 %v3871, %v4433
        %v4435 = vpop.f32.mrb[0].mxu0
        %v4436 = vadd.f32 %v3875, %v4435
        %4437 = vmatprep.mubr.bf16.mxu0 %v3711
        %4438 = vmatmul.mubr.bf16.gmra.mrb[0].mxu0 %v3710
        %v4439 = vpop.f32.mrb[0].mxu0
        %v4440 = vadd.f32 %v3871, %v4439
        %v4441 = vpop.f32.mrb[0].mxu0
        %v4442 = vadd.f32 %v3875, %v4441
        %v4443 = vpop.f32.mrb[0].mxu0
        %v4444 = vadd.f32 %v3871, %v4443
        %v4445 = vpop.f32.mrb[0].mxu0
        %v4446 = vadd.f32 %v3875, %v4445
        %4447 = vmatprep.mubr.bf16.mxu0 %v3715
        %4448 = vmatmul.mubr.bf16.gmra.mrb[0].mxu0 %v3714
        %v4449 = vpop.f32.mrb[0].mxu0
        %v4450 = vadd.f32 %v3871, %v4449
        %v4451 = vpop.f32.mrb[0].mxu0
        %v4452 = vadd.f32 %v3875, %v4451
        %v4453 = vpop.f32.mrb[0].mxu0
        %v4454 = vadd.f32 %v3871, %v4453
        %v4455 = vpop.f32.mrb[0].mxu0
        %v4456 = vadd.f32 %v3875, %v4455
        %4457 = vmatprep.mubr.bf16.mxu0 %v3719
        %4458 = vmatmul.mubr.bf16.gmra.mrb[0].mxu0 %v3718
        %v4459 = vpop.f32.mrb[0].mxu0
        %v4460 = vadd.f32 %v3871, %v4459
        %v4461 = vpop.f32.mrb[0].mxu0
        %v4462 = vadd.f32 %v3875, %v4461
        %v4463 = vpop.f32.mrb[0].mxu0
        %v4464 = vadd.f32 %v3871, %v4463
        %v4465 = vpop.f32.mrb[0].mxu0
        %v4466 = vadd.f32 %v3875, %v4465
        %4467 = vmatprep.mubr.bf16.mxu0 %v3723
        %4468 = vmatmul.mubr.bf16.gmra.mrb[0].mxu0 %v3722
        %v4469 = vpop.f32.mrb[0].mxu0
        %v4470 = vadd.f32 %v3871, %v4469
        %v4471 = vpop.f32.mrb[0].mxu0
        %v4472 = vadd.f32 %v3875, %v4471
        %v4473 = vpop.f32.mrb[0].mxu0
        %v4474 = vadd.f32 %v3871, %v4473
        %v4475 = vpop.f32.mrb[0].mxu0
        %v4476 = vadd.f32 %v3875, %v4475
        %4477 = vmatprep.mubr.bf16.mxu0 %v3727
        %4478 = vmatmul.mubr.bf16.gmra.mrb[0].mxu0 %v3726
        %v4479 = vpop.f32.mrb[0].mxu0
        %v4480 = vadd.f32 %v3871, %v4479
        %v4481 = vpop.f32.mrb[0].mxu0
        %v4482 = vadd.f32 %v3875, %v4481
        %v4483 = vpop.f32.mrb[0].mxu0
        %v4484 = vadd.f32 %v3871, %v4483
        %v4485 = vpop.f32.mrb[0].mxu0
        %v4486 = vadd.f32 %v3875, %v4485
        %4487 = vmatprep.mubr.bf16.mxu0 %v3731
        %4488 = vmatmul.mubr.bf16.gmra.mrb[0].mxu0 %v3730
        %v4489 = vpop.f32.mrb[0].mxu0
        %v4490 = vadd.f32 %v3871, %v4489
        %v4491 = vpop.f32.mrb[0].mxu0
        %v4492 = vadd.f32 %v3875, %v4491
        %v4493 = vpop.f32.mrb[0].mxu0
        %v4494 = vadd.f32 %v3871, %v4493
        %v4495 = vpop.f32.mrb[0].mxu0
        %v4496 = vadd.f32 %v3875, %v4495
        %4497 = vmatprep.mubr.bf16.mxu0 %v3735
        %4498 = vmatmul.mubr.bf16.gmra.mrb[0].mxu0 %v3734
        %v4499 = vpop.f32.mrb[0].mxu0
        %v4500 = vadd.f32 %v3871, %v4499
        %v4501 = vpop.f32.mrb[0].mxu0
        %v4502 = vadd.f32 %v3875, %v4501
        %v4503 = vpop.f32.mrb[0].mxu0
        %v4504 = vadd.f32 %v3871, %v4503
        %v4505 = vpop.f32.mrb[0].mxu0
        %v4506 = vadd.f32 %v3875, %v4505
        %4507 = vdwg.mxu0
        %4508 = vmatprep.subr.bf16.mxu0 %v4252
        %4509 = vmatpush1.bf16.msra.mxu0 %v4251
        %4510 = vmatprep.subr.bf16.mxu0 %v4255
        %4511 = vmatpush1.bf16.msra.mxu0 %v4254
        %4512 = vmatprep.subr.bf16.mxu0 %v4258
        %4513 = vmatpush1.bf16.msra.mxu0 %v4257
        %4514 = vmatprep.subr.bf16.mxu0 %v4261
        %4515 = vmatpush1.bf16.msra.mxu0 %v4260
        %4516 = vmatprep.subr.bf16.mxu0 %v4264
        %4517 = vmatpush1.bf16.msra.mxu0 %v4263
        %4518 = vmatprep.subr.bf16.mxu0 %v4267
        %4519 = vmatpush1.bf16.msra.mxu0 %v4266
        %4520 = vmatprep.subr.bf16.mxu0 %v4270
        %4521 = vmatpush1.bf16.msra.mxu0 %v4269
        %4522 = vmatprep.subr.bf16.mxu0 %v4273
        %4523 = vmatpush1.bf16.msra.mxu0 %v4272
        %4524 = vmatprep.subr.bf16.mxu0 %v4276
        %4525 = vmatpush1.bf16.msra.mxu0 %v4275
        %4526 = vmatprep.subr.bf16.mxu0 %v4279
        %4527 = vmatpush1.bf16.msra.mxu0 %v4278
        %4528 = vmatprep.subr.bf16.mxu0 %v4282
        %4529 = vmatpush1.bf16.msra.mxu0 %v4281
        %4530 = vmatprep.subr.bf16.mxu0 %v4285
        %4531 = vmatpush1.bf16.msra.mxu0 %v4284
        %4532 = vmatprep.subr.bf16.mxu0 %v4288
        %4533 = vmatpush1.bf16.msra.mxu0 %v4287
        %4534 = vmatprep.subr.bf16.mxu0 %v4291
        %4535 = vmatpush1.bf16.msra.mxu0 %v4290
        %4536 = vmatprep.subr.bf16.mxu0 %v4294
        %4537 = vmatpush1.bf16.msra.mxu0 %v4293
        %4538 = vmatprep.subr.bf16.mxu0 %v4297
        %4539 = vmatpush1.bf16.msra.mxu0 %v4296
        %4540 = vmatprep.mubr.bf16.mxu0 %v3709
        %4541 = vmatmul.mubr.bf16.gmra.mrb[0].mxu0 %v3708
        %v4542 = vpop.f32.mrb[0].mxu0
        %v4543 = vadd.f32 %v4430, %v4542
        %v4544 = vpop.f32.mrb[0].mxu0
        %v4545 = vadd.f32 %v4432, %v4544
        %v4546 = vpop.f32.mrb[0].mxu0
        %v4547 = vadd.f32 %v4434, %v4546
        %v4548 = vpop.f32.mrb[0].mxu0
        %v4549 = vadd.f32 %v4436, %v4548
        %4550 = vmatprep.mubr.bf16.mxu0 %v3713
        %4551 = vmatmul.mubr.bf16.gmra.mrb[0].mxu0 %v3712
        %v4552 = vpop.f32.mrb[0].mxu0
        %v4553 = vadd.f32 %v4440, %v4552
        %v4554 = vpop.f32.mrb[0].mxu0
        %v4555 = vadd.f32 %v4442, %v4554
        %v4556 = vpop.f32.mrb[0].mxu0
        %v4557 = vadd.f32 %v4444, %v4556
        %v4558 = vpop.f32.mrb[0].mxu0
        %v4559 = vadd.f32 %v4446, %v4558
        %4560 = vmatprep.mubr.bf16.mxu0 %v3717
        %4561 = vmatmul.mubr.bf16.gmra.mrb[0].mxu0 %v3716
        %v4562 = vpop.f32.mrb[0].mxu0
        %v4563 = vadd.f32 %v4450, %v4562
        %v4564 = vpop.f32.mrb[0].mxu0
        %v4565 = vadd.f32 %v4452, %v4564
        %v4566 = vpop.f32.mrb[0].mxu0
        %v4567 = vadd.f32 %v4454, %v4566
        %v4568 = vpop.f32.mrb[0].mxu0
        %v4569 = vadd.f32 %v4456, %v4568
        %4570 = vmatprep.mubr.bf16.mxu0 %v3721
        %4571 = vmatmul.mubr.bf16.gmra.mrb[0].mxu0 %v3720
        %v4572 = vpop.f32.mrb[0].mxu0
        %v4573 = vadd.f32 %v4460, %v4572
        %v4574 = vpop.f32.mrb[0].mxu0
        %v4575 = vadd.f32 %v4462, %v4574
        %v4576 = vpop.f32.mrb[0].mxu0
        %v4577 = vadd.f32 %v4464, %v4576
        %v4578 = vpop.f32.mrb[0].mxu0
        %v4579 = vadd.f32 %v4466, %v4578
        %4580 = vmatprep.mubr.bf16.mxu0 %v3725
        %4581 = vmatmul.mubr.bf16.gmra.mrb[0].mxu0 %v3724
        %v4582 = vpop.f32.mrb[0].mxu0
        %v4583 = vadd.f32 %v4470, %v4582
        %v4584 = vpop.f32.mrb[0].mxu0
        %v4585 = vadd.f32 %v4472, %v4584
        %v4586 = vpop.f32.mrb[0].mxu0
        %v4587 = vadd.f32 %v4474, %v4586
        %v4588 = vpop.f32.mrb[0].mxu0
        %v4589 = vadd.f32 %v4476, %v4588
        %4590 = vmatprep.mubr.bf16.mxu0 %v3729
        %4591 = vmatmul.mubr.bf16.gmra.mrb[0].mxu0 %v3728
        %v4592 = vpop.f32.mrb[0].mxu0
        %v4593 = vadd.f32 %v4480, %v4592
        %v4594 = vpop.f32.mrb[0].mxu0
        %v4595 = vadd.f32 %v4482, %v4594
        %v4596 = vpop.f32.mrb[0].mxu0
        %v4597 = vadd.f32 %v4484, %v4596
        %v4598 = vpop.f32.mrb[0].mxu0
        %v4599 = vadd.f32 %v4486, %v4598
        %4600 = vmatprep.mubr.bf16.mxu0 %v3733
        %4601 = vmatmul.mubr.bf16.gmra.mrb[0].mxu0 %v3732
        %v4602 = vpop.f32.mrb[0].mxu0
        %v4603 = vadd.f32 %v4490, %v4602
        %v4604 = vpop.f32.mrb[0].mxu0
        %v4605 = vadd.f32 %v4492, %v4604
        %v4606 = vpop.f32.mrb[0].mxu0
        %v4607 = vadd.f32 %v4494, %v4606
        %v4608 = vpop.f32.mrb[0].mxu0
        %v4609 = vadd.f32 %v4496, %v4608
        %4610 = vmatprep.mubr.bf16.mxu0 %v3737
        %4611 = vmatmul.mubr.bf16.gmra.mrb[0].mxu0 %v3736
        %v4612 = vpop.f32.mrb[0].mxu0
        %v4613 = vadd.f32 %v4500, %v4612
        %v4614 = vpop.f32.mrb[0].mxu0
        %v4615 = vadd.f32 %v4502, %v4614
        %v4616 = vpop.f32.mrb[0].mxu0
        %v4617 = vadd.f32 %v4504, %v4616
        %v4618 = vpop.f32.mrb[0].mxu0
        %v4619 = vadd.f32 %v4506, %v4618
        %4620 = vdwg.mxu0
        %4621 = vmatprep.subr.bf16.mxu0 0
        %4622 = vmatpush1.bf16.msra.mxu0 %v4205
        %4623 = vmatprep.subr.bf16.mxu0 0
        %4624 = vmatpush1.bf16.msra.mxu0 %v4208
        %4625 = vmatprep.subr.bf16.mxu0 0
        %4626 = vmatpush1.bf16.msra.mxu0 %v4211
        %4627 = vmatprep.subr.bf16.mxu0 0
        %4628 = vmatpush1.bf16.msra.mxu0 %v4214
        %4629 = vmatprep.subr.bf16.mxu0 0
        %4630 = vmatpush1.bf16.msra.mxu0 %v4217
        %4631 = vmatprep.subr.bf16.mxu0 0
        %4632 = vmatpush1.bf16.msra.mxu0 %v4220
        %4633 = vmatprep.subr.bf16.mxu0 0
        %4634 = vmatpush1.bf16.msra.mxu0 %v4223
        %4635 = vmatprep.subr.bf16.mxu0 0
        %4636 = vmatpush1.bf16.msra.mxu0 %v4226
        %4637 = vmatprep.subr.bf16.mxu0 0
        %4638 = vmatpush1.bf16.msra.mxu0 %v4229
        %4639 = vmatprep.subr.bf16.mxu0 0
        %4640 = vmatpush1.bf16.msra.mxu0 %v4232
        %4641 = vmatprep.subr.bf16.mxu0 0
        %4642 = vmatpush1.bf16.msra.mxu0 %v4235
        %4643 = vmatprep.subr.bf16.mxu0 0
        %4644 = vmatpush1.bf16.msra.mxu0 %v4238
        %4645 = vmatprep.subr.bf16.mxu0 0
        %4646 = vmatpush1.bf16.msra.mxu0 %v4241
        %4647 = vmatprep.subr.bf16.mxu0 0
        %4648 = vmatpush1.bf16.msra.mxu0 %v4244
        %4649 = vmatprep.subr.bf16.mxu0 0
        %4650 = vmatpush1.bf16.msra.mxu0 %v4247
        %4651 = vmatprep.subr.bf16.mxu0 0
        %4652 = vmatpush1.bf16.msra.mxu0 %v4250
        %4653 = vmatprep.mubr.bf16.mxu0 %v3707
        %4654 = vmatmul.mubr.bf16.gmra.mrb[0].mxu0 %v3706
        %v4655 = vpop.f32.mrb[0].mxu0
        %v4656 = vadd.f32 %v3879, %v4655
        %v4657 = vpop.f32.mrb[0].mxu0
        %v4658 = vpop.f32.mrb[0].mxu0
        %v4659 = vadd.f32 %v3879, %v4658
        %v4660 = vpop.f32.mrb[0].mxu0
        %4661 = vmatprep.mubr.bf16.mxu0 %v3711
        %4662 = vmatmul.mubr.bf16.gmra.mrb[0].mxu0 %v3710
        %v4663 = vpop.f32.mrb[0].mxu0
        %v4664 = vadd.f32 %v3879, %v4663
        %v4665 = vpop.f32.mrb[0].mxu0
        %v4666 = vpop.f32.mrb[0].mxu0
        %v4667 = vadd.f32 %v3879, %v4666
        %v4668 = vpop.f32.mrb[0].mxu0
        %4669 = vmatprep.mubr.bf16.mxu0 %v3715
        %4670 = vmatmul.mubr.bf16.gmra.mrb[0].mxu0 %v3714
        %v4671 = vpop.f32.mrb[0].mxu0
        %v4672 = vadd.f32 %v3879, %v4671
        %v4673 = vpop.f32.mrb[0].mxu0
        %v4674 = vpop.f32.mrb[0].mxu0
        %v4675 = vadd.f32 %v3879, %v4674
        %v4676 = vpop.f32.mrb[0].mxu0
        %4677 = vmatprep.mubr.bf16.mxu0 %v3719
        %4678 = vmatmul.mubr.bf16.gmra.mrb[0].mxu0 %v3718
        %v4679 = vpop.f32.mrb[0].mxu0
        %v4680 = vadd.f32 %v3879, %v4679
        %v4681 = vpop.f32.mrb[0].mxu0
        %v4682 = vpop.f32.mrb[0].mxu0
        %v4683 = vadd.f32 %v3879, %v4682
        %v4684 = vpop.f32.mrb[0].mxu0
        %4685 = vmatprep.mubr.bf16.mxu0 %v3723
        %4686 = vmatmul.mubr.bf16.gmra.mrb[0].mxu0 %v3722
        %v4687 = vpop.f32.mrb[0].mxu0
        %v4688 = vadd.f32 %v3879, %v4687
        %v4689 = vpop.f32.mrb[0].mxu0
        %v4690 = vpop.f32.mrb[0].mxu0
        %v4691 = vadd.f32 %v3879, %v4690
        %v4692 = vpop.f32.mrb[0].mxu0
        %4693 = vmatprep.mubr.bf16.mxu0 %v3727
        %4694 = vmatmul.mubr.bf16.gmra.mrb[0].mxu0 %v3726
        %v4695 = vpop.f32.mrb[0].mxu0
        %v4696 = vadd.f32 %v3879, %v4695
        %v4697 = vpop.f32.mrb[0].mxu0
        %v4698 = vpop.f32.mrb[0].mxu0
        %v4699 = vadd.f32 %v3879, %v4698
        %v4700 = vpop.f32.mrb[0].mxu0
        %4701 = vmatprep.mubr.bf16.mxu0 %v3731
        %4702 = vmatmul.mubr.bf16.gmra.mrb[0].mxu0 %v3730
        %v4703 = vpop.f32.mrb[0].mxu0
        %v4704 = vadd.f32 %v3879, %v4703
        %v4705 = vpop.f32.mrb[0].mxu0
        %v4706 = vpop.f32.mrb[0].mxu0
        %v4707 = vadd.f32 %v3879, %v4706
        %v4708 = vpop.f32.mrb[0].mxu0
        %4709 = vmatprep.mubr.bf16.mxu0 %v3735
        %4710 = vmatmul.mubr.bf16.gmra.mrb[0].mxu0 %v3734
        %v4711 = vpop.f32.mrb[0].mxu0
        %v4712 = vadd.f32 %v3879, %v4711
        %v4713 = vpop.f32.mrb[0].mxu0
        %v4714 = vpop.f32.mrb[0].mxu0
        %v4715 = vadd.f32 %v3879, %v4714
        %v4716 = vpop.f32.mrb[0].mxu0
        %4717 = vdwg.mxu0
        %4718 = vmatprep.subr.bf16.mxu0 0
        %4719 = vmatpush1.bf16.msra.mxu0 %v4253
        %4720 = vmatprep.subr.bf16.mxu0 0
        %4721 = vmatpush1.bf16.msra.mxu0 %v4256
        %4722 = vmatprep.subr.bf16.mxu0 0
        %4723 = vmatpush1.bf16.msra.mxu0 %v4259
        %4724 = vmatprep.subr.bf16.mxu0 0
        %4725 = vmatpush1.bf16.msra.mxu0 %v4262
        %4726 = vmatprep.subr.bf16.mxu0 0
        %4727 = vmatpush1.bf16.msra.mxu0 %v4265
        %4728 = vmatprep.subr.bf16.mxu0 0
        %4729 = vmatpush1.bf16.msra.mxu0 %v4268
        %4730 = vmatprep.subr.bf16.mxu0 0
        %4731 = vmatpush1.bf16.msra.mxu0 %v4271
        %4732 = vmatprep.subr.bf16.mxu0 0
        %4733 = vmatpush1.bf16.msra.mxu0 %v4274
        %4734 = vmatprep.subr.bf16.mxu0 0
        %4735 = vmatpush1.bf16.msra.mxu0 %v4277
        %4736 = vmatprep.subr.bf16.mxu0 0
        %4737 = vmatpush1.bf16.msra.mxu0 %v4280
        %4738 = vmatprep.subr.bf16.mxu0 0
        %4739 = vmatpush1.bf16.msra.mxu0 %v4283
        %4740 = vmatprep.subr.bf16.mxu0 0
        %4741 = vmatpush1.bf16.msra.mxu0 %v4286
        %4742 = vmatprep.subr.bf16.mxu0 0
        %4743 = vmatpush1.bf16.msra.mxu0 %v4289
        %4744 = vmatprep.subr.bf16.mxu0 0
        %4745 = vmatpush1.bf16.msra.mxu0 %v4292
        %4746 = vmatprep.subr.bf16.mxu0 0
        %4747 = vmatpush1.bf16.msra.mxu0 %v4295
        %4748 = vmatprep.subr.bf16.mxu0 0
        %4749 = vmatpush1.bf16.msra.mxu0 %v4298
        %4750 = vmatprep.mubr.bf16.mxu0 %v3709
        %4751 = vmatmul.mubr.bf16.gmra.mrb[0].mxu0 %v3708
        %v4752 = vpop.f32.mrb[0].mxu0
        %v4753 = vadd.f32 %v4656, %v4752
        %v4754 = vpop.f32.mrb[0].mxu0
        %v4755 = vpop.f32.mrb[0].mxu0
        %v4756 = vadd.f32 %v4659, %v4755
        %v4757 = vpop.f32.mrb[0].mxu0
        %4758 = vmatprep.mubr.bf16.mxu0 %v3713
        %4759 = vmatmul.mubr.bf16.gmra.mrb[0].mxu0 %v3712
        %v4760 = vpop.f32.mrb[0].mxu0
        %v4761 = vadd.f32 %v4664, %v4760
        %v4762 = vpop.f32.mrb[0].mxu0
        %v4763 = vpop.f32.mrb[0].mxu0
        %v4764 = vadd.f32 %v4667, %v4763
        %v4765 = vpop.f32.mrb[0].mxu0
        %4766 = vmatprep.mubr.bf16.mxu0 %v3717
        %4767 = vmatmul.mubr.bf16.gmra.mrb[0].mxu0 %v3716
        %v4768 = vpop.f32.mrb[0].mxu0
        %v4769 = vadd.f32 %v4672, %v4768
        %v4770 = vpop.f32.mrb[0].mxu0
        %v4771 = vpop.f32.mrb[0].mxu0
        %v4772 = vadd.f32 %v4675, %v4771
        %v4773 = vpop.f32.mrb[0].mxu0
        %4774 = vmatprep.mubr.bf16.mxu0 %v3721
        %4775 = vmatmul.mubr.bf16.gmra.mrb[0].mxu0 %v3720
        %v4776 = vpop.f32.mrb[0].mxu0
        %v4777 = vadd.f32 %v4680, %v4776
        %v4778 = vpop.f32.mrb[0].mxu0
        %v4779 = vpop.f32.mrb[0].mxu0
        %v4780 = vadd.f32 %v4683, %v4779
        %v4781 = vpop.f32.mrb[0].mxu0
        %4782 = vmatprep.mubr.bf16.mxu0 %v3725
        %4783 = vmatmul.mubr.bf16.gmra.mrb[0].mxu0 %v3724
        %v4784 = vpop.f32.mrb[0].mxu0
        %v4785 = vadd.f32 %v4688, %v4784
        %v4786 = vpop.f32.mrb[0].mxu0
        %v4787 = vpop.f32.mrb[0].mxu0
        %v4788 = vadd.f32 %v4691, %v4787
        %v4789 = vpop.f32.mrb[0].mxu0
        %4790 = vmatprep.mubr.bf16.mxu0 %v3729
        %4791 = vmatmul.mubr.bf16.gmra.mrb[0].mxu0 %v3728
        %v4792 = vpop.f32.mrb[0].mxu0
        %v4793 = vadd.f32 %v4696, %v4792
        %v4794 = vpop.f32.mrb[0].mxu0
        %v4795 = vpop.f32.mrb[0].mxu0
        %v4796 = vadd.f32 %v4699, %v4795
        %v4797 = vpop.f32.mrb[0].mxu0
        %4798 = vmatprep.mubr.bf16.mxu0 %v3733
        %4799 = vmatmul.mubr.bf16.gmra.mrb[0].mxu0 %v3732
        %v4800 = vpop.f32.mrb[0].mxu0
        %v4801 = vadd.f32 %v4704, %v4800
        %v4802 = vpop.f32.mrb[0].mxu0
        %v4803 = vpop.f32.mrb[0].mxu0
        %v4804 = vadd.f32 %v4707, %v4803
        %v4805 = vpop.f32.mrb[0].mxu0
        %4806 = vmatprep.mubr.bf16.mxu0 %v3737
        %4807 = vmatmul.mubr.bf16.gmra.mrb[0].mxu0 %v3736
        %v4808 = vpop.f32.mrb[0].mxu0
        %v4809 = vadd.f32 %v4712, %v4808
        %v4810 = vpop.f32.mrb[0].mxu0
        %v4811 = vpop.f32.mrb[0].mxu0
        %v4812 = vadd.f32 %v4715, %v4811
        %v4813 = vpop.f32.mrb[0].mxu0
        %4814 = vdwg.mxu0
        %v4815 = vld [vmem:[%s621] sm:$0xff]
        %v4816 = vld [vmem:[%s621 + $0x8] sm:$0xff]
        %v4817 = vld [vmem:[%s621 + $0x10] sm:$0xff]
        %v4818 = vld [vmem:[%s621 + $0x18] sm:$0xff]
        %v4819 = vld [vmem:[%s621 + $0x20] sm:$0xff]
        %v4820 = vld [vmem:[%s621 + $0x28] sm:$0xff]
        %v4821 = vld [vmem:[%s621 + $0x30] sm:$0xff]
        %v4822 = vld [vmem:[%s621 + $0x38] sm:$0xff]
        %v4823 = vld [vmem:[%s621 + $0x40] sm:$0xff]
        %v4824 = vld [vmem:[%s621 + $0x48] sm:$0xff]
        %v4825 = vld [vmem:[%s621 + $0x50] sm:$0xff]
        %v4826 = vld [vmem:[%s621 + $0x58] sm:$0xff]
        %v4827 = vld [vmem:[%s621 + $0x60] sm:$0xff]
        %v4828 = vld [vmem:[%s621 + $0x68] sm:$0xff]
        %v4829 = vld [vmem:[%s621 + $0x70] sm:$0xff]
        %v4830 = vld [vmem:[%s621 + $0x78] sm:$0xff]
        %v4831 = vlaneseq
        %v4832 = vand.u32 %v4831, 127
        %v4833 = vadd.s32 %v4832, 128
        %v4834 = vadd.s32 %v4832, 256
        %s4835 = smul.u32 %s34, 384
        %v4836 = vstv %s4835
        %v4837 = vadd.s32 %v4832, %v4836
        %v4838 = vadd.s32 %v4833, %v4836
        %v4839 = vadd.s32 %v4834, %v4836
        %v4840 = vld [vmem:[%s549] sm:$0x7]
        %v4841 = vmul.f32 %v4815, 20.0
        %v4842 = vmul.f32 %v4816, 20.0
        %v4843 = vmul.f32 %v4817, 20.0
        %v4844 = vmul.f32 %v4818, 20.0
        %v4845 = vmul.f32 %v4819, 20.0
        %v4846 = vmul.f32 %v4820, 20.0
        %v4847 = vmul.f32 %v4821, 20.0
        %v4848 = vmul.f32 %v4822, 20.0
        %v4849 = vmul.f32 %v4823, 20.0
        %v4850 = vmul.f32 %v4824, 20.0
        %v4851 = vmul.f32 %v4825, 20.0
        %v4852 = vmul.f32 %v4826, 20.0
        %v4853 = vmul.f32 %v4827, 20.0
        %v4854 = vmul.f32 %v4828, 20.0
        %v4855 = vmul.f32 %v4829, 20.0
        %v4856 = vmul.f32 %v4830, 20.0
        %v4857 = vld [vmem:[%s558] sm:$0x7]
        %v4859 = vlaneseq
        %v4860 = vshrl.u32 %v4859, 7
        %v4861 = vsub.s32 0, %v4860
        %v4862 = vrot.slane %v4857, %v4861
        %v4863 = vlaneseq
        %v4864 = vshrl.u32 %v4863, 7
        %v4865 = vsub.s32 1, %v4864
        %v4866 = vrot.slane %v4857, %v4865
        %v4867 = vlaneseq
        %v4868 = vshrl.u32 %v4867, 7
        %v4869 = vsub.s32 2, %v4868
        %v4870 = vrot.slane %v4857, %v4869
        %v4874 = vadd.f32 %v4543, %v4862
        %v4875 = vadd.f32 %v4545, %v4866
        %v4876 = vadd.f32 %v4753, %v4870
        %v4877 = vadd.f32 %v4547, %v4862
        %v4878 = vadd.f32 %v4549, %v4866
        %v4879 = vadd.f32 %v4756, %v4870
        %v4880 = vadd.f32 %v4553, %v4862
        %v4881 = vadd.f32 %v4555, %v4866
        %v4882 = vadd.f32 %v4761, %v4870
        %v4883 = vadd.f32 %v4557, %v4862
        %v4884 = vadd.f32 %v4559, %v4866
        %v4885 = vadd.f32 %v4764, %v4870
        %v4886 = vadd.f32 %v4563, %v4862
        %v4887 = vadd.f32 %v4565, %v4866
        %v4888 = vadd.f32 %v4769, %v4870
        %v4889 = vadd.f32 %v4567, %v4862
        %v4890 = vadd.f32 %v4569, %v4866
        %v4891 = vadd.f32 %v4772, %v4870
        %v4892 = vadd.f32 %v4573, %v4862
        %v4893 = vadd.f32 %v4575, %v4866
        %v4894 = vadd.f32 %v4777, %v4870
        %v4895 = vadd.f32 %v4577, %v4862
        %v4896 = vadd.f32 %v4579, %v4866
        %v4897 = vadd.f32 %v4780, %v4870
        %v4898 = vadd.f32 %v4583, %v4862
        %v4899 = vadd.f32 %v4585, %v4866
        %v4900 = vadd.f32 %v4785, %v4870
        %v4901 = vadd.f32 %v4587, %v4862
        %v4902 = vadd.f32 %v4589, %v4866
        %v4903 = vadd.f32 %v4788, %v4870
        %v4904 = vadd.f32 %v4593, %v4862
        %v4905 = vadd.f32 %v4595, %v4866
        %v4906 = vadd.f32 %v4793, %v4870
        %v4907 = vadd.f32 %v4597, %v4862
        %v4908 = vadd.f32 %v4599, %v4866
        %v4909 = vadd.f32 %v4796, %v4870
        %v4910 = vadd.f32 %v4603, %v4862
        %v4911 = vadd.f32 %v4605, %v4866
        %v4912 = vadd.f32 %v4801, %v4870
        %v4913 = vadd.f32 %v4607, %v4862
        %v4914 = vadd.f32 %v4609, %v4866
        %v4915 = vadd.f32 %v4804, %v4870
        %v4916 = vadd.f32 %v4613, %v4862
        %v4917 = vadd.f32 %v4615, %v4866
        %v4918 = vadd.f32 %v4809, %v4870
        %v4919 = vadd.f32 %v4617, %v4862
        %v4920 = vadd.f32 %v4619, %v4866
        %v4921 = vadd.f32 %v4812, %v4870
        %4923 = vset.pattern.permute.xlu0 0
        %4924 = vperm.xlu0 %4923, %v4841
        %v4925 = vpop.permute.xlu0 %4924
        %4928 = vset.pattern.permute.xlu0 0
        %4929 = vperm.xlu0 %4928, %v4842
        %v4930 = vpop.permute.xlu0 %4929
        %4933 = vset.pattern.permute.xlu0 0
        %4934 = vperm.xlu0 %4933, %v4843
        %v4935 = vpop.permute.xlu0 %4934
        %4938 = vset.pattern.permute.xlu0 0
        %4939 = vperm.xlu0 %4938, %v4844
        %v4940 = vpop.permute.xlu0 %4939
        %4943 = vset.pattern.permute.xlu0 0
        %4944 = vperm.xlu0 %4943, %v4845
        %v4945 = vpop.permute.xlu0 %4944
        %4948 = vset.pattern.permute.xlu0 0
        %4949 = vperm.xlu0 %4948, %v4846
        %v4950 = vpop.permute.xlu0 %4949
        %4953 = vset.pattern.permute.xlu0 0
        %4954 = vperm.xlu0 %4953, %v4847
        %v4955 = vpop.permute.xlu0 %4954
        %4958 = vset.pattern.permute.xlu0 0
        %4959 = vperm.xlu0 %4958, %v4848
        %v4960 = vpop.permute.xlu0 %4959
        %4963 = vset.pattern.permute.xlu0 0
        %4964 = vperm.xlu0 %4963, %v4849
        %v4965 = vpop.permute.xlu0 %4964
        %4968 = vset.pattern.permute.xlu0 0
        %4969 = vperm.xlu0 %4968, %v4850
        %v4970 = vpop.permute.xlu0 %4969
        %4973 = vset.pattern.permute.xlu0 0
        %4974 = vperm.xlu0 %4973, %v4851
        %v4975 = vpop.permute.xlu0 %4974
        %4978 = vset.pattern.permute.xlu0 0
        %4979 = vperm.xlu0 %4978, %v4852
        %v4980 = vpop.permute.xlu0 %4979
        %4983 = vset.pattern.permute.xlu0 0
        %4984 = vperm.xlu0 %4983, %v4853
        %v4985 = vpop.permute.xlu0 %4984
        %4988 = vset.pattern.permute.xlu0 0
        %4989 = vperm.xlu0 %4988, %v4854
        %v4990 = vpop.permute.xlu0 %4989
        %4993 = vset.pattern.permute.xlu0 0
        %4994 = vperm.xlu0 %4993, %v4855
        %v4995 = vpop.permute.xlu0 %4994
        %4998 = vset.pattern.permute.xlu0 0
        %4999 = vperm.xlu0 %4998, %v4856
        %v5000 = vpop.permute.xlu0 %4999
        %v5002 = vmul.f32 %v4925, %v4874
        %v5003 = vmul.f32 %v4925, %v4875
        %v5004 = vmul.f32 %v4925, %v4876
        %v5005 = vmul.f32 %v4930, %v4877
        %v5006 = vmul.f32 %v4930, %v4878
        %v5007 = vmul.f32 %v4930, %v4879
        %v5008 = vmul.f32 %v4935, %v4880
        %v5009 = vmul.f32 %v4935, %v4881
        %v5010 = vmul.f32 %v4935, %v4882
        %v5011 = vmul.f32 %v4940, %v4883
        %v5012 = vmul.f32 %v4940, %v4884
        %v5013 = vmul.f32 %v4940, %v4885
        %v5014 = vmul.f32 %v4945, %v4886
        %v5015 = vmul.f32 %v4945, %v4887
        %v5016 = vmul.f32 %v4945, %v4888
        %v5017 = vmul.f32 %v4950, %v4889
        %v5018 = vmul.f32 %v4950, %v4890
        %v5019 = vmul.f32 %v4950, %v4891
        %v5020 = vmul.f32 %v4955, %v4892
        %v5021 = vmul.f32 %v4955, %v4893
        %v5022 = vmul.f32 %v4955, %v4894
        %v5023 = vmul.f32 %v4960, %v4895
        %v5024 = vmul.f32 %v4960, %v4896
        %v5025 = vmul.f32 %v4960, %v4897
        %v5026 = vmul.f32 %v4965, %v4898
        %v5027 = vmul.f32 %v4965, %v4899
        %v5028 = vmul.f32 %v4965, %v4900
        %v5029 = vmul.f32 %v4970, %v4901
        %v5030 = vmul.f32 %v4970, %v4902
        %v5031 = vmul.f32 %v4970, %v4903
        %v5032 = vmul.f32 %v4975, %v4904
        %v5033 = vmul.f32 %v4975, %v4905
        %v5034 = vmul.f32 %v4975, %v4906
        %v5035 = vmul.f32 %v4980, %v4907
        %v5036 = vmul.f32 %v4980, %v4908
        %v5037 = vmul.f32 %v4980, %v4909
        %v5038 = vmul.f32 %v4985, %v4910
        %v5039 = vmul.f32 %v4985, %v4911
        %v5040 = vmul.f32 %v4985, %v4912
        %v5041 = vmul.f32 %v4990, %v4913
        %v5042 = vmul.f32 %v4990, %v4914
        %v5043 = vmul.f32 %v4990, %v4915
        %v5044 = vmul.f32 %v4995, %v4916
        %v5045 = vmul.f32 %v4995, %v4917
        %v5046 = vmul.f32 %v4995, %v4918
        %v5047 = vmul.f32 %v5000, %v4919
        %v5048 = vmul.f32 %v5000, %v4920
        %v5049 = vmul.f32 %v5000, %v4921
        %v5051 = vlaneseq
        %v5052 = vshrl.u32 %v5051, 7
        %v5053 = vsub.s32 0, %v5052
        %v5054 = vrot.slane %v4840, %v5053
        %v5055 = vlaneseq
        %v5056 = vshrl.u32 %v5055, 7
        %v5057 = vsub.s32 1, %v5056
        %v5058 = vrot.slane %v4840, %v5057
        %v5059 = vlaneseq
        %v5060 = vshrl.u32 %v5059, 7
        %v5061 = vsub.s32 2, %v5060
        %v5062 = vrot.slane %v4840, %v5061
        %v5066 = vadd.f32 %v5054, %v5002
        %v5067 = vadd.f32 %v5058, %v5003
        %v5068 = vadd.f32 %v5062, %v5004
        %v5069 = vadd.f32 %v5054, %v5005
        %v5070 = vadd.f32 %v5058, %v5006
        %v5071 = vadd.f32 %v5062, %v5007
        %v5072 = vadd.f32 %v5054, %v5008
        %v5073 = vadd.f32 %v5058, %v5009
        %v5074 = vadd.f32 %v5062, %v5010
        %v5075 = vadd.f32 %v5054, %v5011
        %v5076 = vadd.f32 %v5058, %v5012
        %v5077 = vadd.f32 %v5062, %v5013
        %v5078 = vadd.f32 %v5054, %v5014
        %v5079 = vadd.f32 %v5058, %v5015
        %v5080 = vadd.f32 %v5062, %v5016
        %v5081 = vadd.f32 %v5054, %v5017
        %v5082 = vadd.f32 %v5058, %v5018
        %v5083 = vadd.f32 %v5062, %v5019
        %v5084 = vadd.f32 %v5054, %v5020
        %v5085 = vadd.f32 %v5058, %v5021
        %v5086 = vadd.f32 %v5062, %v5022
        %v5087 = vadd.f32 %v5054, %v5023
        %v5088 = vadd.f32 %v5058, %v5024
        %v5089 = vadd.f32 %v5062, %v5025
        %v5090 = vadd.f32 %v5054, %v5026
        %v5091 = vadd.f32 %v5058, %v5027
        %v5092 = vadd.f32 %v5062, %v5028
        %v5093 = vadd.f32 %v5054, %v5029
        %v5094 = vadd.f32 %v5058, %v5030
        %v5095 = vadd.f32 %v5062, %v5031
        %v5096 = vadd.f32 %v5054, %v5032
        %v5097 = vadd.f32 %v5058, %v5033
        %v5098 = vadd.f32 %v5062, %v5034
        %v5099 = vadd.f32 %v5054, %v5035
        %v5100 = vadd.f32 %v5058, %v5036
        %v5101 = vadd.f32 %v5062, %v5037
        %v5102 = vadd.f32 %v5054, %v5038
        %v5103 = vadd.f32 %v5058, %v5039
        %v5104 = vadd.f32 %v5062, %v5040
        %v5105 = vadd.f32 %v5054, %v5041
        %v5106 = vadd.f32 %v5058, %v5042
        %v5107 = vadd.f32 %v5062, %v5043
        %v5108 = vadd.f32 %v5054, %v5044
        %v5109 = vadd.f32 %v5058, %v5045
        %v5110 = vadd.f32 %v5062, %v5046
        %v5111 = vadd.f32 %v5054, %v5047
        %v5112 = vadd.f32 %v5058, %v5048
        %v5113 = vadd.f32 %v5062, %v5049
        %vm5114 = vcmp.lt.s32.totalorder %v4837, 2178
        %vm5115 = vcmp.lt.s32.totalorder %v4838, 2178
        %vm5116 = vcmp.lt.s32.totalorder %v4839, 2178
        %v5117 = vsel %vm5114, %v5066, %v4543
        %v5118 = vsel %vm5115, %v5067, %v4545
        %v5119 = vsel %vm5116, %v5068, %v4753
        %v5120 = vsel %vm5114, %v5069, %v4547
        %v5121 = vsel %vm5115, %v5070, %v4549
        %v5122 = vsel %vm5116, %v5071, %v4756
        %v5123 = vsel %vm5114, %v5072, %v4553
        %v5124 = vsel %vm5115, %v5073, %v4555
        %v5125 = vsel %vm5116, %v5074, %v4761
        %v5126 = vsel %vm5114, %v5075, %v4557
        %v5127 = vsel %vm5115, %v5076, %v4559
        %v5128 = vsel %vm5116, %v5077, %v4764
        %v5129 = vsel %vm5114, %v5078, %v4563
        %v5130 = vsel %vm5115, %v5079, %v4565
        %v5131 = vsel %vm5116, %v5080, %v4769
        %v5132 = vsel %vm5114, %v5081, %v4567
        %v5133 = vsel %vm5115, %v5082, %v4569
        %v5134 = vsel %vm5116, %v5083, %v4772
        %v5135 = vsel %vm5114, %v5084, %v4573
        %v5136 = vsel %vm5115, %v5085, %v4575
        %v5137 = vsel %vm5116, %v5086, %v4777
        %v5138 = vsel %vm5114, %v5087, %v4577
        %v5139 = vsel %vm5115, %v5088, %v4579
        %v5140 = vsel %vm5116, %v5089, %v4780
        %v5141 = vsel %vm5114, %v5090, %v4583
        %v5142 = vsel %vm5115, %v5091, %v4585
        %v5143 = vsel %vm5116, %v5092, %v4785
        %v5144 = vsel %vm5114, %v5093, %v4587
        %v5145 = vsel %vm5115, %v5094, %v4589
        %v5146 = vsel %vm5116, %v5095, %v4788
        %v5147 = vsel %vm5114, %v5096, %v4593
        %v5148 = vsel %vm5115, %v5097, %v4595
        %v5149 = vsel %vm5116, %v5098, %v4793
        %v5150 = vsel %vm5114, %v5099, %v4597
        %v5151 = vsel %vm5115, %v5100, %v4599
        %v5152 = vsel %vm5116, %v5101, %v4796
        %v5153 = vsel %vm5114, %v5102, %v4603
        %v5154 = vsel %vm5115, %v5103, %v4605
        %v5155 = vsel %vm5116, %v5104, %v4801
        %v5156 = vsel %vm5114, %v5105, %v4607
        %v5157 = vsel %vm5115, %v5106, %v4609
        %v5158 = vsel %vm5116, %v5107, %v4804
        %v5159 = vsel %vm5114, %v5108, %v4613
        %v5160 = vsel %vm5115, %v5109, %v4615
        %v5161 = vsel %vm5116, %v5110, %v4809
        %v5162 = vsel %vm5114, %v5111, %v4617
        %v5163 = vsel %vm5115, %v5112, %v4619
        %v5164 = vsel %vm5116, %v5113, %v4812
        %5165 = vst [vmem:[%s616] sm:$0xff] %v5117
        %5166 = vst [vmem:[%s616 + $0x8] sm:$0xff] %v5118
        %5167 = vst [vmem:[%s616 + $0x10] sm:$0xff] %v5119
        %5168 = vst [vmem:[%s616 + $0x18] sm:$0xff] %v5120
        %5169 = vst [vmem:[%s616 + $0x20] sm:$0xff] %v5121
        %5170 = vst [vmem:[%s616 + $0x28] sm:$0xff] %v5122
        %5171 = vst [vmem:[%s616 + $0x30] sm:$0xff] %v5123
        %5172 = vst [vmem:[%s616 + $0x38] sm:$0xff] %v5124
        %5173 = vst [vmem:[%s616 + $0x40] sm:$0xff] %v5125
        %5174 = vst [vmem:[%s616 + $0x48] sm:$0xff] %v5126
        %5175 = vst [vmem:[%s616 + $0x50] sm:$0xff] %v5127
        %5176 = vst [vmem:[%s616 + $0x58] sm:$0xff] %v5128
        %5177 = vst [vmem:[%s616 + $0x60] sm:$0xff] %v5129
        %5178 = vst [vmem:[%s616 + $0x68] sm:$0xff] %v5130
        %5179 = vst [vmem:[%s616 + $0x70] sm:$0xff] %v5131
        %5180 = vst [vmem:[%s616 + $0x78] sm:$0xff] %v5132
        %5181 = vst [vmem:[%s616 + $0x80] sm:$0xff] %v5133
        %5182 = vst [vmem:[%s616 + $0x88] sm:$0xff] %v5134
        %5183 = vst [vmem:[%s616 + $0x90] sm:$0xff] %v5135
        %5184 = vst [vmem:[%s616 + $0x98] sm:$0xff] %v5136
        %5185 = vst [vmem:[%s616 + $0xa0] sm:$0xff] %v5137
        %5186 = vst [vmem:[%s616 + $0xa8] sm:$0xff] %v5138
        %5187 = vst [vmem:[%s616 + $0xb0] sm:$0xff] %v5139
        %5188 = vst [vmem:[%s616 + $0xb8] sm:$0xff] %v5140
        %5189 = vst [vmem:[%s616 + $0xc0] sm:$0xff] %v5141
        %5190 = vst [vmem:[%s616 + $0xc8] sm:$0xff] %v5142
        %5191 = vst [vmem:[%s616 + $0xd0] sm:$0xff] %v5143
        %5192 = vst [vmem:[%s616 + $0xd8] sm:$0xff] %v5144
        %5193 = vst [vmem:[%s616 + $0xe0] sm:$0xff] %v5145
        %5194 = vst [vmem:[%s616 + $0xe8] sm:$0xff] %v5146
        %5195 = vst [vmem:[%s616 + $0xf0] sm:$0xff] %v5147
        %5196 = vst [vmem:[%s616 + $0xf8] sm:$0xff] %v5148
        %5197 = vst [vmem:[%s616 + $0x100] sm:$0xff] %v5149
        %5198 = vst [vmem:[%s616 + $0x108] sm:$0xff] %v5150
        %5199 = vst [vmem:[%s616 + $0x110] sm:$0xff] %v5151
        %5200 = vst [vmem:[%s616 + $0x118] sm:$0xff] %v5152
        %5201 = vst [vmem:[%s616 + $0x120] sm:$0xff] %v5153
        %5202 = vst [vmem:[%s616 + $0x128] sm:$0xff] %v5154
        %5203 = vst [vmem:[%s616 + $0x130] sm:$0xff] %v5155
        %5204 = vst [vmem:[%s616 + $0x138] sm:$0xff] %v5156
        %5205 = vst [vmem:[%s616 + $0x140] sm:$0xff] %v5157
        %5206 = vst [vmem:[%s616 + $0x148] sm:$0xff] %v5158
        %5207 = vst [vmem:[%s616 + $0x150] sm:$0xff] %v5159
        %5208 = vst [vmem:[%s616 + $0x158] sm:$0xff] %v5160
        %5209 = vst [vmem:[%s616 + $0x160] sm:$0xff] %v5161
        %5210 = vst [vmem:[%s616 + $0x168] sm:$0xff] %v5162
        %5211 = vst [vmem:[%s616 + $0x170] sm:$0xff] %v5163
        %5212 = vst [vmem:[%s616 + $0x178] sm:$0xff] %v5164
        %s5213 = sand.u32 %s307, 1
        %s5214 = scalar_lea.sflag [#allocation5], %s5213
        %s5215 = sand.u32 %s307, 1
        %s5216 = smul.addr %s5215, 384
        %s5217 = scalar_lea.vmem [#allocation18], %s5216
        // Predicated region
        $region109: #{tpu_custom_call.1} parent=63 // pred_check
          %p5218 = pneg %p317
        $region110: #{tpu_custom_call.1} parent=63 // pred_check_branch
          %5220 = sbr.rel (%p5218) target = $region112
        $region111: #{tpu_custom_call.1} parent=63 // pred_region
          %s5221 = smul.u32 16, %s33
          %s5222 = smul.u32 3, %s34
          %s5224 = ssub.s32 6144, 6144
          %5225 = vsyncadd %s5214, %s5224
          %s5226 = smul.addr %s5221, 18
          %s5227 = sadd.s32 %s5222, %s5226
          %s5228 = smul.addr %s5227, 128
          %s5229 = scalar_lea.hbm %s11, %s5228
          %s5230 = sshll.u32 %s5217, 4
          %s5231 = int_to_ptr.vmem [resolvable:$true] %s5230
          %5236 = dma.vmem_to_hbm [thread:$0]  %s5231, 6144, %s5229, %s5214, 384, 2304, 24
        $region112: #{tpu_custom_call.1} parent=63 // pred_fallthru
          _
      $region64: #{tpu_custom_call.1} parent=5 // pred_fallthru
        _
      %p5237 = scmp.le.s32.totalorder 2, %s24
      // Predicated region
      $region113: #{tpu_custom_call.1} parent=5 // pred_check
        %p5238 = pneg %p5237
      $region114: #{tpu_custom_call.1} parent=5 // pred_check_branch
        %5240 = sbr.rel (%p5238) target = $region116
      $region115: #{tpu_custom_call.1} parent=5 // pred_region
        %s5241 = ssub.s32 %s24, 2
        // Predicated region
        $region117: #{tpu_custom_call.1} parent=115 // pred_check
          %p5242 = pneg %p323
        $region118: #{tpu_custom_call.1} parent=115 // pred_check_branch
          %5244 = sbr.rel (%p5242) target = $region120
        $region119: #{tpu_custom_call.1} parent=115 // pred_region
          %s5245 = sand.u32 %s308, 1
          %s5246 = scalar_lea.sflag [#allocation5], %s5245
          %s5247 = sand.u32 %s308, 1
          %s5248 = smul.addr %s5247, 384
          %s5249 = scalar_lea.vmem [#allocation18], %s5248
          %5250 = dma.done %s5246, 6144
        $region120: #{tpu_custom_call.1} parent=115 // pred_fallthru
          _
      $region116: #{tpu_custom_call.1} parent=5 // pred_fallthru
        _
    $region6: #{tpu_custom_call.1} parent=1 // loop_footer
      %s28 = sadd.s32 1, %s24
    $region7: #{tpu_custom_call.1} parent=1 // loop_footer_branch
      %23 = sbr.rel target = $region3
    $region8: #{tpu_custom_call.1} parent=1 // loop_exit
      _
    %5251 = vsyncpa [#allocation4], 1
    %s5252 = scalar_lea.sflag [#allocation4], 1
    %5253 = vsyncpa %s5252, 1
    %5254 = vsyncpa [#allocation7], 1
    %5255 = vsyncpa [#allocation10], 1
    %5256 = vsyncpa [#allocation13], 1
    %5257 = vsyncpa [#allocation5], 1
    %s5258 = scalar_lea.sflag [#allocation5], 1
    %5259 = vsyncpa %s5258, 1

</llo_original>
